<compile_context>
chip_gen: v7x
topology: tpu7x:2x2x1
jax: 0.10.0
libtpu: 0.0.40
codegen_flags: <defaults>
</compile_context>

<pallas_src>
import functools

import jax
import jax.numpy as jnp
from jax import lax
from jax.experimental import pallas as pl
from jax.experimental.pallas import tpu as pltpu

_EPS = 1e-5            # PyTorch BatchNorm2d default
_LANE = 128            # channel dims padded to a multiple of the lane width
_HALO_BLK = 8          # row-block size used to fetch the 1-row top/bottom halos
_MXU_DTYPE = jnp.bfloat16   # MXU operand dtype (f32 accumulation)


def _round_up(x, m):
    return (x + m - 1) // m * m


# ---------------------------------------------------------------------------
# Fused kernel per h-tile:
#   [prev-layer folded-BN affine + ReLU prolog]
#   -> build [left|center|right] column-shifted bf16 scratch (halo rows incl.)
#   -> 3 MXU matmuls (K = 3*Cip) with f32 VMEM accumulator
#   -> raw conv output tile + per-tile BN statistics
# ---------------------------------------------------------------------------
def _fused_conv_kernel(x_ctr_ref, x_top_ref, x_bot_ref, w_ref, ps_ref, pt_ref,
                       y_ref, st_ref, s_ref, acc_ref, *, th, apply_prolog):
    # x_ctr_ref: (1, th, W, Cip)        h-tile of the (channel-padded) image
    # x_top_ref: (1, 8, W, Cip)         8-row block holding the top halo row
    # x_bot_ref: (1, 8, W, Cip)         8-row block holding the bottom halo row
    # w_ref    : (3, 3*Cip, Cop) bf16   HWIO weights with (kw, ci) folded into K
    # ps_ref   : (1, Cip) f32           prev layer's folded-BN scale (prolog)
    # pt_ref   : (1, Cip) f32           prev layer's folded-BN shift (prolog)
    # y_ref    : (1, th, W, Cop) f32    raw conv output tile (pre-BN)
    # st_ref   : (1, 1, 2, Cop) f32     [sum, sum_of_squares] of this tile
    # s_ref    : ((th+2)*W, 3*Cip) bf16 VMEM scratch, rows flattened over (h, w)
    # acc_ref  : (th*W, Cop) f32        VMEM accumulator
    W = x_ctr_ref.shape[2]
    Cip = x_ctr_ref.shape[3]
    Cop = y_ref.shape[3]
    ti = pl.program_id(1)
    n_tiles = pl.num_programs(1)

    def process(rows):
        # rows: (R, Cip), flattened over (h, w).  The previous layer's folded
        # BatchNorm affine + ReLU is fused consumer-side so that activation
        # makes exactly one HBM round trip.
        if apply_prolog:
            rows = jnp.maximum(rows * ps_ref[...] + pt_ref[...], 0.0)
        return rows

    def emit(piece, pad_row):
        # piece: (R*W, Cip) f32 activation rows.  Writes [left|center|right]
        # column-shifted copies into the lane-concatenated scratch so each kh
        # tap becomes ONE matmul with K = 3*Cip.  The +/-1 column shifts are
        # XLU rolls over the flattened rows; wrap-around at w boundaries is
        # masked to zero (== the conv's width zero-padding).
        n_rows = piece.shape[0]
        w_idx = lax.broadcasted_iota(jnp.int32, (n_rows, Cip), 0) % W
        left = jnp.where(w_idx == 0, 0.0, pltpu.roll(piece, 1, axis=0))
        right = jnp.where(w_idx == W - 1, 0.0,
                          pltpu.roll(piece, n_rows - 1, axis=0))
        base = pad_row * W
        s_ref[base:base + n_rows, 0 * Cip:1 * Cip] = left.astype(s_ref.dtype)
        s_ref[base:base + n_rows, 1 * Cip:2 * Cip] = piece.astype(s_ref.dtype)
        s_ref[base:base + n_rows, 2 * Cip:3 * Cip] = right.astype(s_ref.dtype)

    # ---- center rows of the tile --------------------------------------------
    ctr = process(x_ctr_ref[0, :, :, :].reshape(th * W, Cip))
    emit(ctr, 1)

    # ---- top halo row (global row t*th - 1); zeros at the image top ----------
    @pl.when(ti == 0)
    def _():
        s_ref[0:W, :] = jnp.zeros((W, 3 * Cip), s_ref.dtype)

    @pl.when(ti > 0)
    def _():
        top = x_top_ref[0, _HALO_BLK - 1:_HALO_BLK, :, :].reshape(W, Cip)
        emit(process(top), 0)

    # ---- bottom halo row (global row t*th + th); zeros at the image bottom ---
    @pl.when(ti == n_tiles - 1)
    def _():
        s_ref[(th + 1) * W:(th + 2) * W, :] = jnp.zeros((W, 3 * Cip), s_ref.dtype)

    @pl.when(ti < n_tiles - 1)
    def _():
        bot = x_bot_ref[0, 0:1, :, :].reshape(W, Cip)
        emit(process(bot), th + 1)

    # ---- 3x3 conv: 3 MXU matmuls, K = 3*Cip, f32 accumulation in VMEM --------
    for kh in range(3):
        lhs = s_ref[kh * W:kh * W + th * W, :]            # (th*W, 3*Cip) bf16
        contrib = jnp.dot(lhs, w_ref[kh],                 # (3*Cip, Cop)  bf16
                          preferred_element_type=jnp.float32)
        if kh == 0:
            acc_ref[...] = contrib
        else:
            acc_ref[...] += contrib
    # NOTE: no conv bias — it cancels exactly under training-mode BatchNorm.

    # ---- epilogue: per-tile BN stats + lane-dense output store ---------------
    acc = acc_ref[...]
    s_sum = jnp.sum(acc, axis=0, keepdims=True)           # (1, Cop)
    s_sq = jnp.sum(acc * acc, axis=0, keepdims=True)      # (1, Cop)
    st_ref[...] = jnp.concatenate([s_sum, s_sq], axis=0).reshape(1, 1, 2, Cop)
    y_ref[...] = acc.reshape(1, th, W, Cop).astype(y_ref.dtype)


def _conv_vmem_bytes(th, W, Cip, Cop):
    x_ctr = th * W * Cip * 4 * 2                 # double-buffered center tile
    x_halo = 2 * _HALO_BLK * W * Cip * 4 * 2     # two 8-row halo blocks, 2 bufs
    w = 3 * 3 * Cip * Cop * 2 * 2                # bf16 weights
    y = th * W * Cop * 4 * 2                     # output tile, 2 bufs
    s = (th + 2) * W * 3 * Cip * 2               # bf16 shifted-copy scratch
    acc = th * W * Cop * 4                       # f32 accumulator
    return x_ctr + x_halo + w + y + s + acc + (1 << 20)


def fused_conv3x3(x_nhwc, w_khkc, prolog_scale=None, prolog_shift=None, *, th):
    """'same' 3x3 conv over channel-padded NHWC input.

    x_nhwc : (N, H, W, Cip) f32, Cip % 128 == 0
    w_khkc : (3, 3*Cip, Cop) bf16 — HWIO weights with (kw, ci) folded into K
    Returns (y, stats):
      y     : (N, H, W, Cop) f32      raw conv output (pre-BN)
      stats : (N, H//th, 2, Cop) f32  per-tile [sum, sum_sq] of y
    If prolog_scale/shift are given, relu(x * scale + shift) — the previous
    layer's folded BatchNorm + ReLU — is applied to the input on the fly.
    """
    N, H, W, Cip = x_nhwc.shape
    Cop = w_khkc.shape[-1]
    assert Cip % _LANE == 0 and Cop % _LANE == 0, "pad channels to a lane multiple"
    assert w_khkc.shape == (3, 3 * Cip, Cop)
    assert th % _HALO_BLK == 0 and H % th == 0 and H % _HALO_BLK == 0
    n_tiles = H // th
    thb = th // _HALO_BLK
    nhb = H // _HALO_BLK

    apply_prolog = prolog_scale is not None
    if not apply_prolog:
        prolog_scale = jnp.zeros((1, Cip), jnp.float32)
        prolog_shift = jnp.zeros((1, Cip), jnp.float32)
    prolog_scale = jnp.asarray(prolog_scale, jnp.float32).reshape(1, Cip)
    prolog_shift = jnp.asarray(prolog_shift, jnp.float32).reshape(1, Cip)

    kernel = functools.partial(_fused_conv_kernel, th=th,
                               apply_prolog=apply_prolog)
    vmem_limit = int(min(96 << 20,
                         max(_conv_vmem_bytes(th, W, Cip, Cop) * 2, 32 << 20)))

    return pl.pallas_call(
        kernel,
        out_shape=(
            jax.ShapeDtypeStruct((N, H, W, Cop), jnp.float32),
            jax.ShapeDtypeStruct((N, n_tiles, 2, Cop), jnp.float32),
        ),
        grid_spec=pltpu.PrefetchScalarGridSpec(
            num_scalar_prefetch=0,
            grid=(N, n_tiles),
            in_specs=[
                # streamed h-tile of the image (lane-dense NHWC)
                pl.BlockSpec((1, th, W, Cip), lambda n, t: (n, t, 0, 0)),
                # 8-row blocks holding the 1-row top / bottom halos (clamped)
                pl.BlockSpec((1, _HALO_BLK, W, Cip),
                             lambda n, t: (n, jnp.maximum(t * thb - 1, 0), 0, 0)),
                pl.BlockSpec((1, _HALO_BLK, W, Cip),
                             lambda n, t: (n, jnp.minimum((t + 1) * thb, nhb - 1),
                                           0, 0)),
                pl.BlockSpec((3, 3 * Cip, Cop), lambda n, t: (0, 0, 0)),
                pl.BlockSpec((1, Cip), lambda n, t: (0, 0)),
                pl.BlockSpec((1, Cip), lambda n, t: (0, 0)),
            ],
            out_specs=[
                pl.BlockSpec((1, th, W, Cop), lambda n, t: (n, t, 0, 0)),
                pl.BlockSpec((1, 1, 2, Cop), lambda n, t: (n, t, 0, 0)),
            ],
            scratch_shapes=[
                pltpu.VMEM(((th + 2) * W, 3 * Cip), _MXU_DTYPE),
                pltpu.VMEM((th * W, Cop), jnp.float32),
            ],
        ),
        compiler_params=pltpu.CompilerParams(
            dimension_semantics=("parallel", "parallel"),
            vmem_limit_bytes=vmem_limit),
    )(x_nhwc, x_nhwc, x_nhwc, w_khkc, prolog_scale, prolog_shift)


# ---------------------------------------------------------------------------
# Standalone folded-BN affine + ReLU (final activation only; the first block's
# affine+ReLU is fused into the second conv's prolog).  Tiled over H.
# ---------------------------------------------------------------------------
def _bn_relu_kernel(y_ref, s_ref, t_ref, o_ref):
    o_ref[...] = jnp.maximum(y_ref[...] * s_ref[...] + t_ref[...],
                             0.0).astype(o_ref.dtype)


def bn_relu(y_nhwc, scale, shift, *, th):
    N, H, W, C = y_nhwc.shape
    assert H % th == 0
    blk = (1, th, W, C)
    vmem_limit = int(min(96 << 20, max(8 * th * W * C * 4, 16 << 20)))
    return pl.pallas_call(
        _bn_relu_kernel,
        out_shape=jax.ShapeDtypeStruct((N, H, W, C), jnp.float32),
        grid_spec=pltpu.PrefetchScalarGridSpec(
            num_scalar_prefetch=0,
            grid=(N, H // th),
            in_specs=[
                pl.BlockSpec(blk, lambda n, t: (n, t, 0, 0)),
                pl.BlockSpec((1, C), lambda n, t: (0, 0)),
                pl.BlockSpec((1, C), lambda n, t: (0, 0)),
            ],
            out_specs=pl.BlockSpec(blk, lambda n, t: (n, t, 0, 0)),
        ),
        compiler_params=pltpu.CompilerParams(
            dimension_semantics=("parallel", "parallel"),
            vmem_limit_bytes=vmem_limit),
    )(y_nhwc,
      scale.reshape(1, C).astype(jnp.float32),
      shift.reshape(1, C).astype(jnp.float32))


# ---------------------------------------------------------------------------
# Glue: fold the per-tile kernel statistics into training-mode BN scale/shift
# (tiny (N, T, 2, 128) arrays — no full-tensor XLA pass).
# ---------------------------------------------------------------------------
def _folded_bn_params(stats, gamma_p, beta_p, count):
    s = jnp.sum(stats[:, :, 0, :], axis=(0, 1))
    sq = jnp.sum(stats[:, :, 1, :], axis=(0, 1))
    mean = s / count
    var = jnp.maximum(sq / count - mean * mean, 0.0)   # biased var, like torch BN
    scale = gamma_p / jnp.sqrt(var + _EPS)
    shift = beta_p - mean * scale
    return scale, shift


def _pick_th(H):
    for cand in (32, 16, 8):
        if H % cand == 0:
            return cand
    raise ValueError("H must be a multiple of 8")


def doubleconv_forward_nhwc(x_nhwc, p, *, th=None):
    """Doubleconv on NHWC activations (lane-dense 128-padded channels inside)."""
    N, H, W, Cin = x_nhwc.shape
    Cout = p["w1"].shape[-1]
    cip = _round_up(Cin, _LANE)
    cop = _round_up(Cout, _LANE)
    if th is None:
        th = _pick_th(H)

    x = jnp.pad(x_nhwc.astype(jnp.float32),
                ((0, 0), (0, 0), (0, 0), (0, cip - Cin)))

    # HWIO weights -> channel-padded, (kw, ci) folded into K, bf16 operands.
    w1 = jnp.pad(p["w1"], ((0, 0), (0, 0), (0, cip - Cin), (0, cop - Cout)))
    w1 = w1.reshape(3, 3 * cip, cop).astype(_MXU_DTYPE)
    w2 = jnp.pad(p["w2"], ((0, 0), (0, 0), (0, cop - Cout), (0, cop - Cout)))
    w2 = w2.reshape(3, 3 * cop, cop).astype(_MXU_DTYPE)
    g1 = jnp.pad(p["g1"], (0, cop - Cout))
    bt1 = jnp.pad(p["bt1"], (0, cop - Cout))
    g2 = jnp.pad(p["g2"], (0, cop - Cout))
    bt2 = jnp.pad(p["bt2"], (0, cop - Cout))
    # NOTE: conv biases p["b1"], p["b2"] are intentionally unused: a bias that
    # feeds training-mode BatchNorm cancels exactly (the mean absorbs it and
    # the shift subtracts it back).

    count = float(N * H * W)

    # conv1 (identity prolog) -> fold BN1 -> conv2 with fused BN1-affine+ReLU prolog
    y1, st1 = fused_conv3x3(x, w1, th=th)
    s1, t1 = _folded_bn_params(st1, g1, bt1, count)

    y2, st2 = fused_conv3x3(y1, w2, s1, t1, th=th)
    s2, t2 = _folded_bn_params(st2, g2, bt2, count)

    # final standalone BN2-affine + ReLU (its statistics need all of y2)
    z = bn_relu(y2, s2, t2, th=th)
    return z[..., :Cout]


def doubleconv_forward(x_nchw, p, *, th=None):
    """Doubleconv forward; NCHW in, NCHW out — matches the PyTorch module."""
    # TODO(synk): keep activations NHWC end-to-end in the surrounding model to
    # drop these two full-tensor layout passes (they are only kept here to
    # match the nn.Module's NCHW interface).
    x = jnp.transpose(x_nchw, (0, 2, 3, 1))
    z = doubleconv_forward_nhwc(x, p, th=th)
    return jnp.transpose(z, (0, 3, 1, 2))


# ---------------------------------------------------------------------------
# Pure-JAX f32 reference (includes the conv bias, proving the cancellation).
# ---------------------------------------------------------------------------
def _reference_forward(x_nchw, p):
    def conv(x, w_hwio, b):
        w_oihw = jnp.transpose(w_hwio, (3, 2, 0, 1))
        y = jax.lax.conv_general_dilated(
            x, w_oihw, window_strides=(1, 1), padding=((1, 1), (1, 1)),
            dimension_numbers=("NCHW", "OIHW", "NCHW"),
            precision=jax.lax.Precision.HIGHEST)
        return y + b[None, :, None, None]

    def bn_relu_ref(y, g, bt):
        m = jnp.mean(y, axis=(0, 2, 3), keepdims=True)
        v = jnp.var(y, axis=(0, 2, 3), keepdims=True)
        z = (y - m) / jnp.sqrt(v + _EPS) * g[None, :, None, None] \
            + bt[None, :, None, None]
        return jnp.maximum(z, 0.0)

    y1 = bn_relu_ref(conv(x_nchw, p["w1"], p["b1"]), p["g1"], p["bt1"])
    y2 = bn_relu_ref(conv(y1, p["w2"], p["b2"]), p["g2"], p["bt2"])
    return y2


if __name__ == "__main__":
    N, Cin, Cout, H, W = 2, 4, 8, 16, 16
    key = jax.random.PRNGKey(0)
    ks = jax.random.split(key, 9)

    params = {
        "w1": jax.random.normal(ks[0], (3, 3, Cin, Cout), jnp.float32) * 0.1,  # HWIO
        "b1": jax.random.normal(ks[1], (Cout,), jnp.float32) * 0.1,
        "g1": 1.0 + 0.1 * jax.random.normal(ks[2], (Cout,), jnp.float32),
        "bt1": 0.1 * jax.random.normal(ks[3], (Cout,), jnp.float32),
        "w2": jax.random.normal(ks[4], (3, 3, Cout, Cout), jnp.float32) * 0.1,
        "b2": jax.random.normal(ks[5], (Cout,), jnp.float32) * 0.1,
        "g2": 1.0 + 0.1 * jax.random.normal(ks[6], (Cout,), jnp.float32),
        "bt2": 0.1 * jax.random.normal(ks[7], (Cout,), jnp.float32),
    }
    x = jax.random.normal(ks[8], (N, Cin, H, W), jnp.float32)

    fwd = jax.jit(functools.partial(doubleconv_forward, th=8))  # 2 h-tiles: halos exercised
    out = jax.block_until_ready(fwd(x, params))
    ref = jax.block_until_ready(_reference_forward(x, params))

    assert out.shape == (N, Cout, H, W), out.shape
    err = float(jnp.max(jnp.abs(out - ref)))
    # Tolerance reflects bf16 MXU operands (f32 accumulation) vs the f32
    # reference; structural errors (wrong tap / halo / BN) would be O(0.2+).
    assert bool(jnp.allclose(out, ref, atol=8e-2, rtol=8e-2)), err
    print("KERNEL_OK")
</pallas_src>

<mosaic_0001>
module attributes {stable_mosaic.version = 11 : i64} {
  func.func @_bn_relu_kernel(%arg0: i32, %arg1: i32, %arg2: memref<1x8x16x128xf32, #tpu.memory_space<vmem>>, %arg3: memref<1x128xf32, #tpu.memory_space<vmem>>, %arg4: memref<1x128xf32, #tpu.memory_space<vmem>>, %arg5: memref<1x8x16x128xf32, #tpu.memory_space<vmem>>) attributes {dimension_semantics = [#tpu.dimension_semantics<parallel>, #tpu.dimension_semantics<parallel>], iteration_bounds = array<i64: 2, 2>, scalar_prefetch = 0 : i64, scratch_operands = 0 : i64, tpu.core_type = #tpu.core_type<tc>, window_params = [{transform_indices = @transform_0, window_bounds = array<i64: 1, 8, 16, 128>}, {pipeline_mode = #tpu.pipeline_mode<synchronous>, transform_indices = @transform_1, window_bounds = array<i64: 1, 128>}, {pipeline_mode = #tpu.pipeline_mode<synchronous>, transform_indices = @transform_2, window_bounds = array<i64: 1, 128>}, {transform_indices = @transform_3, window_bounds = array<i64: 1, 8, 16, 128>}]} {
    %c0 = arith.constant 0 : index
    %c0_0 = arith.constant 0 : index
    %c0_1 = arith.constant 0 : index
    %c0_2 = arith.constant 0 : index
    %0 = vector.load %arg2[%c0, %c0_0, %c0_1, %c0_2] : memref<1x8x16x128xf32, #tpu.memory_space<vmem>>, vector<1x8x16x128xf32>
    %c0_3 = arith.constant 0 : index
    %c0_4 = arith.constant 0 : index
    %1 = vector.load %arg3[%c0_3, %c0_4] : memref<1x128xf32, #tpu.memory_space<vmem>>, vector<1x128xf32>
    %2 = vector.shape_cast %1 : vector<1x128xf32> to vector<1x1x1x128xf32>
    %3 = vector.broadcast %2 : vector<1x1x1x128xf32> to vector<1x8x16x128xf32>
    %4 = arith.mulf %0, %3 : vector<1x8x16x128xf32>
    %c0_5 = arith.constant 0 : index
    %c0_6 = arith.constant 0 : index
    %5 = vector.load %arg4[%c0_5, %c0_6] : memref<1x128xf32, #tpu.memory_space<vmem>>, vector<1x128xf32>
    %6 = vector.shape_cast %5 : vector<1x128xf32> to vector<1x1x1x128xf32>
    %7 = vector.broadcast %6 : vector<1x1x1x128xf32> to vector<1x8x16x128xf32>
    %8 = arith.addf %4, %7 : vector<1x8x16x128xf32>
    %cst = arith.constant 0.000000e+00 : f32
    %9 = vector.broadcast %cst : f32 to vector<1x8x16x128xf32>
    %10 = arith.maximumf %8, %9 : vector<1x8x16x128xf32>
    %c0_7 = arith.constant 0 : index
    %c0_8 = arith.constant 0 : index
    %c0_9 = arith.constant 0 : index
    %c0_10 = arith.constant 0 : index
    %11 = vector.load %arg5[%c0_7, %c0_8, %c0_9, %c0_10] : memref<1x8x16x128xf32, #tpu.memory_space<vmem>>, vector<1x8x16x128xf32>
    tpu.vector_store %arg5[%c0_7, %c0_8, %c0_9, %c0_10], %10 {strides = array<i32>} : memref<1x8x16x128xf32, #tpu.memory_space<vmem>>, vector<1x8x16x128xf32>,
    return
  }
  func.func @transform_0(%arg0: i32, %arg1: i32) -> (i32, i32, i32, i32) {
    %c0_i32 = arith.constant 0 : i32
    %c0_i32_0 = arith.constant 0 : i32
    %c0_i32_1 = arith.constant 0 : i32
    return %arg0, %arg1, %c0_i32, %c0_i32_0 : i32, i32, i32, i32
  }
  func.func @transform_1(%arg0: i32, %arg1: i32) -> (i32, i32) {
    %c0_i32 = arith.constant 0 : i32
    %c0_i32_0 = arith.constant 0 : i32
    %c0_i32_1 = arith.constant 0 : i32
    return %c0_i32, %c0_i32_0 : i32, i32
  }
  func.func @transform_2(%arg0: i32, %arg1: i32) -> (i32, i32) {
    %c0_i32 = arith.constant 0 : i32
    %c0_i32_0 = arith.constant 0 : i32
    %c0_i32_1 = arith.constant 0 : i32
    return %c0_i32, %c0_i32_0 : i32, i32
  }
  func.func @transform_3(%arg0: i32, %arg1: i32) -> (i32, i32, i32, i32) {
    %c0_i32 = arith.constant 0 : i32
    %c0_i32_0 = arith.constant 0 : i32
    %c0_i32_1 = arith.constant 0 : i32
    return %arg0, %arg1, %c0_i32, %c0_i32_0 : i32, i32, i32, i32
  }
}

module attributes {stable_mosaic.version = 11 : i64} {
  func.func @_fused_conv_kernel(%arg0: i32, %arg1: i32, %arg2: memref<1x8x16x128xf32, #tpu.memory_space<vmem>>, %arg3: memref<1x8x16x128xf32, #tpu.memory_space<vmem>>, %arg4: memref<1x8x16x128xf32, #tpu.memory_space<vmem>>, %arg5: memref<3x384x128xbf16, #tpu.memory_space<vmem>>, %arg6: memref<1x128xf32, #tpu.memory_space<vmem>>, %arg7: memref<1x128xf32, #tpu.memory_space<vmem>>, %arg8: memref<1x8x16x128xf32, #tpu.memory_space<vmem>>, %arg9: memref<1x1x2x128xf32, #tpu.memory_space<vmem>>, %arg10: memref<160x384xbf16, #tpu.memory_space<vmem>>, %arg11: memref<128x128xf32, #tpu.memory_space<vmem>>) attributes {dimension_semantics = [#tpu.dimension_semantics<parallel>, #tpu.dimension_semantics<parallel>], iteration_bounds = array<i64: 2, 2>, scalar_prefetch = 0 : i64, scratch_operands = 2 : i64, tpu.core_type = #tpu.core_type<tc>, window_params = [{transform_indices = @transform_0, window_bounds = array<i64: 1, 8, 16, 128>}, {transform_indices = @transform_1, window_bounds = array<i64: 1, 8, 16, 128>}, {transform_indices = @transform_2, window_bounds = array<i64: 1, 8, 16, 128>}, {pipeline_mode = #tpu.pipeline_mode<synchronous>, transform_indices = @transform_3, window_bounds = array<i64: 3, 384, 128>}, {pipeline_mode = #tpu.pipeline_mode<synchronous>, transform_indices = @transform_4, window_bounds = array<i64: 1, 128>}, {pipeline_mode = #tpu.pipeline_mode<synchronous>, transform_indices = @transform_5, window_bounds = array<i64: 1, 128>}, {transform_indices = @transform_6, window_bounds = array<i64: 1, 8, 16, 128>}, {transform_indices = @transform_7, window_bounds = array<i64: 1, 1, 2, 128>}]} {
    %c0 = arith.constant 0 : index
    %c0_0 = arith.constant 0 : index
    %c0_1 = arith.constant 0 : index
    %c0_2 = arith.constant 0 : index
    %0 = vector.load %arg2[%c0, %c0_0, %c0_1, %c0_2] : memref<1x8x16x128xf32, #tpu.memory_space<vmem>>, vector<1x8x16x128xf32>
    %1 = vector.shape_cast %0 : vector<1x8x16x128xf32> to vector<8x16x128xf32>
    %2 = vector.shape_cast %1 : vector<8x16x128xf32> to vector<128x128xf32>
    %3 = tpu.iota {dimensions = array<i32: 0>} : vector<128x128xi32>
    %c16_i32 = arith.constant 16 : i32
    %c0_i32 = arith.constant 0 : i32
    %4 = arith.cmpi eq, %c16_i32, %c0_i32 : i32
    %c1_i32 = arith.constant 1 : i32
    %5 = arith.select %4, %c1_i32, %c16_i32 : i32
    %6 = vector.broadcast %5 : i32 to vector<128x128xi32>
    %7 = arith.remsi %3, %6 : vector<128x128xi32>
    %c0_i32_3 = arith.constant 0 : i32
    %8 = vector.broadcast %c0_i32_3 : i32 to vector<128x128xi32>
    %9 = arith.cmpi ne, %7, %8 : vector<128x128xi32>
    %c0_i32_4 = arith.constant 0 : i32
    %10 = vector.broadcast %c0_i32_4 : i32 to vector<128x128xi32>
    %11 = arith.cmpi slt, %7, %10 : vector<128x128xi32>
    %c0_i32_5 = arith.constant 0 : i32
    %12 = arith.cmpi slt, %5, %c0_i32_5 : i32
    %13 = vector.broadcast %12 : i1 to vector<128x128xi1>
    %14 = vector.broadcast %13 : vector<128x128xi1> to vector<128x128xi1>
    %15 = arith.xori %11, %14 : vector<128x128xi1>
    %16 = arith.andi %15, %9 : vector<128x128xi1>
    %17 = vector.broadcast %5 : i32 to vector<128x128xi32>
    %18 = arith.addi %7, %17 : vector<128x128xi32>
    %19 = arith.select %16, %18, %7 : vector<128x128xi1>, vector<128x128xi32>
    %c0_i32_6 = arith.constant 0 : i32
    %20 = vector.broadcast %c0_i32_6 : i32 to vector<128x128xi32>
    %21 = arith.cmpi eq, %19, %20 : vector<128x128xi32>
    %c1_i32_7 = arith.constant 1 : i32
    %22 = tpu.dynamic_rotate %2 by %c1_i32_7 dim 0 : vector<128x128xf32>, i32 -> vector<128x128xf32>
    %cst = arith.constant 0.000000e+00 : f32
    %23 = vector.broadcast %cst : f32 to vector<128x128xf32>
    %24 = arith.select %21, %23, %22 : vector<128x128xi1>, vector<128x128xf32>
    %c15_i32 = arith.constant 15 : i32
    %25 = vector.broadcast %c15_i32 : i32 to vector<128x128xi32>
    %26 = arith.cmpi eq, %19, %25 : vector<128x128xi32>
    %c127_i32 = arith.constant 127 : i32
    %27 = tpu.dynamic_rotate %2 by %c127_i32 dim 0 : vector<128x128xf32>, i32 -> vector<128x128xf32>
    %cst_8 = arith.constant 0.000000e+00 : f32
    %28 = vector.broadcast %cst_8 : f32 to vector<128x128xf32>
    %29 = arith.select %26, %28, %27 : vector<128x128xi1>, vector<128x128xf32>
    %30 = arith.truncf %24 : vector<128x128xf32> to vector<128x128xbf16>
    %c16 = arith.constant 16 : index
    %c0_9 = arith.constant 0 : index
    %31 = vector.load %arg10[%c16, %c0_9] : memref<160x384xbf16, #tpu.memory_space<vmem>>, vector<128x128xbf16>
    tpu.vector_store %arg10[%c16, %c0_9], %30 {strides = array<i32>} : memref<160x384xbf16, #tpu.memory_space<vmem>>, vector<128x128xbf16>,
    %32 = arith.truncf %2 : vector<128x128xf32> to vector<128x128xbf16>
    %c16_10 = arith.constant 16 : index
    %c128 = arith.constant 128 : index
    %33 = vector.load %arg10[%c16_10, %c128] : memref<160x384xbf16, #tpu.memory_space<vmem>>, vector<128x128xbf16>
    tpu.vector_store %arg10[%c16_10, %c128], %32 {strides = array<i32>} : memref<160x384xbf16, #tpu.memory_space<vmem>>, vector<128x128xbf16>,
    %34 = arith.truncf %29 : vector<128x128xf32> to vector<128x128xbf16>
    %c16_11 = arith.constant 16 : index
    %c256 = arith.constant 256 : index
    %35 = vector.load %arg10[%c16_11, %c256] : memref<160x384xbf16, #tpu.memory_space<vmem>>, vector<128x128xbf16>
    tpu.vector_store %arg10[%c16_11, %c256], %34 {strides = array<i32>} : memref<160x384xbf16, #tpu.memory_space<vmem>>, vector<128x128xbf16>,
    %c0_i32_12 = arith.constant 0 : i32
    %36 = arith.cmpi eq, %arg1, %c0_i32_12 : i32
    %37 = arith.extui %36 : i1 to i32
    %c0_i32_13 = arith.constant 0 : i32
    %38 = arith.cmpi ne, %37, %c0_i32_13 : i32
    scf.if %38 {
      %cst_57 = arith.constant 0.000000e+00 : bf16
      %78 = vector.broadcast %cst_57 : bf16 to vector<16x384xbf16>
      %c0_58 = arith.constant 0 : index
      %c0_59 = arith.constant 0 : index
      %79 = vector.load %arg10[%c0_58, %c0_59] : memref<160x384xbf16, #tpu.memory_space<vmem>>, vector<16x384xbf16>
      tpu.vector_store %arg10[%c0_58, %c0_59], %78 {strides = array<i32>} : memref<160x384xbf16, #tpu.memory_space<vmem>>, vector<16x384xbf16>,
    } else {
    }
    %c0_i32_14 = arith.constant 0 : i32
    %39 = arith.cmpi sgt, %arg1, %c0_i32_14 : i32
    %40 = arith.extui %39 : i1 to i32
    %c0_i32_15 = arith.constant 0 : i32
    %41 = arith.cmpi ne, %40, %c0_i32_15 : i32
    scf.if %41 {
      %c0_57 = arith.constant 0 : index
      %c7 = arith.constant 7 : index
      %c0_58 = arith.constant 0 : index
      %c0_59 = arith.constant 0 : index
      %78 = vector.load %arg3[%c0_57, %c7, %c0_58, %c0_59] : memref<1x8x16x128xf32, #tpu.memory_space<vmem>>, vector<1x1x16x128xf32>
      %79 = vector.shape_cast %78 : vector<1x1x16x128xf32> to vector<1x16x128xf32>
      %80 = vector.shape_cast %79 : vector<1x16x128xf32> to vector<16x128xf32>
      %81 = tpu.iota {dimensions = array<i32: 0>} : vector<16x128xi32>
      %c16_i32_60 = arith.constant 16 : i32
      %c0_i32_61 = arith.constant 0 : i32
      %82 = arith.cmpi eq, %c16_i32_60, %c0_i32_61 : i32
      %c1_i32_62 = arith.constant 1 : i32
      %83 = arith.select %82, %c1_i32_62, %c16_i32_60 : i32
      %84 = vector.broadcast %83 : i32 to vector<16x128xi32>
      %85 = arith.remsi %81, %84 : vector<16x128xi32>
      %c0_i32_63 = arith.constant 0 : i32
      %86 = vector.broadcast %c0_i32_63 : i32 to vector<16x128xi32>
      %87 = arith.cmpi ne, %85, %86 : vector<16x128xi32>
      %c0_i32_64 = arith.constant 0 : i32
      %88 = vector.broadcast %c0_i32_64 : i32 to vector<16x128xi32>
      %89 = arith.cmpi slt, %85, %88 : vector<16x128xi32>
      %c0_i32_65 = arith.constant 0 : i32
      %90 = arith.cmpi slt, %83, %c0_i32_65 : i32
      %91 = vector.broadcast %90 : i1 to vector<16x128xi1>
      %92 = vector.broadcast %91 : vector<16x128xi1> to vector<16x128xi1>
      %93 = arith.xori %89, %92 : vector<16x128xi1>
      %94 = arith.andi %93, %87 : vector<16x128xi1>
      %95 = vector.broadcast %83 : i32 to vector<16x128xi32>
      %96 = arith.addi %85, %95 : vector<16x128xi32>
      %97 = arith.select %94, %96, %85 : vector<16x128xi1>, vector<16x128xi32>
      %c0_i32_66 = arith.constant 0 : i32
      %98 = vector.broadcast %c0_i32_66 : i32 to vector<16x128xi32>
      %99 = arith.cmpi eq, %97, %98 : vector<16x128xi32>
      %c1_i32_67 = arith.constant 1 : i32
      %100 = tpu.dynamic_rotate %80 by %c1_i32_67 dim 0 : vector<16x128xf32>, i32 -> vector<16x128xf32>
      %cst_68 = arith.constant 0.000000e+00 : f32
      %101 = vector.broadcast %cst_68 : f32 to vector<16x128xf32>
      %102 = arith.select %99, %101, %100 : vector<16x128xi1>, vector<16x128xf32>
      %c15_i32_69 = arith.constant 15 : i32
      %103 = vector.broadcast %c15_i32_69 : i32 to vector<16x128xi32>
      %104 = arith.cmpi eq, %97, %103 : vector<16x128xi32>
      %c15_i32_70 = arith.constant 15 : i32
      %105 = tpu.dynamic_rotate %80 by %c15_i32_70 dim 0 : vector<16x128xf32>, i32 -> vector<16x128xf32>
      %cst_71 = arith.constant 0.000000e+00 : f32
      %106 = vector.broadcast %cst_71 : f32 to vector<16x128xf32>
      %107 = arith.select %104, %106, %105 : vector<16x128xi1>, vector<16x128xf32>
      %108 = arith.truncf %102 : vector<16x128xf32> to vector<16x128xbf16>
      %c0_72 = arith.constant 0 : index
      %c0_73 = arith.constant 0 : index
      %109 = vector.load %arg10[%c0_72, %c0_73] : memref<160x384xbf16, #tpu.memory_space<vmem>>, vector<16x128xbf16>
      tpu.vector_store %arg10[%c0_72, %c0_73], %108 {strides = array<i32>} : memref<160x384xbf16, #tpu.memory_space<vmem>>, vector<16x128xbf16>,
      %110 = arith.truncf %80 : vector<16x128xf32> to vector<16x128xbf16>
      %c0_74 = arith.constant 0 : index
      %c128_75 = arith.constant 128 : index
      %111 = vector.load %arg10[%c0_74, %c128_75] : memref<160x384xbf16, #tpu.memory_space<vmem>>, vector<16x128xbf16>
      tpu.vector_store %arg10[%c0_74, %c128_75], %110 {strides = array<i32>} : memref<160x384xbf16, #tpu.memory_space<vmem>>, vector<16x128xbf16>,
      %112 = arith.truncf %107 : vector<16x128xf32> to vector<16x128xbf16>
      %c0_76 = arith.constant 0 : index
      %c256_77 = arith.constant 256 : index
      %113 = vector.load %arg10[%c0_76, %c256_77] : memref<160x384xbf16, #tpu.memory_space<vmem>>, vector<16x128xbf16>
      tpu.vector_store %arg10[%c0_76, %c256_77], %112 {strides = array<i32>} : memref<160x384xbf16, #tpu.memory_space<vmem>>, vector<16x128xbf16>,
    } else {
    }
    %c1_i32_16 = arith.constant 1 : i32
    %42 = arith.cmpi eq, %arg1, %c1_i32_16 : i32
    %43 = arith.extui %42 : i1 to i32
    %c0_i32_17 = arith.constant 0 : i32
    %44 = arith.cmpi ne, %43, %c0_i32_17 : i32
    scf.if %44 {
      %cst_57 = arith.constant 0.000000e+00 : bf16
      %78 = vector.broadcast %cst_57 : bf16 to vector<16x384xbf16>
      %c144 = arith.constant 144 : index
      %c0_58 = arith.constant 0 : index
      %79 = vector.load %arg10[%c144, %c0_58] : memref<160x384xbf16, #tpu.memory_space<vmem>>, vector<16x384xbf16>
      tpu.vector_store %arg10[%c144, %c0_58], %78 {strides = array<i32>} : memref<160x384xbf16, #tpu.memory_space<vmem>>, vector<16x384xbf16>,
    } else {
    }
    %c1_i32_18 = arith.constant 1 : i32
    %45 = arith.cmpi slt, %arg1, %c1_i32_18 : i32
    %46 = arith.extui %45 : i1 to i32
    %c0_i32_19 = arith.constant 0 : i32
    %47 = arith.cmpi ne, %46, %c0_i32_19 : i32
    scf.if %47 {
      %c0_57 = arith.constant 0 : index
      %c0_58 = arith.constant 0 : index
      %c0_59 = arith.constant 0 : index
      %c0_60 = arith.constant 0 : index
      %78 = vector.load %arg4[%c0_57, %c0_58, %c0_59, %c0_60] : memref<1x8x16x128xf32, #tpu.memory_space<vmem>>, vector<1x1x16x128xf32>
      %79 = vector.shape_cast %78 : vector<1x1x16x128xf32> to vector<1x16x128xf32>
      %80 = vector.shape_cast %79 : vector<1x16x128xf32> to vector<16x128xf32>
      %81 = tpu.iota {dimensions = array<i32: 0>} : vector<16x128xi32>
      %c16_i32_61 = arith.constant 16 : i32
      %c0_i32_62 = arith.constant 0 : i32
      %82 = arith.cmpi eq, %c16_i32_61, %c0_i32_62 : i32
      %c1_i32_63 = arith.constant 1 : i32
      %83 = arith.select %82, %c1_i32_63, %c16_i32_61 : i32
      %84 = vector.broadcast %83 : i32 to vector<16x128xi32>
      %85 = arith.remsi %81, %84 : vector<16x128xi32>
      %c0_i32_64 = arith.constant 0 : i32
      %86 = vector.broadcast %c0_i32_64 : i32 to vector<16x128xi32>
      %87 = arith.cmpi ne, %85, %86 : vector<16x128xi32>
      %c0_i32_65 = arith.constant 0 : i32
      %88 = vector.broadcast %c0_i32_65 : i32 to vector<16x128xi32>
      %89 = arith.cmpi slt, %85, %88 : vector<16x128xi32>
      %c0_i32_66 = arith.constant 0 : i32
      %90 = arith.cmpi slt, %83, %c0_i32_66 : i32
      %91 = vector.broadcast %90 : i1 to vector<16x128xi1>
      %92 = vector.broadcast %91 : vector<16x128xi1> to vector<16x128xi1>
      %93 = arith.xori %89, %92 : vector<16x128xi1>
      %94 = arith.andi %93, %87 : vector<16x128xi1>
      %95 = vector.broadcast %83 : i32 to vector<16x128xi32>
      %96 = arith.addi %85, %95 : vector<16x128xi32>
      %97 = arith.select %94, %96, %85 : vector<16x128xi1>, vector<16x128xi32>
      %c0_i32_67 = arith.constant 0 : i32
      %98 = vector.broadcast %c0_i32_67 : i32 to vector<16x128xi32>
      %99 = arith.cmpi eq, %97, %98 : vector<16x128xi32>
      %c1_i32_68 = arith.constant 1 : i32
      %100 = tpu.dynamic_rotate %80 by %c1_i32_68 dim 0 : vector<16x128xf32>, i32 -> vector<16x128xf32>
      %cst_69 = arith.constant 0.000000e+00 : f32
      %101 = vector.broadcast %cst_69 : f32 to vector<16x128xf32>
      %102 = arith.select %99, %101, %100 : vector<16x128xi1>, vector<16x128xf32>
      %c15_i32_70 = arith.constant 15 : i32
      %103 = vector.broadcast %c15_i32_70 : i32 to vector<16x128xi32>
      %104 = arith.cmpi eq, %97, %103 : vector<16x128xi32>
      %c15_i32_71 = arith.constant 15 : i32
      %105 = tpu.dynamic_rotate %80 by %c15_i32_71 dim 0 : vector<16x128xf32>, i32 -> vector<16x128xf32>
      %cst_72 = arith.constant 0.000000e+00 : f32
      %106 = vector.broadcast %cst_72 : f32 to vector<16x128xf32>
      %107 = arith.select %104, %106, %105 : vector<16x128xi1>, vector<16x128xf32>
      %108 = arith.truncf %102 : vector<16x128xf32> to vector<16x128xbf16>
      %c144 = arith.constant 144 : index
      %c0_73 = arith.constant 0 : index
      %109 = vector.load %arg10[%c144, %c0_73] : memref<160x384xbf16, #tpu.memory_space<vmem>>, vector<16x128xbf16>
      tpu.vector_store %arg10[%c144, %c0_73], %108 {strides = array<i32>} : memref<160x384xbf16, #tpu.memory_space<vmem>>, vector<16x128xbf16>,
      %110 = arith.truncf %80 : vector<16x128xf32> to vector<16x128xbf16>
      %c144_74 = arith.constant 144 : index
      %c128_75 = arith.constant 128 : index
      %111 = vector.load %arg10[%c144_74, %c128_75] : memref<160x384xbf16, #tpu.memory_space<vmem>>, vector<16x128xbf16>
      tpu.vector_store %arg10[%c144_74, %c128_75], %110 {strides = array<i32>} : memref<160x384xbf16, #tpu.memory_space<vmem>>, vector<16x128xbf16>,
      %112 = arith.truncf %107 : vector<16x128xf32> to vector<16x128xbf16>
      %c144_76 = arith.constant 144 : index
      %c256_77 = arith.constant 256 : index
      %113 = vector.load %arg10[%c144_76, %c256_77] : memref<160x384xbf16, #tpu.memory_space<vmem>>, vector<16x128xbf16>
      tpu.vector_store %arg10[%c144_76, %c256_77], %112 {strides = array<i32>} : memref<160x384xbf16, #tpu.memory_space<vmem>>, vector<16x128xbf16>,
    } else {
    }
    %c0_20 = arith.constant 0 : index
    %c0_21 = arith.constant 0 : index
    %48 = vector.load %arg10[%c0_20, %c0_21] : memref<160x384xbf16, #tpu.memory_space<vmem>>, vector<128x384xbf16>
    %c0_22 = arith.constant 0 : index
    %c0_23 = arith.constant 0 : index
    %c0_24 = arith.constant 0 : index
    %49 = vector.load %arg5[%c0_22, %c0_23, %c0_24] : memref<3x384x128xbf16, #tpu.memory_space<vmem>>, vector<1x384x128xbf16>
    %50 = vector.shape_cast %49 : vector<1x384x128xbf16> to vector<384x128xbf16>
    %cst_25 = arith.constant dense<0.000000e+00> : vector<128x128xf32>
    %51 = tpu.matmul %48, %50, %cst_25 {dimension_numbers = #tpu.dot_dimension_numbers<[1], [0], [0], [1], [0, 0, 1, 1], [], []>} : vector<128x384xbf16>, vector<384x128xbf16>, vector<128x128xf32> -> vector<128x128xf32>
    %c0_26 = arith.constant 0 : index
    %c0_27 = arith.constant 0 : index
    %52 = vector.load %arg11[%c0_26, %c0_27] : memref<128x128xf32, #tpu.memory_space<vmem>>, vector<128x128xf32>
    tpu.vector_store %arg11[%c0_26, %c0_27], %51 {strides = array<i32>} : memref<128x128xf32, #tpu.memory_space<vmem>>, vector<128x128xf32>,
    %c16_28 = arith.constant 16 : index
    %c0_29 = arith.constant 0 : index
    %53 = vector.load %arg10[%c16_28, %c0_29] : memref<160x384xbf16, #tpu.memory_space<vmem>>, vector<128x384xbf16>
    %c1 = arith.constant 1 : index
    %c0_30 = arith.constant 0 : index
    %c0_31 = arith.constant 0 : index
    %54 = vector.load %arg5[%c1, %c0_30, %c0_31] : memref<3x384x128xbf16, #tpu.memory_space<vmem>>, vector<1x384x128xbf16>
    %55 = vector.shape_cast %54 : vector<1x384x128xbf16> to vector<384x128xbf16>
    %cst_32 = arith.constant dense<0.000000e+00> : vector<128x128xf32>
    %56 = tpu.matmul %53, %55, %cst_32 {dimension_numbers = #tpu.dot_dimension_numbers<[1], [0], [0], [1], [0, 0, 1, 1], [], []>} : vector<128x384xbf16>, vector<384x128xbf16>, vector<128x128xf32> -> vector<128x128xf32>
    %c0_33 = arith.constant 0 : index
    %c0_34 = arith.constant 0 : index
    %57 = vector.load %arg11[%c0_33, %c0_34] : memref<128x128xf32, #tpu.memory_space<vmem>>, vector<128x128xf32>
    %58 = arith.addf %57, %56 : vector<128x128xf32>
    %c0_35 = arith.constant 0 : index
    %c0_36 = arith.constant 0 : index
    %59 = vector.load %arg11[%c0_35, %c0_36] : memref<128x128xf32, #tpu.memory_space<vmem>>, vector<128x128xf32>
    tpu.vector_store %arg11[%c0_35, %c0_36], %58 {strides = array<i32>} : memref<128x128xf32, #tpu.memory_space<vmem>>, vector<128x128xf32>,
    %c32 = arith.constant 32 : index
    %c0_37 = arith.constant 0 : index
    %60 = vector.load %arg10[%c32, %c0_37] : memref<160x384xbf16, #tpu.memory_space<vmem>>, vector<128x384xbf16>
    %c2 = arith.constant 2 : index
    %c0_38 = arith.constant 0 : index
    %c0_39 = arith.constant 0 : index
    %61 = vector.load %arg5[%c2, %c0_38, %c0_39] : memref<3x384x128xbf16, #tpu.memory_space<vmem>>, vector<1x384x128xbf16>
    %62 = vector.shape_cast %61 : vector<1x384x128xbf16> to vector<384x128xbf16>
    %cst_40 = arith.constant dense<0.000000e+00> : vector<128x128xf32>
    %63 = tpu.matmul %60, %62, %cst_40 {dimension_numbers = #tpu.dot_dimension_numbers<[1], [0], [0], [1], [0, 0, 1, 1], [], []>} : vector<128x384xbf16>, vector<384x128xbf16>, vector<128x128xf32> -> vector<128x128xf32>
    %c0_41 = arith.constant 0 : index
    %c0_42 = arith.constant 0 : index
    %64 = vector.load %arg11[%c0_41, %c0_42] : memref<128x128xf32, #tpu.memory_space<vmem>>, vector<128x128xf32>
    %65 = arith.addf %64, %63 : vector<128x128xf32>
    %c0_43 = arith.constant 0 : index
    %c0_44 = arith.constant 0 : index
    %66 = vector.load %arg11[%c0_43, %c0_44] : memref<128x128xf32, #tpu.memory_space<vmem>>, vector<128x128xf32>
    tpu.vector_store %arg11[%c0_43, %c0_44], %65 {strides = array<i32>} : memref<128x128xf32, #tpu.memory_space<vmem>>, vector<128x128xf32>,
    %c0_45 = arith.constant 0 : index
    %c0_46 = arith.constant 0 : index
    %67 = vector.load %arg11[%c0_45, %c0_46] : memref<128x128xf32, #tpu.memory_space<vmem>>, vector<128x128xf32>
    %cst_47 = arith.constant dense<0.000000e+00> : vector<128xf32>
    %68 = vector.multi_reduction <add>, %67, %cst_47 [0] : vector<128x128xf32> to vector<128xf32>
    %69 = vector.shape_cast %68 : vector<128xf32> to vector<1x128xf32>
    %70 = arith.mulf %67, %67 : vector<128x128xf32>
    %cst_48 = arith.constant dense<0.000000e+00> : vector<128xf32>
    %71 = vector.multi_reduction <add>, %70, %cst_48 [0] : vector<128x128xf32> to vector<128xf32>
    %72 = vector.shape_cast %71 : vector<128xf32> to vector<1x128xf32>
    %73 = tpu.concatenate %69, %72 in 0 : vector<1x128xf32>, vector<1x128xf32> -> vector<2x128xf32>
    %74 = vector.shape_cast %73 : vector<2x128xf32> to vector<1x1x2x128xf32>
    %c0_49 = arith.constant 0 : index
    %c0_50 = arith.constant 0 : index
    %c0_51 = arith.constant 0 : index
    %c0_52 = arith.constant 0 : index
    %75 = vector.load %arg9[%c0_49, %c0_50, %c0_51, %c0_52] : memref<1x1x2x128xf32, #tpu.memory_space<vmem>>, vector<1x1x2x128xf32>
    tpu.vector_store %arg9[%c0_49, %c0_50, %c0_51, %c0_52], %74 {strides = array<i32>} : memref<1x1x2x128xf32, #tpu.memory_space<vmem>>, vector<1x1x2x128xf32>,
    %76 = vector.shape_cast %67 : vector<128x128xf32> to vector<1x8x16x128xf32>
    %c0_53 = arith.constant 0 : index
    %c0_54 = arith.constant 0 : index
    %c0_55 = arith.constant 0 : index
    %c0_56 = arith.constant 0 : index
    %77 = vector.load %arg8[%c0_53, %c0_54, %c0_55, %c0_56] : memref<1x8x16x128xf32, #tpu.memory_space<vmem>>, vector<1x8x16x128xf32>
    tpu.vector_store %arg8[%c0_53, %c0_54, %c0_55, %c0_56], %76 {strides = array<i32>} : memref<1x8x16x128xf32, #tpu.memory_space<vmem>>, vector<1x8x16x128xf32>,
    return
  }
  func.func @transform_0(%arg0: i32, %arg1: i32) -> (i32, i32, i32, i32) {
    %c0_i32 = arith.constant 0 : i32
    %c0_i32_0 = arith.constant 0 : i32
    %c0_i32_1 = arith.constant 0 : i32
    return %arg0, %arg1, %c0_i32, %c0_i32_0 : i32, i32, i32, i32
  }
  func.func @transform_1(%arg0: i32, %arg1: i32) -> (i32, i32, i32, i32) {
    %c1_i32 = arith.constant 1 : i32
    %0 = arith.muli %arg1, %c1_i32 : i32
    %c1_i32_0 = arith.constant 1 : i32
    %1 = arith.subi %0, %c1_i32_0 : i32
    %c0_i32 = arith.constant 0 : i32
    %2 = arith.maxsi %1, %c0_i32 : i32
    %c0_i32_1 = arith.constant 0 : i32
    %c0_i32_2 = arith.constant 0 : i32
    %c0_i32_3 = arith.constant 0 : i32
    return %arg0, %2, %c0_i32_1, %c0_i32_2 : i32, i32, i32, i32
  }
  func.func @transform_2(%arg0: i32, %arg1: i32) -> (i32, i32, i32, i32) {
    %c1_i32 = arith.constant 1 : i32
    %0 = arith.addi %arg1, %c1_i32 : i32
    %c1_i32_0 = arith.constant 1 : i32
    %1 = arith.muli %0, %c1_i32_0 : i32
    %c1_i32_1 = arith.constant 1 : i32
    %2 = arith.minsi %1, %c1_i32_1 : i32
    %c0_i32 = arith.constant 0 : i32
    %c0_i32_2 = arith.constant 0 : i32
    %c0_i32_3 = arith.constant 0 : i32
    return %arg0, %2, %c0_i32, %c0_i32_2 : i32, i32, i32, i32
  }
  func.func @transform_3(%arg0: i32, %arg1: i32) -> (i32, i32, i32) {
    %c0_i32 = arith.constant 0 : i32
    %c0_i32_0 = arith.constant 0 : i32
    %c0_i32_1 = arith.constant 0 : i32
    %c0_i32_2 = arith.constant 0 : i32
    return %c0_i32, %c0_i32_0, %c0_i32_1 : i32, i32, i32
  }
  func.func @transform_4(%arg0: i32, %arg1: i32) -> (i32, i32) {
    %c0_i32 = arith.constant 0 : i32
    %c0_i32_0 = arith.constant 0 : i32
    %c0_i32_1 = arith.constant 0 : i32
    return %c0_i32, %c0_i32_0 : i32, i32
  }
  func.func @transform_5(%arg0: i32, %arg1: i32) -> (i32, i32) {
    %c0_i32 = arith.constant 0 : i32
    %c0_i32_0 = arith.constant 0 : i32
    %c0_i32_1 = arith.constant 0 : i32
    return %c0_i32, %c0_i32_0 : i32, i32
  }
  func.func @transform_6(%arg0: i32, %arg1: i32) -> (i32, i32, i32, i32) {
    %c0_i32 = arith.constant 0 : i32
    %c0_i32_0 = arith.constant 0 : i32
    %c0_i32_1 = arith.constant 0 : i32
    return %arg0, %arg1, %c0_i32, %c0_i32_0 : i32, i32, i32, i32
  }
  func.func @transform_7(%arg0: i32, %arg1: i32) -> (i32, i32, i32, i32) {
    %c0_i32 = arith.constant 0 : i32
    %c0_i32_0 = arith.constant 0 : i32
    %c0_i32_1 = arith.constant 0 : i32
    return %arg0, %arg1, %c0_i32, %c0_i32_0 : i32, i32, i32, i32
  }
}

module attributes {stable_mosaic.version = 11 : i64} {
  func.func @_fused_conv_kernel(%arg0: i32, %arg1: i32, %arg2: memref<1x8x16x128xf32, #tpu.memory_space<vmem>>, %arg3: memref<1x8x16x128xf32, #tpu.memory_space<vmem>>, %arg4: memref<1x8x16x128xf32, #tpu.memory_space<vmem>>, %arg5: memref<3x384x128xbf16, #tpu.memory_space<vmem>>, %arg6: memref<1x128xf32, #tpu.memory_space<vmem>>, %arg7: memref<1x128xf32, #tpu.memory_space<vmem>>, %arg8: memref<1x8x16x128xf32, #tpu.memory_space<vmem>>, %arg9: memref<1x1x2x128xf32, #tpu.memory_space<vmem>>, %arg10: memref<160x384xbf16, #tpu.memory_space<vmem>>, %arg11: memref<128x128xf32, #tpu.memory_space<vmem>>) attributes {dimension_semantics = [#tpu.dimension_semantics<parallel>, #tpu.dimension_semantics<parallel>], iteration_bounds = array<i64: 2, 2>, scalar_prefetch = 0 : i64, scratch_operands = 2 : i64, tpu.core_type = #tpu.core_type<tc>, window_params = [{transform_indices = @transform_0, window_bounds = array<i64: 1, 8, 16, 128>}, {transform_indices = @transform_1, window_bounds = array<i64: 1, 8, 16, 128>}, {transform_indices = @transform_2, window_bounds = array<i64: 1, 8, 16, 128>}, {pipeline_mode = #tpu.pipeline_mode<synchronous>, transform_indices = @transform_3, window_bounds = array<i64: 3, 384, 128>}, {pipeline_mode = #tpu.pipeline_mode<synchronous>, transform_indices = @transform_4, window_bounds = array<i64: 1, 128>}, {pipeline_mode = #tpu.pipeline_mode<synchronous>, transform_indices = @transform_5, window_bounds = array<i64: 1, 128>}, {transform_indices = @transform_6, window_bounds = array<i64: 1, 8, 16, 128>}, {transform_indices = @transform_7, window_bounds = array<i64: 1, 1, 2, 128>}]} {
    %c0 = arith.constant 0 : index
    %c0_0 = arith.constant 0 : index
    %c0_1 = arith.constant 0 : index
    %c0_2 = arith.constant 0 : index
    %0 = vector.load %arg2[%c0, %c0_0, %c0_1, %c0_2] : memref<1x8x16x128xf32, #tpu.memory_space<vmem>>, vector<1x8x16x128xf32>
    %1 = vector.shape_cast %0 : vector<1x8x16x128xf32> to vector<8x16x128xf32>
    %2 = vector.shape_cast %1 : vector<8x16x128xf32> to vector<128x128xf32>
    %c0_3 = arith.constant 0 : index
    %c0_4 = arith.constant 0 : index
    %3 = vector.load %arg6[%c0_3, %c0_4] : memref<1x128xf32, #tpu.memory_space<vmem>>, vector<1x128xf32>
    %4 = vector.broadcast %3 : vector<1x128xf32> to vector<128x128xf32>
    %5 = arith.mulf %2, %4 : vector<128x128xf32>
    %c0_5 = arith.constant 0 : index
    %c0_6 = arith.constant 0 : index
    %6 = vector.load %arg7[%c0_5, %c0_6] : memref<1x128xf32, #tpu.memory_space<vmem>>, vector<1x128xf32>
    %7 = vector.broadcast %6 : vector<1x128xf32> to vector<128x128xf32>
    %8 = arith.addf %5, %7 : vector<128x128xf32>
    %cst = arith.constant 0.000000e+00 : f32
    %9 = vector.broadcast %cst : f32 to vector<128x128xf32>
    %10 = arith.maximumf %8, %9 : vector<128x128xf32>
    %11 = tpu.iota {dimensions = array<i32: 0>} : vector<128x128xi32>
    %c16_i32 = arith.constant 16 : i32
    %c0_i32 = arith.constant 0 : i32
    %12 = arith.cmpi eq, %c16_i32, %c0_i32 : i32
    %c1_i32 = arith.constant 1 : i32
    %13 = arith.select %12, %c1_i32, %c16_i32 : i32
    %14 = vector.broadcast %13 : i32 to vector<128x128xi32>
    %15 = arith.remsi %11, %14 : vector<128x128xi32>
    %c0_i32_7 = arith.constant 0 : i32
    %16 = vector.broadcast %c0_i32_7 : i32 to vector<128x128xi32>
    %17 = arith.cmpi ne, %15, %16 : vector<128x128xi32>
    %c0_i32_8 = arith.constant 0 : i32
    %18 = vector.broadcast %c0_i32_8 : i32 to vector<128x128xi32>
    %19 = arith.cmpi slt, %15, %18 : vector<128x128xi32>
    %c0_i32_9 = arith.constant 0 : i32
    %20 = arith.cmpi slt, %13, %c0_i32_9 : i32
    %21 = vector.broadcast %20 : i1 to vector<128x128xi1>
    %22 = vector.broadcast %21 : vector<128x128xi1> to vector<128x128xi1>
    %23 = arith.xori %19, %22 : vector<128x128xi1>
    %24 = arith.andi %23, %17 : vector<128x128xi1>
    %25 = vector.broadcast %13 : i32 to vector<128x128xi32>
    %26 = arith.addi %15, %25 : vector<128x128xi32>
    %27 = arith.select %24, %26, %15 : vector<128x128xi1>, vector<128x128xi32>
    %c0_i32_10 = arith.constant 0 : i32
    %28 = vector.broadcast %c0_i32_10 : i32 to vector<128x128xi32>
    %29 = arith.cmpi eq, %27, %28 : vector<128x128xi32>
    %c1_i32_11 = arith.constant 1 : i32
    %30 = tpu.dynamic_rotate %10 by %c1_i32_11 dim 0 : vector<128x128xf32>, i32 -> vector<128x128xf32>
    %cst_12 = arith.constant 0.000000e+00 : f32
    %31 = vector.broadcast %cst_12 : f32 to vector<128x128xf32>
    %32 = arith.select %29, %31, %30 : vector<128x128xi1>, vector<128x128xf32>
    %c15_i32 = arith.constant 15 : i32
    %33 = vector.broadcast %c15_i32 : i32 to vector<128x128xi32>
    %34 = arith.cmpi eq, %27, %33 : vector<128x128xi32>
    %c127_i32 = arith.constant 127 : i32
    %35 = tpu.dynamic_rotate %10 by %c127_i32 dim 0 : vector<128x128xf32>, i32 -> vector<128x128xf32>
    %cst_13 = arith.constant 0.000000e+00 : f32
    %36 = vector.broadcast %cst_13 : f32 to vector<128x128xf32>
    %37 = arith.select %34, %36, %35 : vector<128x128xi1>, vector<128x128xf32>
    %38 = arith.truncf %32 : vector<128x128xf32> to vector<128x128xbf16>
    %c16 = arith.constant 16 : index
    %c0_14 = arith.constant 0 : index
    %39 = vector.load %arg10[%c16, %c0_14] : memref<160x384xbf16, #tpu.memory_space<vmem>>, vector<128x128xbf16>
    tpu.vector_store %arg10[%c16, %c0_14], %38 {strides = array<i32>} : memref<160x384xbf16, #tpu.memory_space<vmem>>, vector<128x128xbf16>,
    %40 = arith.truncf %10 : vector<128x128xf32> to vector<128x128xbf16>
    %c16_15 = arith.constant 16 : index
    %c128 = arith.constant 128 : index
    %41 = vector.load %arg10[%c16_15, %c128] : memref<160x384xbf16, #tpu.memory_space<vmem>>, vector<128x128xbf16>
    tpu.vector_store %arg10[%c16_15, %c128], %40 {strides = array<i32>} : memref<160x384xbf16, #tpu.memory_space<vmem>>, vector<128x128xbf16>,
    %42 = arith.truncf %37 : vector<128x128xf32> to vector<128x128xbf16>
    %c16_16 = arith.constant 16 : index
    %c256 = arith.constant 256 : index
    %43 = vector.load %arg10[%c16_16, %c256] : memref<160x384xbf16, #tpu.memory_space<vmem>>, vector<128x128xbf16>
    tpu.vector_store %arg10[%c16_16, %c256], %42 {strides = array<i32>} : memref<160x384xbf16, #tpu.memory_space<vmem>>, vector<128x128xbf16>,
    %c0_i32_17 = arith.constant 0 : i32
    %44 = arith.cmpi eq, %arg1, %c0_i32_17 : i32
    %45 = arith.extui %44 : i1 to i32
    %c0_i32_18 = arith.constant 0 : i32
    %46 = arith.cmpi ne, %45, %c0_i32_18 : i32
    scf.if %46 {
      %cst_62 = arith.constant 0.000000e+00 : bf16
      %86 = vector.broadcast %cst_62 : bf16 to vector<16x384xbf16>
      %c0_63 = arith.constant 0 : index
      %c0_64 = arith.constant 0 : index
      %87 = vector.load %arg10[%c0_63, %c0_64] : memref<160x384xbf16, #tpu.memory_space<vmem>>, vector<16x384xbf16>
      tpu.vector_store %arg10[%c0_63, %c0_64], %86 {strides = array<i32>} : memref<160x384xbf16, #tpu.memory_space<vmem>>, vector<16x384xbf16>,
    } else {
    }
    %c0_i32_19 = arith.constant 0 : i32
    %47 = arith.cmpi sgt, %arg1, %c0_i32_19 : i32
    %48 = arith.extui %47 : i1 to i32
    %c0_i32_20 = arith.constant 0 : i32
    %49 = arith.cmpi ne, %48, %c0_i32_20 : i32
    scf.if %49 {
      %c0_62 = arith.constant 0 : index
      %c7 = arith.constant 7 : index
      %c0_63 = arith.constant 0 : index
      %c0_64 = arith.constant 0 : index
      %86 = vector.load %arg3[%c0_62, %c7, %c0_63, %c0_64] : memref<1x8x16x128xf32, #tpu.memory_space<vmem>>, vector<1x1x16x128xf32>
      %87 = vector.shape_cast %86 : vector<1x1x16x128xf32> to vector<1x16x128xf32>
      %88 = vector.shape_cast %87 : vector<1x16x128xf32> to vector<16x128xf32>
      %c0_65 = arith.constant 0 : index
      %c0_66 = arith.constant 0 : index
      %89 = vector.load %arg6[%c0_65, %c0_66] : memref<1x128xf32, #tpu.memory_space<vmem>>, vector<1x128xf32>
      %90 = vector.broadcast %89 : vector<1x128xf32> to vector<16x128xf32>
      %91 = arith.mulf %88, %90 : vector<16x128xf32>
      %c0_67 = arith.constant 0 : index
      %c0_68 = arith.constant 0 : index
      %92 = vector.load %arg7[%c0_67, %c0_68] : memref<1x128xf32, #tpu.memory_space<vmem>>, vector<1x128xf32>
      %93 = vector.broadcast %92 : vector<1x128xf32> to vector<16x128xf32>
      %94 = arith.addf %91, %93 : vector<16x128xf32>
      %cst_69 = arith.constant 0.000000e+00 : f32
      %95 = vector.broadcast %cst_69 : f32 to vector<16x128xf32>
      %96 = arith.maximumf %94, %95 : vector<16x128xf32>
      %97 = tpu.iota {dimensions = array<i32: 0>} : vector<16x128xi32>
      %c16_i32_70 = arith.constant 16 : i32
      %c0_i32_71 = arith.constant 0 : i32
      %98 = arith.cmpi eq, %c16_i32_70, %c0_i32_71 : i32
      %c1_i32_72 = arith.constant 1 : i32
      %99 = arith.select %98, %c1_i32_72, %c16_i32_70 : i32
      %100 = vector.broadcast %99 : i32 to vector<16x128xi32>
      %101 = arith.remsi %97, %100 : vector<16x128xi32>
      %c0_i32_73 = arith.constant 0 : i32
      %102 = vector.broadcast %c0_i32_73 : i32 to vector<16x128xi32>
      %103 = arith.cmpi ne, %101, %102 : vector<16x128xi32>
      %c0_i32_74 = arith.constant 0 : i32
      %104 = vector.broadcast %c0_i32_74 : i32 to vector<16x128xi32>
      %105 = arith.cmpi slt, %101, %104 : vector<16x128xi32>
      %c0_i32_75 = arith.constant 0 : i32
      %106 = arith.cmpi slt, %99, %c0_i32_75 : i32
      %107 = vector.broadcast %106 : i1 to vector<16x128xi1>
      %108 = vector.broadcast %107 : vector<16x128xi1> to vector<16x128xi1>
      %109 = arith.xori %105, %108 : vector<16x128xi1>
      %110 = arith.andi %109, %103 : vector<16x128xi1>
      %111 = vector.broadcast %99 : i32 to vector<16x128xi32>
      %112 = arith.addi %101, %111 : vector<16x128xi32>
      %113 = arith.select %110, %112, %101 : vector<16x128xi1>, vector<16x128xi32>
      %c0_i32_76 = arith.constant 0 : i32
      %114 = vector.broadcast %c0_i32_76 : i32 to vector<16x128xi32>
      %115 = arith.cmpi eq, %113, %114 : vector<16x128xi32>
      %c1_i32_77 = arith.constant 1 : i32
      %116 = tpu.dynamic_rotate %96 by %c1_i32_77 dim 0 : vector<16x128xf32>, i32 -> vector<16x128xf32>
      %cst_78 = arith.constant 0.000000e+00 : f32
      %117 = vector.broadcast %cst_78 : f32 to vector<16x128xf32>
      %118 = arith.select %115, %117, %116 : vector<16x128xi1>, vector<16x128xf32>
      %c15_i32_79 = arith.constant 15 : i32
      %119 = vector.broadcast %c15_i32_79 : i32 to vector<16x128xi32>
      %120 = arith.cmpi eq, %113, %119 : vector<16x128xi32>
      %c15_i32_80 = arith.constant 15 : i32
      %121 = tpu.dynamic_rotate %96 by %c15_i32_80 dim 0 : vector<16x128xf32>, i32 -> vector<16x128xf32>
      %cst_81 = arith.constant 0.000000e+00 : f32
      %122 = vector.broadcast %cst_81 : f32 to vector<16x128xf32>
      %123 = arith.select %120, %122, %121 : vector<16x128xi1>, vector<16x128xf32>
      %124 = arith.truncf %118 : vector<16x128xf32> to vector<16x128xbf16>
      %c0_82 = arith.constant 0 : index
      %c0_83 = arith.constant 0 : index
      %125 = vector.load %arg10[%c0_82, %c0_83] : memref<160x384xbf16, #tpu.memory_space<vmem>>, vector<16x128xbf16>
      tpu.vector_store %arg10[%c0_82, %c0_83], %124 {strides = array<i32>} : memref<160x384xbf16, #tpu.memory_space<vmem>>, vector<16x128xbf16>,
      %126 = arith.truncf %96 : vector<16x128xf32> to vector<16x128xbf16>
      %c0_84 = arith.constant 0 : index
      %c128_85 = arith.constant 128 : index
      %127 = vector.load %arg10[%c0_84, %c128_85] : memref<160x384xbf16, #tpu.memory_space<vmem>>, vector<16x128xbf16>
      tpu.vector_store %arg10[%c0_84, %c128_85], %126 {strides = array<i32>} : memref<160x384xbf16, #tpu.memory_space<vmem>>, vector<16x128xbf16>,
      %128 = arith.truncf %123 : vector<16x128xf32> to vector<16x128xbf16>
      %c0_86 = arith.constant 0 : index
      %c256_87 = arith.constant 256 : index
      %129 = vector.load %arg10[%c0_86, %c256_87] : memref<160x384xbf16, #tpu.memory_space<vmem>>, vector<16x128xbf16>
      tpu.vector_store %arg10[%c0_86, %c256_87], %128 {strides = array<i32>} : memref<160x384xbf16, #tpu.memory_space<vmem>>, vector<16x128xbf16>,
    } else {
    }
    %c1_i32_21 = arith.constant 1 : i32
    %50 = arith.cmpi eq, %arg1, %c1_i32_21 : i32
    %51 = arith.extui %50 : i1 to i32
    %c0_i32_22 = arith.constant 0 : i32
    %52 = arith.cmpi ne, %51, %c0_i32_22 : i32
    scf.if %52 {
      %cst_62 = arith.constant 0.000000e+00 : bf16
      %86 = vector.broadcast %cst_62 : bf16 to vector<16x384xbf16>
      %c144 = arith.constant 144 : index
      %c0_63 = arith.constant 0 : index
      %87 = vector.load %arg10[%c144, %c0_63] : memref<160x384xbf16, #tpu.memory_space<vmem>>, vector<16x384xbf16>
      tpu.vector_store %arg10[%c144, %c0_63], %86 {strides = array<i32>} : memref<160x384xbf16, #tpu.memory_space<vmem>>, vector<16x384xbf16>,
    } else {
    }
    %c1_i32_23 = arith.constant 1 : i32
    %53 = arith.cmpi slt, %arg1, %c1_i32_23 : i32
    %54 = arith.extui %53 : i1 to i32
    %c0_i32_24 = arith.constant 0 : i32
    %55 = arith.cmpi ne, %54, %c0_i32_24 : i32
    scf.if %55 {
      %c0_62 = arith.constant 0 : index
      %c0_63 = arith.constant 0 : index
      %c0_64 = arith.constant 0 : index
      %c0_65 = arith.constant 0 : index
      %86 = vector.load %arg4[%c0_62, %c0_63, %c0_64, %c0_65] : memref<1x8x16x128xf32, #tpu.memory_space<vmem>>, vector<1x1x16x128xf32>
      %87 = vector.shape_cast %86 : vector<1x1x16x128xf32> to vector<1x16x128xf32>
      %88 = vector.shape_cast %87 : vector<1x16x128xf32> to vector<16x128xf32>
      %c0_66 = arith.constant 0 : index
      %c0_67 = arith.constant 0 : index
      %89 = vector.load %arg6[%c0_66, %c0_67] : memref<1x128xf32, #tpu.memory_space<vmem>>, vector<1x128xf32>
      %90 = vector.broadcast %89 : vector<1x128xf32> to vector<16x128xf32>
      %91 = arith.mulf %88, %90 : vector<16x128xf32>
      %c0_68 = arith.constant 0 : index
      %c0_69 = arith.constant 0 : index
      %92 = vector.load %arg7[%c0_68, %c0_69] : memref<1x128xf32, #tpu.memory_space<vmem>>, vector<1x128xf32>
      %93 = vector.broadcast %92 : vector<1x128xf32> to vector<16x128xf32>
      %94 = arith.addf %91, %93 : vector<16x128xf32>
      %cst_70 = arith.constant 0.000000e+00 : f32
      %95 = vector.broadcast %cst_70 : f32 to vector<16x128xf32>
      %96 = arith.maximumf %94, %95 : vector<16x128xf32>
      %97 = tpu.iota {dimensions = array<i32: 0>} : vector<16x128xi32>
      %c16_i32_71 = arith.constant 16 : i32
      %c0_i32_72 = arith.constant 0 : i32
      %98 = arith.cmpi eq, %c16_i32_71, %c0_i32_72 : i32
      %c1_i32_73 = arith.constant 1 : i32
      %99 = arith.select %98, %c1_i32_73, %c16_i32_71 : i32
      %100 = vector.broadcast %99 : i32 to vector<16x128xi32>
      %101 = arith.remsi %97, %100 : vector<16x128xi32>
      %c0_i32_74 = arith.constant 0 : i32
      %102 = vector.broadcast %c0_i32_74 : i32 to vector<16x128xi32>
      %103 = arith.cmpi ne, %101, %102 : vector<16x128xi32>
      %c0_i32_75 = arith.constant 0 : i32
      %104 = vector.broadcast %c0_i32_75 : i32 to vector<16x128xi32>
      %105 = arith.cmpi slt, %101, %104 : vector<16x128xi32>
      %c0_i32_76 = arith.constant 0 : i32
      %106 = arith.cmpi slt, %99, %c0_i32_76 : i32
      %107 = vector.broadcast %106 : i1 to vector<16x128xi1>
      %108 = vector.broadcast %107 : vector<16x128xi1> to vector<16x128xi1>
      %109 = arith.xori %105, %108 : vector<16x128xi1>
      %110 = arith.andi %109, %103 : vector<16x128xi1>
      %111 = vector.broadcast %99 : i32 to vector<16x128xi32>
      %112 = arith.addi %101, %111 : vector<16x128xi32>
      %113 = arith.select %110, %112, %101 : vector<16x128xi1>, vector<16x128xi32>
      %c0_i32_77 = arith.constant 0 : i32
      %114 = vector.broadcast %c0_i32_77 : i32 to vector<16x128xi32>
      %115 = arith.cmpi eq, %113, %114 : vector<16x128xi32>
      %c1_i32_78 = arith.constant 1 : i32
      %116 = tpu.dynamic_rotate %96 by %c1_i32_78 dim 0 : vector<16x128xf32>, i32 -> vector<16x128xf32>
      %cst_79 = arith.constant 0.000000e+00 : f32
      %117 = vector.broadcast %cst_79 : f32 to vector<16x128xf32>
      %118 = arith.select %115, %117, %116 : vector<16x128xi1>, vector<16x128xf32>
      %c15_i32_80 = arith.constant 15 : i32
      %119 = vector.broadcast %c15_i32_80 : i32 to vector<16x128xi32>
      %120 = arith.cmpi eq, %113, %119 : vector<16x128xi32>
      %c15_i32_81 = arith.constant 15 : i32
      %121 = tpu.dynamic_rotate %96 by %c15_i32_81 dim 0 : vector<16x128xf32>, i32 -> vector<16x128xf32>
      %cst_82 = arith.constant 0.000000e+00 : f32
      %122 = vector.broadcast %cst_82 : f32 to vector<16x128xf32>
      %123 = arith.select %120, %122, %121 : vector<16x128xi1>, vector<16x128xf32>
      %124 = arith.truncf %118 : vector<16x128xf32> to vector<16x128xbf16>
      %c144 = arith.constant 144 : index
      %c0_83 = arith.constant 0 : index
      %125 = vector.load %arg10[%c144, %c0_83] : memref<160x384xbf16, #tpu.memory_space<vmem>>, vector<16x128xbf16>
      tpu.vector_store %arg10[%c144, %c0_83], %124 {strides = array<i32>} : memref<160x384xbf16, #tpu.memory_space<vmem>>, vector<16x128xbf16>,
      %126 = arith.truncf %96 : vector<16x128xf32> to vector<16x128xbf16>
      %c144_84 = arith.constant 144 : index
      %c128_85 = arith.constant 128 : index
      %127 = vector.load %arg10[%c144_84, %c128_85] : memref<160x384xbf16, #tpu.memory_space<vmem>>, vector<16x128xbf16>
      tpu.vector_store %arg10[%c144_84, %c128_85], %126 {strides = array<i32>} : memref<160x384xbf16, #tpu.memory_space<vmem>>, vector<16x128xbf16>,
      %128 = arith.truncf %123 : vector<16x128xf32> to vector<16x128xbf16>
      %c144_86 = arith.constant 144 : index
      %c256_87 = arith.constant 256 : index
      %129 = vector.load %arg10[%c144_86, %c256_87] : memref<160x384xbf16, #tpu.memory_space<vmem>>, vector<16x128xbf16>
      tpu.vector_store %arg10[%c144_86, %c256_87], %128 {strides = array<i32>} : memref<160x384xbf16, #tpu.memory_space<vmem>>, vector<16x128xbf16>,
    } else {
    }
    %c0_25 = arith.constant 0 : index
    %c0_26 = arith.constant 0 : index
    %56 = vector.load %arg10[%c0_25, %c0_26] : memref<160x384xbf16, #tpu.memory_space<vmem>>, vector<128x384xbf16>
    %c0_27 = arith.constant 0 : index
    %c0_28 = arith.constant 0 : index
    %c0_29 = arith.constant 0 : index
    %57 = vector.load %arg5[%c0_27, %c0_28, %c0_29] : memref<3x384x128xbf16, #tpu.memory_space<vmem>>, vector<1x384x128xbf16>
    %58 = vector.shape_cast %57 : vector<1x384x128xbf16> to vector<384x128xbf16>
    %cst_30 = arith.constant dense<0.000000e+00> : vector<128x128xf32>
    %59 = tpu.matmul %56, %58, %cst_30 {dimension_numbers = #tpu.dot_dimension_numbers<[1], [0], [0], [1], [0, 0, 1, 1], [], []>} : vector<128x384xbf16>, vector<384x128xbf16>, vector<128x128xf32> -> vector<128x128xf32>
    %c0_31 = arith.constant 0 : index
    %c0_32 = arith.constant 0 : index
    %60 = vector.load %arg11[%c0_31, %c0_32] : memref<128x128xf32, #tpu.memory_space<vmem>>, vector<128x128xf32>
    tpu.vector_store %arg11[%c0_31, %c0_32], %59 {strides = array<i32>} : memref<128x128xf32, #tpu.memory_space<vmem>>, vector<128x128xf32>,
    %c16_33 = arith.constant 16 : index
    %c0_34 = arith.constant 0 : index
    %61 = vector.load %arg10[%c16_33, %c0_34] : memref<160x384xbf16, #tpu.memory_space<vmem>>, vector<128x384xbf16>
    %c1 = arith.constant 1 : index
    %c0_35 = arith.constant 0 : index
    %c0_36 = arith.constant 0 : index
    %62 = vector.load %arg5[%c1, %c0_35, %c0_36] : memref<3x384x128xbf16, #tpu.memory_space<vmem>>, vector<1x384x128xbf16>
    %63 = vector.shape_cast %62 : vector<1x384x128xbf16> to vector<384x128xbf16>
    %cst_37 = arith.constant dense<0.000000e+00> : vector<128x128xf32>
    %64 = tpu.matmul %61, %63, %cst_37 {dimension_numbers = #tpu.dot_dimension_numbers<[1], [0], [0], [1], [0, 0, 1, 1], [], []>} : vector<128x384xbf16>, vector<384x128xbf16>, vector<128x128xf32> -> vector<128x128xf32>
    %c0_38 = arith.constant 0 : index
    %c0_39 = arith.constant 0 : index
    %65 = vector.load %arg11[%c0_38, %c0_39] : memref<128x128xf32, #tpu.memory_space<vmem>>, vector<128x128xf32>
    %66 = arith.addf %65, %64 : vector<128x128xf32>
    %c0_40 = arith.constant 0 : index
    %c0_41 = arith.constant 0 : index
    %67 = vector.load %arg11[%c0_40, %c0_41] : memref<128x128xf32, #tpu.memory_space<vmem>>, vector<128x128xf32>
    tpu.vector_store %arg11[%c0_40, %c0_41], %66 {strides = array<i32>} : memref<128x128xf32, #tpu.memory_space<vmem>>, vector<128x128xf32>,
    %c32 = arith.constant 32 : index
    %c0_42 = arith.constant 0 : index
    %68 = vector.load %arg10[%c32, %c0_42] : memref<160x384xbf16, #tpu.memory_space<vmem>>, vector<128x384xbf16>
    %c2 = arith.constant 2 : index
    %c0_43 = arith.constant 0 : index
    %c0_44 = arith.constant 0 : index
    %69 = vector.load %arg5[%c2, %c0_43, %c0_44] : memref<3x384x128xbf16, #tpu.memory_space<vmem>>, vector<1x384x128xbf16>
    %70 = vector.shape_cast %69 : vector<1x384x128xbf16> to vector<384x128xbf16>
    %cst_45 = arith.constant dense<0.000000e+00> : vector<128x128xf32>
    %71 = tpu.matmul %68, %70, %cst_45 {dimension_numbers = #tpu.dot_dimension_numbers<[1], [0], [0], [1], [0, 0, 1, 1], [], []>} : vector<128x384xbf16>, vector<384x128xbf16>, vector<128x128xf32> -> vector<128x128xf32>
    %c0_46 = arith.constant 0 : index
    %c0_47 = arith.constant 0 : index
    %72 = vector.load %arg11[%c0_46, %c0_47] : memref<128x128xf32, #tpu.memory_space<vmem>>, vector<128x128xf32>
    %73 = arith.addf %72, %71 : vector<128x128xf32>
    %c0_48 = arith.constant 0 : index
    %c0_49 = arith.constant 0 : index
    %74 = vector.load %arg11[%c0_48, %c0_49] : memref<128x128xf32, #tpu.memory_space<vmem>>, vector<128x128xf32>
    tpu.vector_store %arg11[%c0_48, %c0_49], %73 {strides = array<i32>} : memref<128x128xf32, #tpu.memory_space<vmem>>, vector<128x128xf32>,
    %c0_50 = arith.constant 0 : index
    %c0_51 = arith.constant 0 : index
    %75 = vector.load %arg11[%c0_50, %c0_51] : memref<128x128xf32, #tpu.memory_space<vmem>>, vector<128x128xf32>
    %cst_52 = arith.constant dense<0.000000e+00> : vector<128xf32>
    %76 = vector.multi_reduction <add>, %75, %cst_52 [0] : vector<128x128xf32> to vector<128xf32>
    %77 = vector.shape_cast %76 : vector<128xf32> to vector<1x128xf32>
    %78 = arith.mulf %75, %75 : vector<128x128xf32>
    %cst_53 = arith.constant dense<0.000000e+00> : vector<128xf32>
    %79 = vector.multi_reduction <add>, %78, %cst_53 [0] : vector<128x128xf32> to vector<128xf32>
    %80 = vector.shape_cast %79 : vector<128xf32> to vector<1x128xf32>
    %81 = tpu.concatenate %77, %80 in 0 : vector<1x128xf32>, vector<1x128xf32> -> vector<2x128xf32>
    %82 = vector.shape_cast %81 : vector<2x128xf32> to vector<1x1x2x128xf32>
    %c0_54 = arith.constant 0 : index
    %c0_55 = arith.constant 0 : index
    %c0_56 = arith.constant 0 : index
    %c0_57 = arith.constant 0 : index
    %83 = vector.load %arg9[%c0_54, %c0_55, %c0_56, %c0_57] : memref<1x1x2x128xf32, #tpu.memory_space<vmem>>, vector<1x1x2x128xf32>
    tpu.vector_store %arg9[%c0_54, %c0_55, %c0_56, %c0_57], %82 {strides = array<i32>} : memref<1x1x2x128xf32, #tpu.memory_space<vmem>>, vector<1x1x2x128xf32>,
    %84 = vector.shape_cast %75 : vector<128x128xf32> to vector<1x8x16x128xf32>
    %c0_58 = arith.constant 0 : index
    %c0_59 = arith.constant 0 : index
    %c0_60 = arith.constant 0 : index
    %c0_61 = arith.constant 0 : index
    %85 = vector.load %arg8[%c0_58, %c0_59, %c0_60, %c0_61] : memref<1x8x16x128xf32, #tpu.memory_space<vmem>>, vector<1x8x16x128xf32>
    tpu.vector_store %arg8[%c0_58, %c0_59, %c0_60, %c0_61], %84 {strides = array<i32>} : memref<1x8x16x128xf32, #tpu.memory_space<vmem>>, vector<1x8x16x128xf32>,
    return
  }
  func.func @transform_0(%arg0: i32, %arg1: i32) -> (i32, i32, i32, i32) {
    %c0_i32 = arith.constant 0 : i32
    %c0_i32_0 = arith.constant 0 : i32
    %c0_i32_1 = arith.constant 0 : i32
    return %arg0, %arg1, %c0_i32, %c0_i32_0 : i32, i32, i32, i32
  }
  func.func @transform_1(%arg0: i32, %arg1: i32) -> (i32, i32, i32, i32) {
    %c1_i32 = arith.constant 1 : i32
    %0 = arith.muli %arg1, %c1_i32 : i32
    %c1_i32_0 = arith.constant 1 : i32
    %1 = arith.subi %0, %c1_i32_0 : i32
    %c0_i32 = arith.constant 0 : i32
    %2 = arith.maxsi %1, %c0_i32 : i32
    %c0_i32_1 = arith.constant 0 : i32
    %c0_i32_2 = arith.constant 0 : i32
    %c0_i32_3 = arith.constant 0 : i32
    return %arg0, %2, %c0_i32_1, %c0_i32_2 : i32, i32, i32, i32
  }
  func.func @transform_2(%arg0: i32, %arg1: i32) -> (i32, i32, i32, i32) {
    %c1_i32 = arith.constant 1 : i32
    %0 = arith.addi %arg1, %c1_i32 : i32
    %c1_i32_0 = arith.constant 1 : i32
    %1 = arith.muli %0, %c1_i32_0 : i32
    %c1_i32_1 = arith.constant 1 : i32
    %2 = arith.minsi %1, %c1_i32_1 : i32
    %c0_i32 = arith.constant 0 : i32
    %c0_i32_2 = arith.constant 0 : i32
    %c0_i32_3 = arith.constant 0 : i32
    return %arg0, %2, %c0_i32, %c0_i32_2 : i32, i32, i32, i32
  }
  func.func @transform_3(%arg0: i32, %arg1: i32) -> (i32, i32, i32) {
    %c0_i32 = arith.constant 0 : i32
    %c0_i32_0 = arith.constant 0 : i32
    %c0_i32_1 = arith.constant 0 : i32
    %c0_i32_2 = arith.constant 0 : i32
    return %c0_i32, %c0_i32_0, %c0_i32_1 : i32, i32, i32
  }
  func.func @transform_4(%arg0: i32, %arg1: i32) -> (i32, i32) {
    %c0_i32 = arith.constant 0 : i32
    %c0_i32_0 = arith.constant 0 : i32
    %c0_i32_1 = arith.constant 0 : i32
    return %c0_i32, %c0_i32_0 : i32, i32
  }
  func.func @transform_5(%arg0: i32, %arg1: i32) -> (i32, i32) {
    %c0_i32 = arith.constant 0 : i32
    %c0_i32_0 = arith.constant 0 : i32
    %c0_i32_1 = arith.constant 0 : i32
    return %c0_i32, %c0_i32_0 : i32, i32
  }
  func.func @transform_6(%arg0: i32, %arg1: i32) -> (i32, i32, i32, i32) {
    %c0_i32 = arith.constant 0 : i32
    %c0_i32_0 = arith.constant 0 : i32
    %c0_i32_1 = arith.constant 0 : i32
    return %arg0, %arg1, %c0_i32, %c0_i32_0 : i32, i32, i32, i32
  }
  func.func @transform_7(%arg0: i32, %arg1: i32) -> (i32, i32, i32, i32) {
    %c0_i32 = arith.constant 0 : i32
    %c0_i32_0 = arith.constant 0 : i32
    %c0_i32_1 = arith.constant 0 : i32
    return %arg0, %arg1, %c0_i32, %c0_i32_0 : i32, i32, i32, i32
  }
}

</mosaic_0001>

<llo_original>
// kernel: doubleconv_forward.5
$region0: #{doubleconv_forward.5}
  #allocation0 [shape = 'u32[]', space=smem, size = 0x4, offset = 0x4, fixed_abs, tag = 'smem constant byte address 0x4 - core index']
  #allocation1 [shape = 'u32[144,128]{1,0:T(1,128)}', space=vmem, size = 0x12000, scoped, tag = 'internal scratch']
  %s0 = inlined_call_operand.vmem [shape: f32[2,16,16,128], index: 0, kind: input, shape index: {}]
  %s1 = inlined_call_operand.vmem [shape: f32[1,128], index: 1, kind: input, shape index: {}]
  %s2 = inlined_call_operand.vmem [shape: f32[1,128], index: 2, kind: input, shape index: {}]
  %s3 = inlined_call_operand.vmem [shape: f32[2,16,16,128], index: 3, kind: output, shape index: {}]
  %s4 = sld [smem:[#allocation0]]
  $region45: #{doubleconv_forward.5} parent=0
    _
  %s6 = ssub.s32 1, %s4
  %s7 = scalar_select 0, %s6, %s4
  loop: start=0, step=1, limit=6
  $region2: #{doubleconv_forward.5} parent=0 // loop_pre_header
    _
  $region3: #{doubleconv_forward.5} parent=0 // loop_header
    %s9 = sphi 0, %s13
    %p10 = scmp.ge.s32.totalorder %s9, 6
    %s16 = sphi 0, %s28
    %s17 = sphi 0, %s24
    %s18 = sphi 0, %s16
    %s19 = sphi 0, %s17
    %s20 = sphi 0, %s18
    %s21 = sphi 0, %s19
    %s33 = sphi 0, %s35
    %s36 = sphi 0, %s33
    %s37 = sphi 0, %s36
    %s53 = sphi 0, %s37
    %s57 = sphi 0, %s57
    %s59 = sphi 0, %s57
    %s60 = sphi 0, %s59
    %s74 = sphi 0, %s60
    %s78 = sphi 0, %s78
    %s80 = sphi 0, %s78
    %s81 = sphi 0, %s80
    %s95 = sphi 0, %s81
    %s103 = sphi 0, %s105
    %s106 = sphi 0, %s103
    %s107 = sphi 0, %s106
    %s123 = sphi 0, %s107
  $region4: #{doubleconv_forward.5} parent=0 // loop_header_branch
    %12 = sbr.rel (%p10) target = $region8
  $region5: #{doubleconv_forward.5} parent=0 // loop_body
    %s14 = ssub.s32 %s9, 1
    %s15 = ssub.s32 %s9, 2
    %s22 = sadd.s32 1, %s17
    %p23 = scmp.ge.s32.totalorder %s22, 2
    %s24 = scalar_select %p23, 0, %s22
    %s25 = sadd.s32 1, %s16
    %s26 = scalar_select %p23, %s25, %s16
    %p27 = scmp.ge.s32.totalorder %s26, 2
    %s28 = scalar_select %p27, 0, %s26
    %s29 = ssub.s32 %s16, %s28
    %s30 = ssub.s32 %s17, %s24
    %s31 = sor.u32 %s29, %s30
    %p32 = scmp.eq.s32.totalorder %s31, 0
    %s34 = sadd.s32 %s33, 1
    %s35 = scalar_select %p32, %s33, %s34
    %p38 = pneg %p32
    %p39 = scmp.eq.s32.totalorder %s9, 3
    %p40 = por %p38, %p39
    %p41 = scmp.ne.s32.totalorder %s33, %s36
    %p42 = scmp.eq.s32.totalorder %s9, 0
    %p43 = por %p41, %p42
    %p44 = scmp.ne.s32.totalorder %s33, %s36
    %p45 = scmp.eq.s32.totalorder %s14, 3
    %p46 = por %p44, %p45
    %p47 = scmp.ne.s32.totalorder %s36, %s37
    %p48 = scmp.eq.s32.totalorder %s14, 0
    %p49 = por %p47, %p48
    %p50 = scmp.ne.s32.totalorder %s36, %s37
    %p51 = scmp.eq.s32.totalorder %s15, 3
    %p52 = por %p50, %p51
    %p54 = scmp.ne.s32.totalorder %s37, %s53
    %p55 = scmp.eq.s32.totalorder %s15, 0
    %p56 = por %p54, %p55
    %s58 = sadd.s32 %s57, 1
    %p61 = scmp.eq.s32.totalorder %s9, 3
    %p62 = scmp.ne.s32.totalorder %s57, %s59
    %p63 = scmp.eq.s32.totalorder %s9, 0
    %p64 = por %p62, %p63
    %p65 = scmp.ne.s32.totalorder %s57, %s59
    %p66 = scmp.eq.s32.totalorder %s14, 3
    %p67 = por %p65, %p66
    %p68 = scmp.ne.s32.totalorder %s59, %s60
    %p69 = scmp.eq.s32.totalorder %s14, 0
    %p70 = por %p68, %p69
    %p71 = scmp.ne.s32.totalorder %s59, %s60
    %p72 = scmp.eq.s32.totalorder %s15, 3
    %p73 = por %p71, %p72
    %p75 = scmp.ne.s32.totalorder %s60, %s74
    %p76 = scmp.eq.s32.totalorder %s15, 0
    %p77 = por %p75, %p76
    %s79 = sadd.s32 %s78, 1
    %p82 = scmp.eq.s32.totalorder %s9, 3
    %p83 = scmp.ne.s32.totalorder %s78, %s80
    %p84 = scmp.eq.s32.totalorder %s9, 0
    %p85 = por %p83, %p84
    %p86 = scmp.ne.s32.totalorder %s78, %s80
    %p87 = scmp.eq.s32.totalorder %s14, 3
    %p88 = por %p86, %p87
    %p89 = scmp.ne.s32.totalorder %s80, %s81
    %p90 = scmp.eq.s32.totalorder %s14, 0
    %p91 = por %p89, %p90
    %p92 = scmp.ne.s32.totalorder %s80, %s81
    %p93 = scmp.eq.s32.totalorder %s15, 3
    %p94 = por %p92, %p93
    %p96 = scmp.ne.s32.totalorder %s81, %s95
    %p97 = scmp.eq.s32.totalorder %s15, 0
    %p98 = por %p96, %p97
    %s99 = ssub.s32 %s16, %s28
    %s100 = ssub.s32 %s17, %s24
    %s101 = sor.u32 %s99, %s100
    %p102 = scmp.eq.s32.totalorder %s101, 0
    %s104 = sadd.s32 %s103, 1
    %s105 = scalar_select %p102, %s103, %s104
    %p108 = pneg %p102
    %p109 = scmp.eq.s32.totalorder %s9, 3
    %p110 = por %p108, %p109
    %p111 = scmp.ne.s32.totalorder %s103, %s106
    %p112 = scmp.eq.s32.totalorder %s9, 0
    %p113 = por %p111, %p112
    %p114 = scmp.ne.s32.totalorder %s103, %s106
    %p115 = scmp.eq.s32.totalorder %s14, 3
    %p116 = por %p114, %p115
    %p117 = scmp.ne.s32.totalorder %s106, %s107
    %p118 = scmp.eq.s32.totalorder %s14, 0
    %p119 = por %p117, %p118
    %p120 = scmp.ne.s32.totalorder %s106, %s107
    %p121 = scmp.eq.s32.totalorder %s15, 3
    %p122 = por %p120, %p121
    %p124 = scmp.ne.s32.totalorder %s107, %s123
    %p125 = scmp.eq.s32.totalorder %s15, 0
    %p126 = por %p124, %p125
    %p127 = scmp.le.s32.totalorder 1, %s9
    %p128 = scmp.lt.s32.totalorder %s9, 5
    %p129 = pnand %p127, %p128
    %p130 = pneg %p129
    // Predicated region
    $region9: #{doubleconv_forward.5} parent=5 // pred_check
      _
    $region10: #{doubleconv_forward.5} parent=5 // pred_check_branch
      %132 = sbr.rel (%p129) target = $region12
    $region11: #{doubleconv_forward.5} parent=5 // pred_region
      %s133 = ssub.s32 %s9, 1
      // Predicated region
      $region13: #{doubleconv_forward.5} parent=11 // pred_check
        %p134 = pneg %p70
      $region14: #{doubleconv_forward.5} parent=11 // pred_check_branch
        %136 = sbr.rel (%p134) target = $region16
      $region15: #{doubleconv_forward.5} parent=11 // pred_region
        _
      $region16: #{doubleconv_forward.5} parent=11 // pred_fallthru
        _
      // Predicated region
      $region17: #{doubleconv_forward.5} parent=11 // pred_check
        %p137 = pneg %p91
      $region18: #{doubleconv_forward.5} parent=11 // pred_check_branch
        %139 = sbr.rel (%p137) target = $region20
      $region19: #{doubleconv_forward.5} parent=11 // pred_region
        _
      $region20: #{doubleconv_forward.5} parent=11 // pred_fallthru
        _
    $region12: #{doubleconv_forward.5} parent=5 // pred_fallthru
      _
    %p140 = scmp.lt.s32.totalorder %s9, 4
    // Predicated region
    $region21: #{doubleconv_forward.5} parent=5 // pred_check
      %p141 = pneg %p140
    $region22: #{doubleconv_forward.5} parent=5 // pred_check_branch
      %143 = sbr.rel (%p141) target = $region24
    $region23: #{doubleconv_forward.5} parent=5 // pred_region
      // Predicated region
      $region25: #{doubleconv_forward.5} parent=23 // pred_check
        %p144 = pneg %p43
      $region26: #{doubleconv_forward.5} parent=23 // pred_check_branch
        %146 = sbr.rel (%p144) target = $region28
      $region27: #{doubleconv_forward.5} parent=23 // pred_region
        %s147 = smul.u32 8, %s17
        %p148 = scmp.lt.s32.totalorder %s16, 1
        %s149 = scalar_select %p148, %s16, 1
        %p150 = scmp.lt.s32.totalorder %s147, 15
        %s151 = scalar_select %p150, %s147, 15
        %s152 = smul.addr %s151, 2
        %s153 = smul.addr %s149, 32
        %s154 = sadd.s32 %s152, %s153
        %s155 = smul.addr %s154, 8
        %s156 = scalar_lea.vmem %s0, %s155
        %s157 = smul.u32 8, %s17
      $region28: #{doubleconv_forward.5} parent=23 // pred_fallthru
        _
    $region24: #{doubleconv_forward.5} parent=5 // pred_fallthru
      _
    %p158 = scmp.le.s32.totalorder 1, %s9
    %p159 = scmp.lt.s32.totalorder %s9, 5
    %p160 = pnand %p158, %p159
    %p161 = pneg %p160
    // Predicated region
    $region29: #{doubleconv_forward.5} parent=5 // pred_check
      _
    $region30: #{doubleconv_forward.5} parent=5 // pred_check_branch
      %163 = sbr.rel (%p160) target = $region32
    $region31: #{doubleconv_forward.5} parent=5 // pred_region
      %s164 = ssub.s32 %s9, 1
      %s165 = smul.u32 8, %s19
      %p166 = scmp.lt.s32.totalorder %s18, 1
      %s167 = scalar_select %p166, %s18, 1
      %p168 = scmp.lt.s32.totalorder %s165, 15
      %s169 = scalar_select %p168, %s165, 15
      %s170 = smul.addr %s169, 2
      %s171 = smul.addr %s167, 32
      %s172 = sadd.s32 %s170, %s171
      %s173 = smul.addr %s172, 8
      %s174 = scalar_lea.vmem %s0, %s173
      %p175 = pneg %p49
      %p176 = pneg %p46
      %p177 = pneg %p70
      %p178 = pneg %p67
      %p179 = pneg %p91
      %p180 = pneg %p88
      %p181 = pneg %p119
      %p182 = pneg %p116
      %s183 = smul.u32 8, %s19
      %p184 = scmp.lt.s32.totalorder %s18, 1
      %s185 = scalar_select %p184, %s18, 1
      %p186 = scmp.lt.s32.totalorder %s183, 15
      %s187 = scalar_select %p186, %s183, 15
      %s188 = smul.addr %s187, 2
      %s189 = smul.addr %s185, 32
      %s190 = sadd.s32 %s188, %s189
      %s191 = smul.addr %s190, 8
      %s192 = scalar_lea.vmem %s3, %s191
      %s193 = smul.u32 8, %s19
      %p194 = scmp.lt.s32.totalorder %s18, 1
      %s195 = scalar_select %p194, %s18, 1
      %p196 = scmp.lt.s32.totalorder %s193, 15
      %s197 = scalar_select %p196, %s193, 15
      %s198 = smul.addr %s197, 2
      %s199 = smul.addr %s195, 32
      %s200 = sadd.s32 %s198, %s199
      %s201 = smul.addr %s200, 8
      %s202 = scalar_lea.vmem %s0, %s201
      %s203 = smul.u32 8, %s19
      %s204 = smul.u32 8, %s19
      %p205 = scmp.lt.s32.totalorder %s18, 1
      %s206 = scalar_select %p205, %s18, 1
      %p207 = scmp.lt.s32.totalorder %s204, 15
      %s208 = scalar_select %p207, %s204, 15
      %s209 = smul.addr %s208, 2
      %s210 = smul.addr %s206, 32
      %s211 = sadd.s32 %s209, %s210
      %s212 = smul.addr %s211, 8
      %s213 = scalar_lea.vmem %s3, %s212
      %s214 = smul.u32 8, %s19
      %v215 = vld [vmem:[%s202] sm:$0xff]
      %v216 = vld [vmem:[%s202 + $0x8] sm:$0xff]
      %v217 = vld [vmem:[%s202 + $0x10] sm:$0xff]
      %v218 = vld [vmem:[%s202 + $0x18] sm:$0xff]
      %v219 = vld [vmem:[%s202 + $0x20] sm:$0xff]
      %v220 = vld [vmem:[%s202 + $0x28] sm:$0xff]
      %v221 = vld [vmem:[%s202 + $0x30] sm:$0xff]
      %v222 = vld [vmem:[%s202 + $0x38] sm:$0xff]
      %v223 = vld [vmem:[%s202 + $0x40] sm:$0xff]
      %v224 = vld [vmem:[%s202 + $0x48] sm:$0xff]
      %v225 = vld [vmem:[%s202 + $0x50] sm:$0xff]
      %v226 = vld [vmem:[%s202 + $0x58] sm:$0xff]
      %v227 = vld [vmem:[%s202 + $0x60] sm:$0xff]
      %v228 = vld [vmem:[%s202 + $0x68] sm:$0xff]
      %v229 = vld [vmem:[%s202 + $0x70] sm:$0xff]
      %v230 = vld [vmem:[%s202 + $0x78] sm:$0xff]
      %v231 = vld [vmem:[%s1] sm:$0x1]
      %v233 = vlaneseq
      %v234 = vshrl.u32 %v233, 7
      %v235 = vsub.s32 0, %v234
      %v236 = vrot.slane %v231, %v235
      %v238 = vmul.f32 %v215, %v236
      %v239 = vmul.f32 %v216, %v236
      %v240 = vmul.f32 %v217, %v236
      %v241 = vmul.f32 %v218, %v236
      %v242 = vmul.f32 %v219, %v236
      %v243 = vmul.f32 %v220, %v236
      %v244 = vmul.f32 %v221, %v236
      %v245 = vmul.f32 %v222, %v236
      %v246 = vmul.f32 %v223, %v236
      %v247 = vmul.f32 %v224, %v236
      %v248 = vmul.f32 %v225, %v236
      %v249 = vmul.f32 %v226, %v236
      %v250 = vmul.f32 %v227, %v236
      %v251 = vmul.f32 %v228, %v236
      %v252 = vmul.f32 %v229, %v236
      %v253 = vmul.f32 %v230, %v236
      %v254 = vld [vmem:[%s2] sm:$0x1]
      %v256 = vlaneseq
      %v257 = vshrl.u32 %v256, 7
      %v258 = vsub.s32 0, %v257
      %v259 = vrot.slane %v254, %v258
      %v261 = vadd.f32 %v238, %v259
      %v262 = vadd.f32 %v239, %v259
      %v263 = vadd.f32 %v240, %v259
      %v264 = vadd.f32 %v241, %v259
      %v265 = vadd.f32 %v242, %v259
      %v266 = vadd.f32 %v243, %v259
      %v267 = vadd.f32 %v244, %v259
      %v268 = vadd.f32 %v245, %v259
      %v269 = vadd.f32 %v246, %v259
      %v270 = vadd.f32 %v247, %v259
      %v271 = vadd.f32 %v248, %v259
      %v272 = vadd.f32 %v249, %v259
      %v273 = vadd.f32 %v250, %v259
      %v274 = vadd.f32 %v251, %v259
      %v275 = vadd.f32 %v252, %v259
      %v276 = vadd.f32 %v253, %v259
      %v277 = vmax.f32 %v261, 0.0
      %v278 = vmax.f32 %v262, 0.0
      %v279 = vmax.f32 %v263, 0.0
      %v280 = vmax.f32 %v264, 0.0
      %v281 = vmax.f32 %v265, 0.0
      %v282 = vmax.f32 %v266, 0.0
      %v283 = vmax.f32 %v267, 0.0
      %v284 = vmax.f32 %v268, 0.0
      %v285 = vmax.f32 %v269, 0.0
      %v286 = vmax.f32 %v270, 0.0
      %v287 = vmax.f32 %v271, 0.0
      %v288 = vmax.f32 %v272, 0.0
      %v289 = vmax.f32 %v273, 0.0
      %v290 = vmax.f32 %v274, 0.0
      %v291 = vmax.f32 %v275, 0.0
      %v292 = vmax.f32 %v276, 0.0
      %293 = vst [vmem:[%s213] sm:$0xff] %v277
      %294 = vst [vmem:[%s213 + $0x8] sm:$0xff] %v278
      %295 = vst [vmem:[%s213 + $0x10] sm:$0xff] %v279
      %296 = vst [vmem:[%s213 + $0x18] sm:$0xff] %v280
      %297 = vst [vmem:[%s213 + $0x20] sm:$0xff] %v281
      %298 = vst [vmem:[%s213 + $0x28] sm:$0xff] %v282
      %299 = vst [vmem:[%s213 + $0x30] sm:$0xff] %v283
      %300 = vst [vmem:[%s213 + $0x38] sm:$0xff] %v284
      %301 = vst [vmem:[%s213 + $0x40] sm:$0xff] %v285
      %302 = vst [vmem:[%s213 + $0x48] sm:$0xff] %v286
      %303 = vst [vmem:[%s213 + $0x50] sm:$0xff] %v287
      %304 = vst [vmem:[%s213 + $0x58] sm:$0xff] %v288
      %305 = vst [vmem:[%s213 + $0x60] sm:$0xff] %v289
      %306 = vst [vmem:[%s213 + $0x68] sm:$0xff] %v290
      %307 = vst [vmem:[%s213 + $0x70] sm:$0xff] %v291
      %308 = vst [vmem:[%s213 + $0x78] sm:$0xff] %v292
      %s309 = smul.u32 8, %s19
      %p310 = scmp.lt.s32.totalorder %s18, 1
      %s311 = scalar_select %p310, %s18, 1
      %p312 = scmp.lt.s32.totalorder %s309, 15
      %s313 = scalar_select %p312, %s309, 15
      %s314 = smul.addr %s313, 2
      %s315 = smul.addr %s311, 32
      %s316 = sadd.s32 %s314, %s315
      %s317 = smul.addr %s316, 8
      %s318 = scalar_lea.vmem %s3, %s317
      // Predicated region
      $region33: #{doubleconv_forward.5} parent=31 // pred_check
        %p319 = pneg %p116
      $region34: #{doubleconv_forward.5} parent=31 // pred_check_branch
        %321 = sbr.rel (%p319) target = $region36
      $region35: #{doubleconv_forward.5} parent=31 // pred_region
        %s322 = smul.u32 8, %s19
      $region36: #{doubleconv_forward.5} parent=31 // pred_fallthru
        _
    $region32: #{doubleconv_forward.5} parent=5 // pred_fallthru
      _
    %p323 = scmp.le.s32.totalorder 2, %s9
    // Predicated region
    $region37: #{doubleconv_forward.5} parent=5 // pred_check
      %p324 = pneg %p323
    $region38: #{doubleconv_forward.5} parent=5 // pred_check_branch
      %326 = sbr.rel (%p324) target = $region40
    $region39: #{doubleconv_forward.5} parent=5 // pred_region
      %s327 = ssub.s32 %s9, 2
      // Predicated region
      $region41: #{doubleconv_forward.5} parent=39 // pred_check
        %p328 = pneg %p122
      $region42: #{doubleconv_forward.5} parent=39 // pred_check_branch
        %330 = sbr.rel (%p328) target = $region44
      $region43: #{doubleconv_forward.5} parent=39 // pred_region
        %s331 = smul.u32 8, %s21
        %p332 = scmp.lt.s32.totalorder %s20, 1
        %s333 = scalar_select %p332, %s20, 1
        %p334 = scmp.lt.s32.totalorder %s331, 15
        %s335 = scalar_select %p334, %s331, 15
        %s336 = smul.addr %s335, 2
        %s337 = smul.addr %s333, 32
        %s338 = sadd.s32 %s336, %s337
        %s339 = smul.addr %s338, 8
        %s340 = scalar_lea.vmem %s3, %s339
      $region44: #{doubleconv_forward.5} parent=39 // pred_fallthru
        _
    $region40: #{doubleconv_forward.5} parent=5 // pred_fallthru
      _
  $region6: #{doubleconv_forward.5} parent=0 // loop_footer
    %s13 = sadd.s32 1, %s9
  $region7: #{doubleconv_forward.5} parent=0 // loop_footer_branch
    %8 = sbr.rel target = $region3
  $region8: #{doubleconv_forward.5} parent=0 // loop_exit
    _

// kernel: doubleconv_forward.3
$region0: #{doubleconv_forward.3}
  #allocation0 [shape = 'u32[]', space=smem, size = 0x4, offset = 0x4, fixed_abs, tag = 'smem constant byte address 0x4 - core index']
  #allocation1 [shape = 'u32[144,128]{1,0:T(1,128)}', space=vmem, size = 0x12000, scoped, tag = 'internal scratch']
  #allocation2 [shape = 'bf16[160,384]{1,0:T(16,128)(2,1)}', space=vmem, size = 0x1e000, scoped, tag = 'scratch operand']
  #allocation3 [shape = 'f32[128,128]{1,0:T(8,128)}', space=vmem, size = 0x10000, scoped, tag = 'scratch operand']
  %s0 = inlined_call_operand.vmem [shape: f32[2,16,16,128], index: 0, kind: input, shape index: {}, may-alias: {0,1,2}]
  %s1 = inlined_call_operand.vmem [shape: f32[2,16,16,128], index: 1, kind: input, shape index: {}, may-alias: {0,1,2}]
  %s2 = inlined_call_operand.vmem [shape: f32[2,16,16,128], index: 2, kind: input, shape index: {}, may-alias: {0,1,2}]
  %s3 = inlined_call_operand.vmem [shape: bf16[3,384,128], index: 3, kind: input, shape index: {}]
  %s4 = inlined_call_operand.vmem [shape: f32[1,128], index: 4, kind: input, shape index: {}, may-alias: {4,5}]
  %s5 = inlined_call_operand.vmem [shape: f32[1,128], index: 5, kind: input, shape index: {}, may-alias: {4,5}]
  %s6 = inlined_call_operand.vmem [shape: f32[2,16,16,128], index: 6, kind: output, shape index: {0}]
  %s7 = inlined_call_operand.vmem [shape: f32[2,2,2,128], index: 7, kind: output, shape index: {1}]
  %8 = xla_tuple %s6, %s7
  %s9 = sld [smem:[#allocation0]]
  $region81: #{doubleconv_forward.3} parent=0
    _
  %s11 = ssub.s32 1, %s9
  %s12 = scalar_select 0, %s11, %s9
  loop: start=0, step=1, limit=6
  $region2: #{doubleconv_forward.3} parent=0 // loop_pre_header
    _
  $region3: #{doubleconv_forward.3} parent=0 // loop_header
    %s14 = sphi 0, %s18
    %p15 = scmp.ge.s32.totalorder %s14, 6
    %s21 = sphi 0, %s33
    %s22 = sphi 0, %s29
    %s23 = sphi 0, %s21
    %s24 = sphi 0, %s22
    %s25 = sphi 0, %s23
    %s26 = sphi 0, %s24
    %s38 = sphi 0, %s40
    %s41 = sphi 0, %s38
    %s42 = sphi 0, %s41
    %s58 = sphi 0, %s42
    %s72 = sphi 0, %s74
    %s75 = sphi 0, %s72
    %s76 = sphi 0, %s75
    %s92 = sphi 0, %s76
    %s106 = sphi 0, %s108
    %s109 = sphi 0, %s106
    %s110 = sphi 0, %s109
    %s126 = sphi 0, %s110
    %s130 = sphi 0, %s130
    %s132 = sphi 0, %s130
    %s133 = sphi 0, %s132
    %s147 = sphi 0, %s133
    %s151 = sphi 0, %s151
    %s153 = sphi 0, %s151
    %s154 = sphi 0, %s153
    %s168 = sphi 0, %s154
    %s172 = sphi 0, %s172
    %s174 = sphi 0, %s172
    %s175 = sphi 0, %s174
    %s189 = sphi 0, %s175
    %s197 = sphi 0, %s199
    %s200 = sphi 0, %s197
    %s201 = sphi 0, %s200
    %s217 = sphi 0, %s201
    %s225 = sphi 0, %s227
    %s228 = sphi 0, %s225
    %s229 = sphi 0, %s228
    %s245 = sphi 0, %s229
  $region4: #{doubleconv_forward.3} parent=0 // loop_header_branch
    %17 = sbr.rel (%p15) target = $region8
  $region5: #{doubleconv_forward.3} parent=0 // loop_body
    %s19 = ssub.s32 %s14, 1
    %s20 = ssub.s32 %s14, 2
    %s27 = sadd.s32 1, %s22
    %p28 = scmp.ge.s32.totalorder %s27, 2
    %s29 = scalar_select %p28, 0, %s27
    %s30 = sadd.s32 1, %s21
    %s31 = scalar_select %p28, %s30, %s21
    %p32 = scmp.ge.s32.totalorder %s31, 2
    %s33 = scalar_select %p32, 0, %s31
    %s34 = ssub.s32 %s21, %s33
    %s35 = ssub.s32 %s22, %s29
    %s36 = sor.u32 %s34, %s35
    %p37 = scmp.eq.s32.totalorder %s36, 0
    %s39 = sadd.s32 %s38, 1
    %s40 = scalar_select %p37, %s38, %s39
    %p43 = pneg %p37
    %p44 = scmp.eq.s32.totalorder %s14, 3
    %p45 = por %p43, %p44
    %p46 = scmp.ne.s32.totalorder %s38, %s41
    %p47 = scmp.eq.s32.totalorder %s14, 0
    %p48 = por %p46, %p47
    %p49 = scmp.ne.s32.totalorder %s38, %s41
    %p50 = scmp.eq.s32.totalorder %s19, 3
    %p51 = por %p49, %p50
    %p52 = scmp.ne.s32.totalorder %s41, %s42
    %p53 = scmp.eq.s32.totalorder %s19, 0
    %p54 = por %p52, %p53
    %p55 = scmp.ne.s32.totalorder %s41, %s42
    %p56 = scmp.eq.s32.totalorder %s20, 3
    %p57 = por %p55, %p56
    %p59 = scmp.ne.s32.totalorder %s42, %s58
    %p60 = scmp.eq.s32.totalorder %s20, 0
    %p61 = por %p59, %p60
    %s62 = ssub.s32 %s22, 1
    %p63 = scmp.gt.s32.totalorder %s62, 0
    %s64 = scalar_select %p63, %s62, 0
    %s65 = ssub.s32 %s29, 1
    %p66 = scmp.gt.s32.totalorder %s65, 0
    %s67 = scalar_select %p66, %s65, 0
    %s68 = ssub.s32 %s21, %s33
    %s69 = ssub.s32 %s64, %s67
    %s70 = sor.u32 %s68, %s69
    %p71 = scmp.eq.s32.totalorder %s70, 0
    %s73 = sadd.s32 %s72, 1
    %s74 = scalar_select %p71, %s72, %s73
    %p77 = pneg %p71
    %p78 = scmp.eq.s32.totalorder %s14, 3
    %p79 = por %p77, %p78
    %p80 = scmp.ne.s32.totalorder %s72, %s75
    %p81 = scmp.eq.s32.totalorder %s14, 0
    %p82 = por %p80, %p81
    %p83 = scmp.ne.s32.totalorder %s72, %s75
    %p84 = scmp.eq.s32.totalorder %s19, 3
    %p85 = por %p83, %p84
    %p86 = scmp.ne.s32.totalorder %s75, %s76
    %p87 = scmp.eq.s32.totalorder %s19, 0
    %p88 = por %p86, %p87
    %p89 = scmp.ne.s32.totalorder %s75, %s76
    %p90 = scmp.eq.s32.totalorder %s20, 3
    %p91 = por %p89, %p90
    %p93 = scmp.ne.s32.totalorder %s76, %s92
    %p94 = scmp.eq.s32.totalorder %s20, 0
    %p95 = por %p93, %p94
    %s96 = sadd.s32 %s22, 1
    %p97 = scmp.lt.s32.totalorder %s96, 1
    %s98 = scalar_select %p97, %s96, 1
    %s99 = sadd.s32 %s29, 1
    %p100 = scmp.lt.s32.totalorder %s99, 1
    %s101 = scalar_select %p100, %s99, 1
    %s102 = ssub.s32 %s21, %s33
    %s103 = ssub.s32 %s98, %s101
    %s104 = sor.u32 %s102, %s103
    %p105 = scmp.eq.s32.totalorder %s104, 0
    %s107 = sadd.s32 %s106, 1
    %s108 = scalar_select %p105, %s106, %s107
    %p111 = pneg %p105
    %p112 = scmp.eq.s32.totalorder %s14, 3
    %p113 = por %p111, %p112
    %p114 = scmp.ne.s32.totalorder %s106, %s109
    %p115 = scmp.eq.s32.totalorder %s14, 0
    %p116 = por %p114, %p115
    %p117 = scmp.ne.s32.totalorder %s106, %s109
    %p118 = scmp.eq.s32.totalorder %s19, 3
    %p119 = por %p117, %p118
    %p120 = scmp.ne.s32.totalorder %s109, %s110
    %p121 = scmp.eq.s32.totalorder %s19, 0
    %p122 = por %p120, %p121
    %p123 = scmp.ne.s32.totalorder %s109, %s110
    %p124 = scmp.eq.s32.totalorder %s20, 3
    %p125 = por %p123, %p124
    %p127 = scmp.ne.s32.totalorder %s110, %s126
    %p128 = scmp.eq.s32.totalorder %s20, 0
    %p129 = por %p127, %p128
    %s131 = sadd.s32 %s130, 1
    %p134 = scmp.eq.s32.totalorder %s14, 3
    %p135 = scmp.ne.s32.totalorder %s130, %s132
    %p136 = scmp.eq.s32.totalorder %s14, 0
    %p137 = por %p135, %p136
    %p138 = scmp.ne.s32.totalorder %s130, %s132
    %p139 = scmp.eq.s32.totalorder %s19, 3
    %p140 = por %p138, %p139
    %p141 = scmp.ne.s32.totalorder %s132, %s133
    %p142 = scmp.eq.s32.totalorder %s19, 0
    %p143 = por %p141, %p142
    %p144 = scmp.ne.s32.totalorder %s132, %s133
    %p145 = scmp.eq.s32.totalorder %s20, 3
    %p146 = por %p144, %p145
    %p148 = scmp.ne.s32.totalorder %s133, %s147
    %p149 = scmp.eq.s32.totalorder %s20, 0
    %p150 = por %p148, %p149
    %s152 = sadd.s32 %s151, 1
    %p155 = scmp.eq.s32.totalorder %s14, 3
    %p156 = scmp.ne.s32.totalorder %s151, %s153
    %p157 = scmp.eq.s32.totalorder %s14, 0
    %p158 = por %p156, %p157
    %p159 = scmp.ne.s32.totalorder %s151, %s153
    %p160 = scmp.eq.s32.totalorder %s19, 3
    %p161 = por %p159, %p160
    %p162 = scmp.ne.s32.totalorder %s153, %s154
    %p163 = scmp.eq.s32.totalorder %s19, 0
    %p164 = por %p162, %p163
    %p165 = scmp.ne.s32.totalorder %s153, %s154
    %p166 = scmp.eq.s32.totalorder %s20, 3
    %p167 = por %p165, %p166
    %p169 = scmp.ne.s32.totalorder %s154, %s168
    %p170 = scmp.eq.s32.totalorder %s20, 0
    %p171 = por %p169, %p170
    %s173 = sadd.s32 %s172, 1
    %p176 = scmp.eq.s32.totalorder %s14, 3
    %p177 = scmp.ne.s32.totalorder %s172, %s174
    %p178 = scmp.eq.s32.totalorder %s14, 0
    %p179 = por %p177, %p178
    %p180 = scmp.ne.s32.totalorder %s172, %s174
    %p181 = scmp.eq.s32.totalorder %s19, 3
    %p182 = por %p180, %p181
    %p183 = scmp.ne.s32.totalorder %s174, %s175
    %p184 = scmp.eq.s32.totalorder %s19, 0
    %p185 = por %p183, %p184
    %p186 = scmp.ne.s32.totalorder %s174, %s175
    %p187 = scmp.eq.s32.totalorder %s20, 3
    %p188 = por %p186, %p187
    %p190 = scmp.ne.s32.totalorder %s175, %s189
    %p191 = scmp.eq.s32.totalorder %s20, 0
    %p192 = por %p190, %p191
    %s193 = ssub.s32 %s21, %s33
    %s194 = ssub.s32 %s22, %s29
    %s195 = sor.u32 %s193, %s194
    %p196 = scmp.eq.s32.totalorder %s195, 0
    %s198 = sadd.s32 %s197, 1
    %s199 = scalar_select %p196, %s197, %s198
    %p202 = pneg %p196
    %p203 = scmp.eq.s32.totalorder %s14, 3
    %p204 = por %p202, %p203
    %p205 = scmp.ne.s32.totalorder %s197, %s200
    %p206 = scmp.eq.s32.totalorder %s14, 0
    %p207 = por %p205, %p206
    %p208 = scmp.ne.s32.totalorder %s197, %s200
    %p209 = scmp.eq.s32.totalorder %s19, 3
    %p210 = por %p208, %p209
    %p211 = scmp.ne.s32.totalorder %s200, %s201
    %p212 = scmp.eq.s32.totalorder %s19, 0
    %p213 = por %p211, %p212
    %p214 = scmp.ne.s32.totalorder %s200, %s201
    %p215 = scmp.eq.s32.totalorder %s20, 3
    %p216 = por %p214, %p215
    %p218 = scmp.ne.s32.totalorder %s201, %s217
    %p219 = scmp.eq.s32.totalorder %s20, 0
    %p220 = por %p218, %p219
    %s221 = ssub.s32 %s21, %s33
    %s222 = ssub.s32 %s22, %s29
    %s223 = sor.u32 %s221, %s222
    %p224 = scmp.eq.s32.totalorder %s223, 0
    %s226 = sadd.s32 %s225, 1
    %s227 = scalar_select %p224, %s225, %s226
    %p230 = pneg %p224
    %p231 = scmp.eq.s32.totalorder %s14, 3
    %p232 = por %p230, %p231
    %p233 = scmp.ne.s32.totalorder %s225, %s228
    %p234 = scmp.eq.s32.totalorder %s14, 0
    %p235 = por %p233, %p234
    %p236 = scmp.ne.s32.totalorder %s225, %s228
    %p237 = scmp.eq.s32.totalorder %s19, 3
    %p238 = por %p236, %p237
    %p239 = scmp.ne.s32.totalorder %s228, %s229
    %p240 = scmp.eq.s32.totalorder %s19, 0
    %p241 = por %p239, %p240
    %p242 = scmp.ne.s32.totalorder %s228, %s229
    %p243 = scmp.eq.s32.totalorder %s20, 3
    %p244 = por %p242, %p243
    %p246 = scmp.ne.s32.totalorder %s229, %s245
    %p247 = scmp.eq.s32.totalorder %s20, 0
    %p248 = por %p246, %p247
    %p249 = scmp.le.s32.totalorder 1, %s14
    %p250 = scmp.lt.s32.totalorder %s14, 5
    %p251 = pnand %p249, %p250
    %p252 = pneg %p251
    // Predicated region
    $region9: #{doubleconv_forward.3} parent=5 // pred_check
      _
    $region10: #{doubleconv_forward.3} parent=5 // pred_check_branch
      %254 = sbr.rel (%p251) target = $region12
    $region11: #{doubleconv_forward.3} parent=5 // pred_region
      %s255 = ssub.s32 %s14, 1
      // Predicated region
      $region13: #{doubleconv_forward.3} parent=11 // pred_check
        %p256 = pneg %p143
      $region14: #{doubleconv_forward.3} parent=11 // pred_check_branch
        %258 = sbr.rel (%p256) target = $region16
      $region15: #{doubleconv_forward.3} parent=11 // pred_region
        _
      $region16: #{doubleconv_forward.3} parent=11 // pred_fallthru
        _
      // Predicated region
      $region17: #{doubleconv_forward.3} parent=11 // pred_check
        %p259 = pneg %p164
      $region18: #{doubleconv_forward.3} parent=11 // pred_check_branch
        %261 = sbr.rel (%p259) target = $region20
      $region19: #{doubleconv_forward.3} parent=11 // pred_region
        _
      $region20: #{doubleconv_forward.3} parent=11 // pred_fallthru
        _
      // Predicated region
      $region21: #{doubleconv_forward.3} parent=11 // pred_check
        %p262 = pneg %p185
      $region22: #{doubleconv_forward.3} parent=11 // pred_check_branch
        %264 = sbr.rel (%p262) target = $region24
      $region23: #{doubleconv_forward.3} parent=11 // pred_region
        _
      $region24: #{doubleconv_forward.3} parent=11 // pred_fallthru
        _
    $region12: #{doubleconv_forward.3} parent=5 // pred_fallthru
      _
    %p265 = scmp.lt.s32.totalorder %s14, 4
    // Predicated region
    $region25: #{doubleconv_forward.3} parent=5 // pred_check
      %p266 = pneg %p265
    $region26: #{doubleconv_forward.3} parent=5 // pred_check_branch
      %268 = sbr.rel (%p266) target = $region28
    $region27: #{doubleconv_forward.3} parent=5 // pred_region
      // Predicated region
      $region29: #{doubleconv_forward.3} parent=27 // pred_check
        %p269 = pneg %p48
      $region30: #{doubleconv_forward.3} parent=27 // pred_check_branch
        %271 = sbr.rel (%p269) target = $region32
      $region31: #{doubleconv_forward.3} parent=27 // pred_region
        %s272 = smul.u32 8, %s22
        %p273 = scmp.lt.s32.totalorder %s21, 1
        %s274 = scalar_select %p273, %s21, 1
        %p275 = scmp.lt.s32.totalorder %s272, 15
        %s276 = scalar_select %p275, %s272, 15
        %s277 = smul.addr %s276, 2
        %s278 = smul.addr %s274, 32
        %s279 = sadd.s32 %s277, %s278
        %s280 = smul.addr %s279, 8
        %s281 = scalar_lea.vmem %s0, %s280
        %s282 = smul.u32 8, %s22
      $region32: #{doubleconv_forward.3} parent=27 // pred_fallthru
        _
      // Predicated region
      $region33: #{doubleconv_forward.3} parent=27 // pred_check
        %p283 = pneg %p82
      $region34: #{doubleconv_forward.3} parent=27 // pred_check_branch
        %285 = sbr.rel (%p283) target = $region36
      $region35: #{doubleconv_forward.3} parent=27 // pred_region
        %s286 = ssub.s32 %s22, 1
        %p287 = scmp.gt.s32.totalorder %s286, 0
        %s288 = scalar_select %p287, %s286, 0
        %s289 = smul.u32 8, %s288
        %p290 = scmp.lt.s32.totalorder %s21, 1
        %s291 = scalar_select %p290, %s21, 1
        %p292 = scmp.lt.s32.totalorder %s289, 15
        %s293 = scalar_select %p292, %s289, 15
        %s294 = smul.addr %s293, 2
        %s295 = smul.addr %s291, 32
        %s296 = sadd.s32 %s294, %s295
        %s297 = smul.addr %s296, 8
        %s298 = scalar_lea.vmem %s1, %s297
        %s299 = ssub.s32 %s22, 1
        %p300 = scmp.gt.s32.totalorder %s299, 0
        %s301 = scalar_select %p300, %s299, 0
        %s302 = smul.u32 8, %s301
      $region36: #{doubleconv_forward.3} parent=27 // pred_fallthru
        _
      // Predicated region
      $region37: #{doubleconv_forward.3} parent=27 // pred_check
        %p303 = pneg %p116
      $region38: #{doubleconv_forward.3} parent=27 // pred_check_branch
        %305 = sbr.rel (%p303) target = $region40
      $region39: #{doubleconv_forward.3} parent=27 // pred_region
        %s306 = sadd.s32 %s22, 1
        %p307 = scmp.lt.s32.totalorder %s306, 1
        %s308 = scalar_select %p307, %s306, 1
        %s309 = smul.u32 8, %s308
        %p310 = scmp.lt.s32.totalorder %s21, 1
        %s311 = scalar_select %p310, %s21, 1
        %p312 = scmp.lt.s32.totalorder %s309, 15
        %s313 = scalar_select %p312, %s309, 15
        %s314 = smul.addr %s313, 2
        %s315 = smul.addr %s311, 32
        %s316 = sadd.s32 %s314, %s315
        %s317 = smul.addr %s316, 8
        %s318 = scalar_lea.vmem %s2, %s317
        %s319 = sadd.s32 %s22, 1
        %p320 = scmp.lt.s32.totalorder %s319, 1
        %s321 = scalar_select %p320, %s319, 1
        %s322 = smul.u32 8, %s321
      $region40: #{doubleconv_forward.3} parent=27 // pred_fallthru
        _
    $region28: #{doubleconv_forward.3} parent=5 // pred_fallthru
      _
    %p323 = scmp.le.s32.totalorder 1, %s14
    %p324 = scmp.lt.s32.totalorder %s14, 5
    %p325 = pnand %p323, %p324
    %p326 = pneg %p325
    // Predicated region
    $region41: #{doubleconv_forward.3} parent=5 // pred_check
      _
    $region42: #{doubleconv_forward.3} parent=5 // pred_check_branch
      %328 = sbr.rel (%p325) target = $region44
    $region43: #{doubleconv_forward.3} parent=5 // pred_region
      %s329 = ssub.s32 %s14, 1
      %s330 = smul.u32 8, %s24
      %p331 = scmp.lt.s32.totalorder %s23, 1
      %s332 = scalar_select %p331, %s23, 1
      %p333 = scmp.lt.s32.totalorder %s330, 15
      %s334 = scalar_select %p333, %s330, 15
      %s335 = smul.addr %s334, 2
      %s336 = smul.addr %s332, 32
      %s337 = sadd.s32 %s335, %s336
      %s338 = smul.addr %s337, 8
      %s339 = scalar_lea.vmem %s0, %s338
      %p340 = pneg %p54
      %p341 = pneg %p51
      %s342 = ssub.s32 %s24, 1
      %p343 = scmp.gt.s32.totalorder %s342, 0
      %s344 = scalar_select %p343, %s342, 0
      %s345 = smul.u32 8, %s344
      %p346 = scmp.lt.s32.totalorder %s23, 1
      %s347 = scalar_select %p346, %s23, 1
      %p348 = scmp.lt.s32.totalorder %s345, 15
      %s349 = scalar_select %p348, %s345, 15
      %s350 = smul.addr %s349, 2
      %s351 = smul.addr %s347, 32
      %s352 = sadd.s32 %s350, %s351
      %s353 = smul.addr %s352, 8
      %s354 = scalar_lea.vmem %s1, %s353
      %p355 = pneg %p88
      %p356 = pneg %p85
      %s357 = sadd.s32 %s24, 1
      %p358 = scmp.lt.s32.totalorder %s357, 1
      %s359 = scalar_select %p358, %s357, 1
      %s360 = smul.u32 8, %s359
      %p361 = scmp.lt.s32.totalorder %s23, 1
      %s362 = scalar_select %p361, %s23, 1
      %p363 = scmp.lt.s32.totalorder %s360, 15
      %s364 = scalar_select %p363, %s360, 15
      %s365 = smul.addr %s364, 2
      %s366 = smul.addr %s362, 32
      %s367 = sadd.s32 %s365, %s366
      %s368 = smul.addr %s367, 8
      %s369 = scalar_lea.vmem %s2, %s368
      %p370 = pneg %p122
      %p371 = pneg %p119
      %p372 = pneg %p143
      %p373 = pneg %p140
      %p374 = pneg %p164
      %p375 = pneg %p161
      %p376 = pneg %p185
      %p377 = pneg %p182
      %p378 = pneg %p213
      %p379 = pneg %p210
      %s380 = smul.u32 8, %s24
      %p381 = scmp.lt.s32.totalorder %s23, 1
      %s382 = scalar_select %p381, %s23, 1
      %p383 = scmp.lt.s32.totalorder %s380, 15
      %s384 = scalar_select %p383, %s380, 15
      %s385 = smul.addr %s384, 2
      %s386 = smul.addr %s382, 32
      %s387 = sadd.s32 %s385, %s386
      %s388 = smul.addr %s387, 8
      %s389 = scalar_lea.vmem %s6, %s388
      %p390 = pneg %p241
      %p391 = pneg %p238
      %p392 = scmp.lt.s32.totalorder %s23, 1
      %s393 = scalar_select %p392, %s23, 1
      %p394 = scmp.lt.s32.totalorder %s24, 1
      %s395 = scalar_select %p394, %s24, 1
      %s396 = smul.addr %s393, 2
      %s397 = sadd.s32 %s395, %s396
      %s398 = smul.addr %s397, 2
      %s399 = scalar_lea.vmem %s7, %s398
      %s400 = smul.u32 8, %s24
      %p401 = scmp.lt.s32.totalorder %s23, 1
      %s402 = scalar_select %p401, %s23, 1
      %p403 = scmp.lt.s32.totalorder %s400, 15
      %s404 = scalar_select %p403, %s400, 15
      %s405 = smul.addr %s404, 2
      %s406 = smul.addr %s402, 32
      %s407 = sadd.s32 %s405, %s406
      %s408 = smul.addr %s407, 8
      %s409 = scalar_lea.vmem %s0, %s408
      %s410 = smul.u32 8, %s24
      %s411 = ssub.s32 %s24, 1
      %p412 = scmp.gt.s32.totalorder %s411, 0
      %s413 = scalar_select %p412, %s411, 0
      %s414 = smul.u32 8, %s413
      %p415 = scmp.lt.s32.totalorder %s23, 1
      %s416 = scalar_select %p415, %s23, 1
      %p417 = scmp.lt.s32.totalorder %s414, 15
      %s418 = scalar_select %p417, %s414, 15
      %s419 = smul.addr %s418, 2
      %s420 = smul.addr %s416, 32
      %s421 = sadd.s32 %s419, %s420
      %s422 = smul.addr %s421, 8
      %s423 = scalar_lea.vmem %s1, %s422
      %s424 = ssub.s32 %s24, 1
      %p425 = scmp.gt.s32.totalorder %s424, 0
      %s426 = scalar_select %p425, %s424, 0
      %s427 = smul.u32 8, %s426
      %s428 = sadd.s32 %s24, 1
      %p429 = scmp.lt.s32.totalorder %s428, 1
      %s430 = scalar_select %p429, %s428, 1
      %s431 = smul.u32 8, %s430
      %p432 = scmp.lt.s32.totalorder %s23, 1
      %s433 = scalar_select %p432, %s23, 1
      %p434 = scmp.lt.s32.totalorder %s431, 15
      %s435 = scalar_select %p434, %s431, 15
      %s436 = smul.addr %s435, 2
      %s437 = smul.addr %s433, 32
      %s438 = sadd.s32 %s436, %s437
      %s439 = smul.addr %s438, 8
      %s440 = scalar_lea.vmem %s2, %s439
      %s441 = sadd.s32 %s24, 1
      %p442 = scmp.lt.s32.totalorder %s441, 1
      %s443 = scalar_select %p442, %s441, 1
      %s444 = smul.u32 8, %s443
      %s445 = smul.u32 8, %s24
      %p446 = scmp.lt.s32.totalorder %s23, 1
      %s447 = scalar_select %p446, %s23, 1
      %p448 = scmp.lt.s32.totalorder %s445, 15
      %s449 = scalar_select %p448, %s445, 15
      %s450 = smul.addr %s449, 2
      %s451 = smul.addr %s447, 32
      %s452 = sadd.s32 %s450, %s451
      %s453 = smul.addr %s452, 8
      %s454 = scalar_lea.vmem %s6, %s453
      %s455 = smul.u32 8, %s24
      %p456 = scmp.lt.s32.totalorder %s23, 1
      %s457 = scalar_select %p456, %s23, 1
      %p458 = scmp.lt.s32.totalorder %s24, 1
      %s459 = scalar_select %p458, %s24, 1
      %s460 = smul.addr %s457, 2
      %s461 = sadd.s32 %s459, %s460
      %s462 = smul.addr %s461, 2
      %s463 = scalar_lea.vmem %s7, %s462
      %v465 = vld [vmem:[%s409] sm:$0xff]
      %v466 = vld [vmem:[%s409 + $0x8] sm:$0xff]
      %v467 = vld [vmem:[%s409 + $0x10] sm:$0xff]
      %v468 = vld [vmem:[%s409 + $0x18] sm:$0xff]
      %v469 = vld [vmem:[%s409 + $0x20] sm:$0xff]
      %v470 = vld [vmem:[%s409 + $0x28] sm:$0xff]
      %v471 = vld [vmem:[%s409 + $0x30] sm:$0xff]
      %v472 = vld [vmem:[%s409 + $0x38] sm:$0xff]
      %v473 = vld [vmem:[%s409 + $0x40] sm:$0xff]
      %v474 = vld [vmem:[%s409 + $0x48] sm:$0xff]
      %v475 = vld [vmem:[%s409 + $0x50] sm:$0xff]
      %v476 = vld [vmem:[%s409 + $0x58] sm:$0xff]
      %v477 = vld [vmem:[%s409 + $0x60] sm:$0xff]
      %v478 = vld [vmem:[%s409 + $0x68] sm:$0xff]
      %v479 = vld [vmem:[%s409 + $0x70] sm:$0xff]
      %v480 = vld [vmem:[%s409 + $0x78] sm:$0xff]
      %v481 = vlaneseq
      %v482 = vshrl.u32 %v481, 7
      %v483 = vadd.s32 %v482, 8
      %v484 = vadd.s32 %v482, 16
      %v485 = vadd.s32 %v482, 24
      %v486 = vadd.s32 %v482, 32
      %v487 = vadd.s32 %v482, 40
      %v488 = vadd.s32 %v482, 48
      %v489 = vadd.s32 %v482, 56
      %v490 = vadd.s32 %v482, 64
      %v491 = vadd.s32 %v482, 72
      %v492 = vadd.s32 %v482, 80
      %v493 = vadd.s32 %v482, 88
      %v494 = vadd.s32 %v482, 96
      %v495 = vadd.s32 %v482, 104
      %v496 = vadd.s32 %v482, 112
      %v497 = vadd.s32 %v482, 120
      %vm498 = vcmp.lt.s32.totalorder %v482, 0
      %v499 = vsub.s32 0, %v482
      %v500 = vsel %vm498, %v499, %v482
      %v501 = vshrl.u32 %v500, 4
      %v502 = vand.u32 %v500, 15
      %v503 = vsub.s32 0, %v502
      %v504 = vsel %vm498, %v503, %v502
      %vm505 = vcmp.lt.s32.totalorder %v483, 0
      %v506 = vsub.s32 0, %v483
      %v507 = vsel %vm505, %v506, %v483
      %v508 = vshrl.u32 %v507, 4
      %v509 = vand.u32 %v507, 15
      %v510 = vsub.s32 0, %v509
      %v511 = vsel %vm505, %v510, %v509
      %vm512 = vcmp.lt.s32.totalorder %v484, 0
      %v513 = vsub.s32 0, %v484
      %v514 = vsel %vm512, %v513, %v484
      %v515 = vshrl.u32 %v514, 4
      %v516 = vand.u32 %v514, 15
      %v517 = vsub.s32 0, %v516
      %v518 = vsel %vm512, %v517, %v516
      %vm519 = vcmp.lt.s32.totalorder %v485, 0
      %v520 = vsub.s32 0, %v485
      %v521 = vsel %vm519, %v520, %v485
      %v522 = vshrl.u32 %v521, 4
      %v523 = vand.u32 %v521, 15
      %v524 = vsub.s32 0, %v523
      %v525 = vsel %vm519, %v524, %v523
      %vm526 = vcmp.lt.s32.totalorder %v486, 0
      %v527 = vsub.s32 0, %v486
      %v528 = vsel %vm526, %v527, %v486
      %v529 = vshrl.u32 %v528, 4
      %v530 = vand.u32 %v528, 15
      %v531 = vsub.s32 0, %v530
      %v532 = vsel %vm526, %v531, %v530
      %vm533 = vcmp.lt.s32.totalorder %v487, 0
      %v534 = vsub.s32 0, %v487
      %v535 = vsel %vm533, %v534, %v487
      %v536 = vshrl.u32 %v535, 4
      %v537 = vand.u32 %v535, 15
      %v538 = vsub.s32 0, %v537
      %v539 = vsel %vm533, %v538, %v537
      %vm540 = vcmp.lt.s32.totalorder %v488, 0
      %v541 = vsub.s32 0, %v488
      %v542 = vsel %vm540, %v541, %v488
      %v543 = vshrl.u32 %v542, 4
      %v544 = vand.u32 %v542, 15
      %v545 = vsub.s32 0, %v544
      %v546 = vsel %vm540, %v545, %v544
      %vm547 = vcmp.lt.s32.totalorder %v489, 0
      %v548 = vsub.s32 0, %v489
      %v549 = vsel %vm547, %v548, %v489
      %v550 = vshrl.u32 %v549, 4
      %v551 = vand.u32 %v549, 15
      %v552 = vsub.s32 0, %v551
      %v553 = vsel %vm547, %v552, %v551
      %vm554 = vcmp.lt.s32.totalorder %v490, 0
      %v555 = vsub.s32 0, %v490
      %v556 = vsel %vm554, %v555, %v490
      %v557 = vshrl.u32 %v556, 4
      %v558 = vand.u32 %v556, 15
      %v559 = vsub.s32 0, %v558
      %v560 = vsel %vm554, %v559, %v558
      %vm561 = vcmp.lt.s32.totalorder %v491, 0
      %v562 = vsub.s32 0, %v491
      %v563 = vsel %vm561, %v562, %v491
      %v564 = vshrl.u32 %v563, 4
      %v565 = vand.u32 %v563, 15
      %v566 = vsub.s32 0, %v565
      %v567 = vsel %vm561, %v566, %v565
      %vm568 = vcmp.lt.s32.totalorder %v492, 0
      %v569 = vsub.s32 0, %v492
      %v570 = vsel %vm568, %v569, %v492
      %v571 = vshrl.u32 %v570, 4
      %v572 = vand.u32 %v570, 15
      %v573 = vsub.s32 0, %v572
      %v574 = vsel %vm568, %v573, %v572
      %vm575 = vcmp.lt.s32.totalorder %v493, 0
      %v576 = vsub.s32 0, %v493
      %v577 = vsel %vm575, %v576, %v493
      %v578 = vshrl.u32 %v577, 4
      %v579 = vand.u32 %v577, 15
      %v580 = vsub.s32 0, %v579
      %v581 = vsel %vm575, %v580, %v579
      %vm582 = vcmp.lt.s32.totalorder %v494, 0
      %v583 = vsub.s32 0, %v494
      %v584 = vsel %vm582, %v583, %v494
      %v585 = vshrl.u32 %v584, 4
      %v586 = vand.u32 %v584, 15
      %v587 = vsub.s32 0, %v586
      %v588 = vsel %vm582, %v587, %v586
      %vm589 = vcmp.lt.s32.totalorder %v495, 0
      %v590 = vsub.s32 0, %v495
      %v591 = vsel %vm589, %v590, %v495
      %v592 = vshrl.u32 %v591, 4
      %v593 = vand.u32 %v591, 15
      %v594 = vsub.s32 0, %v593
      %v595 = vsel %vm589, %v594, %v593
      %vm596 = vcmp.lt.s32.totalorder %v496, 0
      %v597 = vsub.s32 0, %v496
      %v598 = vsel %vm596, %v597, %v496
      %v599 = vshrl.u32 %v598, 4
      %v600 = vand.u32 %v598, 15
      %v601 = vsub.s32 0, %v600
      %v602 = vsel %vm596, %v601, %v600
      %vm603 = vcmp.lt.s32.totalorder %v497, 0
      %v604 = vsub.s32 0, %v497
      %v605 = vsel %vm603, %v604, %v497
      %v606 = vshrl.u32 %v605, 4
      %v607 = vand.u32 %v605, 15
      %v608 = vsub.s32 0, %v607
      %v609 = vsel %vm603, %v608, %v607
      %vm610 = vcmp.ne.s32.totalorder %v504, 0
      %vm611 = vcmp.ne.s32.totalorder %v511, 0
      %vm612 = vcmp.ne.s32.totalorder %v518, 0
      %vm613 = vcmp.ne.s32.totalorder %v525, 0
      %vm614 = vcmp.ne.s32.totalorder %v532, 0
      %vm615 = vcmp.ne.s32.totalorder %v539, 0
      %vm616 = vcmp.ne.s32.totalorder %v546, 0
      %vm617 = vcmp.ne.s32.totalorder %v553, 0
      %vm618 = vcmp.ne.s32.totalorder %v560, 0
      %vm619 = vcmp.ne.s32.totalorder %v567, 0
      %vm620 = vcmp.ne.s32.totalorder %v574, 0
      %vm621 = vcmp.ne.s32.totalorder %v581, 0
      %vm622 = vcmp.ne.s32.totalorder %v588, 0
      %vm623 = vcmp.ne.s32.totalorder %v595, 0
      %vm624 = vcmp.ne.s32.totalorder %v602, 0
      %vm625 = vcmp.ne.s32.totalorder %v609, 0
      %vm626 = vcmp.lt.s32.totalorder %v504, 0
      %vm627 = vcmp.lt.s32.totalorder %v511, 0
      %vm628 = vcmp.lt.s32.totalorder %v518, 0
      %vm629 = vcmp.lt.s32.totalorder %v525, 0
      %vm630 = vcmp.lt.s32.totalorder %v532, 0
      %vm631 = vcmp.lt.s32.totalorder %v539, 0
      %vm632 = vcmp.lt.s32.totalorder %v546, 0
      %vm633 = vcmp.lt.s32.totalorder %v553, 0
      %vm634 = vcmp.lt.s32.totalorder %v560, 0
      %vm635 = vcmp.lt.s32.totalorder %v567, 0
      %vm636 = vcmp.lt.s32.totalorder %v574, 0
      %vm637 = vcmp.lt.s32.totalorder %v581, 0
      %vm638 = vcmp.lt.s32.totalorder %v588, 0
      %vm639 = vcmp.lt.s32.totalorder %v595, 0
      %vm640 = vcmp.lt.s32.totalorder %v602, 0
      %vm641 = vcmp.lt.s32.totalorder %v609, 0
      %vm642 = vmand %vm626, %vm610
      %vm643 = vmand %vm627, %vm611
      %vm644 = vmand %vm628, %vm612
      %vm645 = vmand %vm629, %vm613
      %vm646 = vmand %vm630, %vm614
      %vm647 = vmand %vm631, %vm615
      %vm648 = vmand %vm632, %vm616
      %vm649 = vmand %vm633, %vm617
      %vm650 = vmand %vm634, %vm618
      %vm651 = vmand %vm635, %vm619
      %vm652 = vmand %vm636, %vm620
      %vm653 = vmand %vm637, %vm621
      %vm654 = vmand %vm638, %vm622
      %vm655 = vmand %vm639, %vm623
      %vm656 = vmand %vm640, %vm624
      %vm657 = vmand %vm641, %vm625
      %v658 = vadd.s32 %v504, 16
      %v659 = vadd.s32 %v511, 16
      %v660 = vadd.s32 %v518, 16
      %v661 = vadd.s32 %v525, 16
      %v662 = vadd.s32 %v532, 16
      %v663 = vadd.s32 %v539, 16
      %v664 = vadd.s32 %v546, 16
      %v665 = vadd.s32 %v553, 16
      %v666 = vadd.s32 %v560, 16
      %v667 = vadd.s32 %v567, 16
      %v668 = vadd.s32 %v574, 16
      %v669 = vadd.s32 %v581, 16
      %v670 = vadd.s32 %v588, 16
      %v671 = vadd.s32 %v595, 16
      %v672 = vadd.s32 %v602, 16
      %v673 = vadd.s32 %v609, 16
      %v674 = vsel %vm642, %v658, %v504
      %v675 = vsel %vm643, %v659, %v511
      %v676 = vsel %vm644, %v660, %v518
      %v677 = vsel %vm645, %v661, %v525
      %v678 = vsel %vm646, %v662, %v532
      %v679 = vsel %vm647, %v663, %v539
      %v680 = vsel %vm648, %v664, %v546
      %v681 = vsel %vm649, %v665, %v553
      %v682 = vsel %vm650, %v666, %v560
      %v683 = vsel %vm651, %v667, %v567
      %v684 = vsel %vm652, %v668, %v574
      %v685 = vsel %vm653, %v669, %v581
      %v686 = vsel %vm654, %v670, %v588
      %v687 = vsel %vm655, %v671, %v595
      %v688 = vsel %vm656, %v672, %v602
      %v689 = vsel %vm657, %v673, %v609
      %vm690 = vcmp.eq.s32.totalorder %v674, 0
      %vm691 = vcmp.eq.s32.totalorder %v675, 0
      %vm692 = vcmp.eq.s32.totalorder %v676, 0
      %vm693 = vcmp.eq.s32.totalorder %v677, 0
      %vm694 = vcmp.eq.s32.totalorder %v678, 0
      %vm695 = vcmp.eq.s32.totalorder %v679, 0
      %vm696 = vcmp.eq.s32.totalorder %v680, 0
      %vm697 = vcmp.eq.s32.totalorder %v681, 0
      %vm698 = vcmp.eq.s32.totalorder %v682, 0
      %vm699 = vcmp.eq.s32.totalorder %v683, 0
      %vm700 = vcmp.eq.s32.totalorder %v684, 0
      %vm701 = vcmp.eq.s32.totalorder %v685, 0
      %vm702 = vcmp.eq.s32.totalorder %v686, 0
      %vm703 = vcmp.eq.s32.totalorder %v687, 0
      %vm704 = vcmp.eq.s32.totalorder %v688, 0
      %vm705 = vcmp.eq.s32.totalorder %v689, 0
      %v706 = vrot.slane %v465, 7
      %v707 = vrot.slane %v466, 7
      %v708 = vrot.slane %v467, 7
      %v709 = vrot.slane %v468, 7
      %v710 = vrot.slane %v469, 7
      %v711 = vrot.slane %v470, 7
      %v712 = vrot.slane %v471, 7
      %v713 = vrot.slane %v472, 7
      %v714 = vrot.slane %v473, 7
      %v715 = vrot.slane %v474, 7
      %v716 = vrot.slane %v475, 7
      %v717 = vrot.slane %v476, 7
      %v718 = vrot.slane %v477, 7
      %v719 = vrot.slane %v478, 7
      %v720 = vrot.slane %v479, 7
      %v721 = vrot.slane %v480, 7
      %vm722 = vcmp.lt.s32.totalorder %v482, 1
      %v723 = vsel %vm722, %v720, %v721
      %v724 = vsel %vm722, %v719, %v720
      %v725 = vsel %vm722, %v718, %v719
      %v726 = vsel %vm722, %v717, %v718
      %v727 = vsel %vm722, %v716, %v717
      %v728 = vsel %vm722, %v715, %v716
      %v729 = vsel %vm722, %v714, %v715
      %v730 = vsel %vm722, %v713, %v714
      %v731 = vsel %vm722, %v712, %v713
      %v732 = vsel %vm722, %v711, %v712
      %v733 = vsel %vm722, %v710, %v711
      %v734 = vsel %vm722, %v709, %v710
      %v735 = vsel %vm722, %v708, %v709
      %v736 = vsel %vm722, %v707, %v708
      %v737 = vsel %vm722, %v706, %v707
      %v738 = vsel %vm722, %v721, %v706
      %v739 = vsel %vm690, 0.0, %v738
      %v740 = vsel %vm691, 0.0, %v737
      %v741 = vsel %vm692, 0.0, %v736
      %v742 = vsel %vm693, 0.0, %v735
      %v743 = vsel %vm694, 0.0, %v734
      %v744 = vsel %vm695, 0.0, %v733
      %v745 = vsel %vm696, 0.0, %v732
      %v746 = vsel %vm697, 0.0, %v731
      %v747 = vsel %vm698, 0.0, %v730
      %v748 = vsel %vm699, 0.0, %v729
      %v749 = vsel %vm700, 0.0, %v728
      %v750 = vsel %vm701, 0.0, %v727
      %v751 = vsel %vm702, 0.0, %v726
      %v752 = vsel %vm703, 0.0, %v725
      %v753 = vsel %vm704, 0.0, %v724
      %v754 = vsel %vm705, 0.0, %v723
      %vm755 = vcmp.eq.s32.totalorder %v674, 15
      %vm756 = vcmp.eq.s32.totalorder %v675, 15
      %vm757 = vcmp.eq.s32.totalorder %v676, 15
      %vm758 = vcmp.eq.s32.totalorder %v677, 15
      %vm759 = vcmp.eq.s32.totalorder %v678, 15
      %vm760 = vcmp.eq.s32.totalorder %v679, 15
      %vm761 = vcmp.eq.s32.totalorder %v680, 15
      %vm762 = vcmp.eq.s32.totalorder %v681, 15
      %vm763 = vcmp.eq.s32.totalorder %v682, 15
      %vm764 = vcmp.eq.s32.totalorder %v683, 15
      %vm765 = vcmp.eq.s32.totalorder %v684, 15
      %vm766 = vcmp.eq.s32.totalorder %v685, 15
      %vm767 = vcmp.eq.s32.totalorder %v686, 15
      %vm768 = vcmp.eq.s32.totalorder %v687, 15
      %vm769 = vcmp.eq.s32.totalorder %v688, 15
      %vm770 = vcmp.eq.s32.totalorder %v689, 15
      %v771 = vrot.slane %v465, 1
      %v772 = vrot.slane %v466, 1
      %v773 = vrot.slane %v467, 1
      %v774 = vrot.slane %v468, 1
      %v775 = vrot.slane %v469, 1
      %v776 = vrot.slane %v470, 1
      %v777 = vrot.slane %v471, 1
      %v778 = vrot.slane %v472, 1
      %v779 = vrot.slane %v473, 1
      %v780 = vrot.slane %v474, 1
      %v781 = vrot.slane %v475, 1
      %v782 = vrot.slane %v476, 1
      %v783 = vrot.slane %v477, 1
      %v784 = vrot.slane %v478, 1
      %v785 = vrot.slane %v479, 1
      %v786 = vrot.slane %v480, 1
      %vm787 = vcmp.lt.s32.totalorder %v482, 7
      %v788 = vsel %vm787, %v785, %v786
      %v789 = vsel %vm787, %v784, %v785
      %v790 = vsel %vm787, %v783, %v784
      %v791 = vsel %vm787, %v782, %v783
      %v792 = vsel %vm787, %v781, %v782
      %v793 = vsel %vm787, %v780, %v781
      %v794 = vsel %vm787, %v779, %v780
      %v795 = vsel %vm787, %v778, %v779
      %v796 = vsel %vm787, %v777, %v778
      %v797 = vsel %vm787, %v776, %v777
      %v798 = vsel %vm787, %v775, %v776
      %v799 = vsel %vm787, %v774, %v775
      %v800 = vsel %vm787, %v773, %v774
      %v801 = vsel %vm787, %v772, %v773
      %v802 = vsel %vm787, %v771, %v772
      %v803 = vsel %vm787, %v786, %v771
      %v804 = vsel %vm755, 0.0, %v802
      %v805 = vsel %vm756, 0.0, %v801
      %v806 = vsel %vm757, 0.0, %v800
      %v807 = vsel %vm758, 0.0, %v799
      %v808 = vsel %vm759, 0.0, %v798
      %v809 = vsel %vm760, 0.0, %v797
      %v810 = vsel %vm761, 0.0, %v796
      %v811 = vsel %vm762, 0.0, %v795
      %v812 = vsel %vm763, 0.0, %v794
      %v813 = vsel %vm764, 0.0, %v793
      %v814 = vsel %vm765, 0.0, %v792
      %v815 = vsel %vm766, 0.0, %v791
      %v816 = vsel %vm767, 0.0, %v790
      %v817 = vsel %vm768, 0.0, %v789
      %v818 = vsel %vm769, 0.0, %v788
      %v819 = vsel %vm770, 0.0, %v803
      %v820 = vpack.c.bf16 %v740, %v739
      %v821 = vpack.c.bf16 %v742, %v741
      %v822 = vpack.c.bf16 %v744, %v743
      %v823 = vpack.c.bf16 %v746, %v745
      %v824 = vpack.c.bf16 %v748, %v747
      %v825 = vpack.c.bf16 %v750, %v749
      %v826 = vpack.c.bf16 %v752, %v751
      %v827 = vpack.c.bf16 %v754, %v753
      %828 = vst [vmem:[#allocation2 + $0x18] sm:$0xff] %v820
      %829 = vst [vmem:[#allocation2 + $0x30] sm:$0xff] %v821
      %830 = vst [vmem:[#allocation2 + $0x48] sm:$0xff] %v822
      %831 = vst [vmem:[#allocation2 + $0x60] sm:$0xff] %v823
      %832 = vst [vmem:[#allocation2 + $0x78] sm:$0xff] %v824
      %833 = vst [vmem:[#allocation2 + $0x90] sm:$0xff] %v825
      %834 = vst [vmem:[#allocation2 + $0xa8] sm:$0xff] %v826
      %835 = vst [vmem:[#allocation2 + $0xc0] sm:$0xff] %v827
      %v836 = vpack.c.bf16 %v466, %v465
      %v837 = vpack.c.bf16 %v468, %v467
      %v838 = vpack.c.bf16 %v470, %v469
      %v839 = vpack.c.bf16 %v472, %v471
      %v840 = vpack.c.bf16 %v474, %v473
      %v841 = vpack.c.bf16 %v476, %v475
      %v842 = vpack.c.bf16 %v478, %v477
      %v843 = vpack.c.bf16 %v480, %v479
      %844 = vst [vmem:[#allocation2 + $0x20] sm:$0xff] %v836
      %845 = vst [vmem:[#allocation2 + $0x38] sm:$0xff] %v837
      %846 = vst [vmem:[#allocation2 + $0x50] sm:$0xff] %v838
      %847 = vst [vmem:[#allocation2 + $0x68] sm:$0xff] %v839
      %848 = vst [vmem:[#allocation2 + $0x80] sm:$0xff] %v840
      %849 = vst [vmem:[#allocation2 + $0x98] sm:$0xff] %v841
      %850 = vst [vmem:[#allocation2 + $0xb0] sm:$0xff] %v842
      %851 = vst [vmem:[#allocation2 + $0xc8] sm:$0xff] %v843
      %v852 = vpack.c.bf16 %v805, %v804
      %v853 = vpack.c.bf16 %v807, %v806
      %v854 = vpack.c.bf16 %v809, %v808
      %v855 = vpack.c.bf16 %v811, %v810
      %v856 = vpack.c.bf16 %v813, %v812
      %v857 = vpack.c.bf16 %v815, %v814
      %v858 = vpack.c.bf16 %v817, %v816
      %v859 = vpack.c.bf16 %v819, %v818
      %860 = vst [vmem:[#allocation2 + $0x28] sm:$0xff] %v852
      %861 = vst [vmem:[#allocation2 + $0x40] sm:$0xff] %v853
      %862 = vst [vmem:[#allocation2 + $0x58] sm:$0xff] %v854
      %863 = vst [vmem:[#allocation2 + $0x70] sm:$0xff] %v855
      %864 = vst [vmem:[#allocation2 + $0x88] sm:$0xff] %v856
      %865 = vst [vmem:[#allocation2 + $0xa0] sm:$0xff] %v857
      %866 = vst [vmem:[#allocation2 + $0xb8] sm:$0xff] %v858
      %867 = vst [vmem:[#allocation2 + $0xd0] sm:$0xff] %v859
      %p868 = scmp.eq.s32.totalorder %s24, 0
      // Predicated region
      $region45: #{doubleconv_forward.3} parent=43 // pred_check
        %p869 = pneg %p868
      $region46: #{doubleconv_forward.3} parent=43 // pred_check_branch
        %871 = sbr.rel (%p869) target = $region48
      $region47: #{doubleconv_forward.3} parent=43 // pred_region
        %872 = vst [vmem:[#allocation2] sm:$0xff] 0
        %873 = vst [vmem:[#allocation2 + $0x8] sm:$0xff] 0
        %874 = vst [vmem:[#allocation2 + $0x10] sm:$0xff] 0
      $region48: #{doubleconv_forward.3} parent=43 // pred_fallthru
        _
      %p875 = scmp.gt.s32.totalorder %s24, 0
      // Predicated region
      $region49: #{doubleconv_forward.3} parent=43 // pred_check
        %p876 = pneg %p875
      $region50: #{doubleconv_forward.3} parent=43 // pred_check_branch
        %878 = sbr.rel (%p876) target = $region52
      $region51: #{doubleconv_forward.3} parent=43 // pred_region
        %s879 = scalar_lea.vmem %s423, 112
        %v880 = vld [vmem:[%s879] sm:$0xff]
        %v881 = vld [vmem:[%s879 + $0x8] sm:$0xff]
        %v882 = vrot.slane %v880, 7
        %v883 = vrot.slane %v881, 7
        %v884 = vsel %vm722, %v882, %v883
        %v885 = vsel %vm722, %v883, %v882
        %v886 = vsel %vm690, 0.0, %v885
        %v887 = vsel %vm691, 0.0, %v884
        %v888 = vrot.slane %v880, 1
        %v889 = vrot.slane %v881, 1
        %v890 = vsel %vm787, %v888, %v889
        %v891 = vsel %vm787, %v889, %v888
        %v892 = vsel %vm755, 0.0, %v890
        %v893 = vsel %vm756, 0.0, %v891
        %v894 = vpack.c.bf16 %v887, %v886
        %895 = vst [vmem:[#allocation2] sm:$0xff] %v894
        %v896 = vpack.c.bf16 %v881, %v880
        %897 = vst [vmem:[#allocation2 + $0x8] sm:$0xff] %v896
        %v898 = vpack.c.bf16 %v893, %v892
        %899 = vst [vmem:[#allocation2 + $0x10] sm:$0xff] %v898
      $region52: #{doubleconv_forward.3} parent=43 // pred_fallthru
        _
      %p900 = scmp.eq.s32.totalorder %s24, 1
      // Predicated region
      $region53: #{doubleconv_forward.3} parent=43 // pred_check
        %p901 = pneg %p900
      $region54: #{doubleconv_forward.3} parent=43 // pred_check_branch
        %903 = sbr.rel (%p901) target = $region56
      $region55: #{doubleconv_forward.3} parent=43 // pred_region
        %904 = vst [vmem:[#allocation2 + $0xd8] sm:$0xff] 0
        %905 = vst [vmem:[#allocation2 + $0xe0] sm:$0xff] 0
        %906 = vst [vmem:[#allocation2 + $0xe8] sm:$0xff] 0
      $region56: #{doubleconv_forward.3} parent=43 // pred_fallthru
        _
      %p907 = scmp.lt.s32.totalorder %s24, 1
      // Predicated region
      $region57: #{doubleconv_forward.3} parent=43 // pred_check
        %p908 = pneg %p907
      $region58: #{doubleconv_forward.3} parent=43 // pred_check_branch
        %910 = sbr.rel (%p908) target = $region60
      $region59: #{doubleconv_forward.3} parent=43 // pred_region
        %v911 = vld [vmem:[%s440] sm:$0xff]
        %v912 = vld [vmem:[%s440 + $0x8] sm:$0xff]
        %v913 = vrot.slane %v911, 7
        %v914 = vrot.slane %v912, 7
        %v915 = vsel %vm722, %v913, %v914
        %v916 = vsel %vm722, %v914, %v913
        %v917 = vsel %vm690, 0.0, %v916
        %v918 = vsel %vm691, 0.0, %v915
        %v919 = vrot.slane %v911, 1
        %v920 = vrot.slane %v912, 1
        %v921 = vsel %vm787, %v919, %v920
        %v922 = vsel %vm787, %v920, %v919
        %v923 = vsel %vm755, 0.0, %v921
        %v924 = vsel %vm756, 0.0, %v922
        %v925 = vpack.c.bf16 %v918, %v917
        %926 = vst [vmem:[#allocation2 + $0xd8] sm:$0xff] %v925
        %v927 = vpack.c.bf16 %v912, %v911
        %928 = vst [vmem:[#allocation2 + $0xe0] sm:$0xff] %v927
        %v929 = vpack.c.bf16 %v924, %v923
        %930 = vst [vmem:[#allocation2 + $0xe8] sm:$0xff] %v929
      $region60: #{doubleconv_forward.3} parent=43 // pred_fallthru
        _
      %v931 = vld [vmem:[#allocation2] sm:$0xff]
      %v932 = vld [vmem:[#allocation2 + $0x8] sm:$0xff]
      %v933 = vld [vmem:[#allocation2 + $0x10] sm:$0xff]
      %v934 = vld [vmem:[#allocation2 + $0x18] sm:$0xff]
      %v935 = vld [vmem:[#allocation2 + $0x20] sm:$0xff]
      %v936 = vld [vmem:[#allocation2 + $0x28] sm:$0xff]
      %v937 = vld [vmem:[#allocation2 + $0x30] sm:$0xff]
      %v938 = vld [vmem:[#allocation2 + $0x38] sm:$0xff]
      %v939 = vld [vmem:[#allocation2 + $0x40] sm:$0xff]
      %v940 = vld [vmem:[#allocation2 + $0x48] sm:$0xff]
      %v941 = vld [vmem:[#allocation2 + $0x50] sm:$0xff]
      %v942 = vld [vmem:[#allocation2 + $0x58] sm:$0xff]
      %v943 = vld [vmem:[#allocation2 + $0x60] sm:$0xff]
      %v944 = vld [vmem:[#allocation2 + $0x68] sm:$0xff]
      %v945 = vld [vmem:[#allocation2 + $0x70] sm:$0xff]
      %v946 = vld [vmem:[#allocation2 + $0x78] sm:$0xff]
      %v947 = vld [vmem:[#allocation2 + $0x80] sm:$0xff]
      %v948 = vld [vmem:[#allocation2 + $0x88] sm:$0xff]
      %v949 = vld [vmem:[#allocation2 + $0x90] sm:$0xff]
      %v950 = vld [vmem:[#allocation2 + $0x98] sm:$0xff]
      %v951 = vld [vmem:[#allocation2 + $0xa0] sm:$0xff]
      %v952 = vld [vmem:[#allocation2 + $0xa8] sm:$0xff]
      %v953 = vld [vmem:[#allocation2 + $0xb0] sm:$0xff]
      %v954 = vld [vmem:[#allocation2 + $0xb8] sm:$0xff]
      %v955 = vld [vmem:[%s3] sm:$0xf]
      %v956 = vld [vmem:[%s3 + $0x4] sm:$0xf]
      %v957 = vld [vmem:[%s3 + $0x8] sm:$0xf]
      %v958 = vld [vmem:[%s3 + $0xc] sm:$0xf]
      %v959 = vld [vmem:[%s3 + $0x10] sm:$0xf]
      %v960 = vld [vmem:[%s3 + $0x14] sm:$0xf]
      %v961 = vld [vmem:[%s3 + $0x18] sm:$0xf]
      %v962 = vld [vmem:[%s3 + $0x1c] sm:$0xf]
      %v963 = vld [vmem:[%s3 + $0x20] sm:$0xf]
      %v964 = vld [vmem:[%s3 + $0x24] sm:$0xf]
      %v965 = vld [vmem:[%s3 + $0x28] sm:$0xf]
      %v966 = vld [vmem:[%s3 + $0x2c] sm:$0xf]
      %v967 = vld [vmem:[%s3 + $0x30] sm:$0xf]
      %v968 = vld [vmem:[%s3 + $0x34] sm:$0xf]
      %v969 = vld [vmem:[%s3 + $0x38] sm:$0xf]
      %v970 = vld [vmem:[%s3 + $0x3c] sm:$0xf]
      %v971 = vld [vmem:[%s3 + $0x40] sm:$0xf]
      %v972 = vld [vmem:[%s3 + $0x44] sm:$0xf]
      %v973 = vld [vmem:[%s3 + $0x48] sm:$0xf]
      %v974 = vld [vmem:[%s3 + $0x4c] sm:$0xf]
      %v975 = vld [vmem:[%s3 + $0x50] sm:$0xf]
      %v976 = vld [vmem:[%s3 + $0x54] sm:$0xf]
      %v977 = vld [vmem:[%s3 + $0x58] sm:$0xf]
      %v978 = vld [vmem:[%s3 + $0x5c] sm:$0xf]
      %v979 = vld [vmem:[%s3 + $0x60] sm:$0xf]
      %v980 = vld [vmem:[%s3 + $0x64] sm:$0xf]
      %v981 = vld [vmem:[%s3 + $0x68] sm:$0xf]
      %v982 = vld [vmem:[%s3 + $0x6c] sm:$0xf]
      %v983 = vld [vmem:[%s3 + $0x70] sm:$0xf]
      %v984 = vld [vmem:[%s3 + $0x74] sm:$0xf]
      %v985 = vld [vmem:[%s3 + $0x78] sm:$0xf]
      %v986 = vld [vmem:[%s3 + $0x7c] sm:$0xf]
      %v987 = vld [vmem:[%s3 + $0x80] sm:$0xf]
      %v988 = vld [vmem:[%s3 + $0x84] sm:$0xf]
      %v989 = vld [vmem:[%s3 + $0x88] sm:$0xf]
      %v990 = vld [vmem:[%s3 + $0x8c] sm:$0xf]
      %v991 = vld [vmem:[%s3 + $0x90] sm:$0xf]
      %v992 = vld [vmem:[%s3 + $0x94] sm:$0xf]
      %v993 = vld [vmem:[%s3 + $0x98] sm:$0xf]
      %v994 = vld [vmem:[%s3 + $0x9c] sm:$0xf]
      %v995 = vld [vmem:[%s3 + $0xa0] sm:$0xf]
      %v996 = vld [vmem:[%s3 + $0xa4] sm:$0xf]
      %v997 = vld [vmem:[%s3 + $0xa8] sm:$0xf]
      %v998 = vld [vmem:[%s3 + $0xac] sm:$0xf]
      %v999 = vld [vmem:[%s3 + $0xb0] sm:$0xf]
      %v1000 = vld [vmem:[%s3 + $0xb4] sm:$0xf]
      %v1001 = vld [vmem:[%s3 + $0xb8] sm:$0xf]
      %v1002 = vld [vmem:[%s3 + $0xbc] sm:$0xf]
      %v1051 = vunpack.c.l.b16 %v955
      %v1052 = vunpack.c.l.b16 %v956
      %v1053 = vunpack.c.l.b16 %v957
      %v1054 = vunpack.c.l.b16 %v958
      %v1055 = vunpack.c.l.b16 %v959
      %v1056 = vunpack.c.l.b16 %v960
      %v1057 = vunpack.c.l.b16 %v961
      %v1058 = vunpack.c.l.b16 %v962
      %v1059 = vunpack.c.l.b16 %v963
      %v1060 = vunpack.c.l.b16 %v964
      %v1061 = vunpack.c.l.b16 %v965
      %v1062 = vunpack.c.l.b16 %v966
      %v1063 = vunpack.c.l.b16 %v967
      %v1064 = vunpack.c.l.b16 %v968
      %v1065 = vunpack.c.l.b16 %v969
      %v1066 = vunpack.c.l.b16 %v970
      %v1067 = vunpack.c.l.b16 %v971
      %v1068 = vunpack.c.l.b16 %v972
      %v1069 = vunpack.c.l.b16 %v973
      %v1070 = vunpack.c.l.b16 %v974
      %v1071 = vunpack.c.l.b16 %v975
      %v1072 = vunpack.c.l.b16 %v976
      %v1073 = vunpack.c.l.b16 %v977
      %v1074 = vunpack.c.l.b16 %v978
      %v1075 = vunpack.c.l.b16 %v979
      %v1076 = vunpack.c.l.b16 %v980
      %v1077 = vunpack.c.l.b16 %v981
      %v1078 = vunpack.c.l.b16 %v982
      %v1079 = vunpack.c.l.b16 %v983
      %v1080 = vunpack.c.l.b16 %v984
      %v1081 = vunpack.c.l.b16 %v985
      %v1082 = vunpack.c.l.b16 %v986
      %v1083 = vunpack.c.l.b16 %v987
      %v1084 = vunpack.c.l.b16 %v988
      %v1085 = vunpack.c.l.b16 %v989
      %v1086 = vunpack.c.l.b16 %v990
      %v1087 = vunpack.c.l.b16 %v991
      %v1088 = vunpack.c.l.b16 %v992
      %v1089 = vunpack.c.l.b16 %v993
      %v1090 = vunpack.c.l.b16 %v994
      %v1091 = vunpack.c.l.b16 %v995
      %v1092 = vunpack.c.l.b16 %v996
      %v1093 = vunpack.c.l.b16 %v997
      %v1094 = vunpack.c.l.b16 %v998
      %v1095 = vunpack.c.l.b16 %v999
      %v1096 = vunpack.c.l.b16 %v1000
      %v1097 = vunpack.c.l.b16 %v1001
      %v1098 = vunpack.c.l.b16 %v1002
      %v1099 = vpack.c.b16 %v1052, %v1051
      %v1100 = vpack.c.b16 %v1054, %v1053
      %v1101 = vpack.c.b16 %v1056, %v1055
      %v1102 = vpack.c.b16 %v1058, %v1057
      %v1103 = vpack.c.b16 %v1060, %v1059
      %v1104 = vpack.c.b16 %v1062, %v1061
      %v1105 = vpack.c.b16 %v1064, %v1063
      %v1106 = vpack.c.b16 %v1066, %v1065
      %v1107 = vpack.c.b16 %v1068, %v1067
      %v1108 = vpack.c.b16 %v1070, %v1069
      %v1109 = vpack.c.b16 %v1072, %v1071
      %v1110 = vpack.c.b16 %v1074, %v1073
      %v1111 = vpack.c.b16 %v1076, %v1075
      %v1112 = vpack.c.b16 %v1078, %v1077
      %v1113 = vpack.c.b16 %v1080, %v1079
      %v1114 = vpack.c.b16 %v1082, %v1081
      %v1115 = vpack.c.b16 %v1084, %v1083
      %v1116 = vpack.c.b16 %v1086, %v1085
      %v1117 = vpack.c.b16 %v1088, %v1087
      %v1118 = vpack.c.b16 %v1090, %v1089
      %v1119 = vpack.c.b16 %v1092, %v1091
      %v1120 = vpack.c.b16 %v1094, %v1093
      %v1121 = vpack.c.b16 %v1096, %v1095
      %v1122 = vpack.c.b16 %v1098, %v1097
      %1147 = vmatprep.subr.bf16.mxu0 0
      %1148 = vmatpush1.bf16.msra.mxu0 %v1099
      %1149 = vmatprep.subr.bf16.mxu0 0
      %1150 = vmatpush1.bf16.msra.mxu0 %v1100
      %1151 = vmatprep.subr.bf16.mxu0 0
      %1152 = vmatpush1.bf16.msra.mxu0 %v1101
      %1153 = vmatprep.subr.bf16.mxu0 0
      %1154 = vmatpush1.bf16.msra.mxu0 %v1102
      %1155 = vmatprep.subr.bf16.mxu0 0
      %1156 = vmatpush1.bf16.msra.mxu0 %v1103
      %1157 = vmatprep.subr.bf16.mxu0 0
      %1158 = vmatpush1.bf16.msra.mxu0 %v1104
      %1159 = vmatprep.subr.bf16.mxu0 0
      %1160 = vmatpush1.bf16.msra.mxu0 %v1105
      %1161 = vmatprep.subr.bf16.mxu0 0
      %1162 = vmatpush1.bf16.msra.mxu0 %v1106
      %1163 = vmatprep.subr.bf16.mxu0 0
      %1164 = vmatpush1.bf16.msra.mxu0 %v1107
      %1165 = vmatprep.subr.bf16.mxu0 0
      %1166 = vmatpush1.bf16.msra.mxu0 %v1108
      %1167 = vmatprep.subr.bf16.mxu0 0
      %1168 = vmatpush1.bf16.msra.mxu0 %v1109
      %1169 = vmatprep.subr.bf16.mxu0 0
      %1170 = vmatpush1.bf16.msra.mxu0 %v1110
      %1171 = vmatprep.subr.bf16.mxu0 0
      %1172 = vmatpush1.bf16.msra.mxu0 %v1111
      %1173 = vmatprep.subr.bf16.mxu0 0
      %1174 = vmatpush1.bf16.msra.mxu0 %v1112
      %1175 = vmatprep.subr.bf16.mxu0 0
      %1176 = vmatpush1.bf16.msra.mxu0 %v1113
      %1177 = vmatprep.subr.bf16.mxu0 0
      %1178 = vmatpush1.bf16.msra.mxu0 %v1114
      %1179 = vmatprep.mubr.bf16.mxu0 %v932
      %1180 = vmatmul.mubr.bf16.gmra.mrb[0].mxu0 %v931
      %v1181 = vpop.f32.mrb[0].mxu0
      %v1182 = vadd.f32 0.0, %v1181
      %v1183 = vpop.f32.mrb[0].mxu0
      %v1184 = vpop.f32.mrb[0].mxu0
      %v1185 = vadd.f32 0.0, %v1184
      %v1186 = vpop.f32.mrb[0].mxu0
      %1187 = vmatprep.mubr.bf16.mxu0 %v935
      %1188 = vmatmul.mubr.bf16.gmra.mrb[0].mxu0 %v934
      %v1189 = vpop.f32.mrb[0].mxu0
      %v1190 = vadd.f32 0.0, %v1189
      %v1191 = vpop.f32.mrb[0].mxu0
      %v1192 = vpop.f32.mrb[0].mxu0
      %v1193 = vadd.f32 0.0, %v1192
      %v1194 = vpop.f32.mrb[0].mxu0
      %1195 = vmatprep.mubr.bf16.mxu0 %v938
      %1196 = vmatmul.mubr.bf16.gmra.mrb[0].mxu0 %v937
      %v1197 = vpop.f32.mrb[0].mxu0
      %v1198 = vadd.f32 0.0, %v1197
      %v1199 = vpop.f32.mrb[0].mxu0
      %v1200 = vpop.f32.mrb[0].mxu0
      %v1201 = vadd.f32 0.0, %v1200
      %v1202 = vpop.f32.mrb[0].mxu0
      %1203 = vmatprep.mubr.bf16.mxu0 %v941
      %1204 = vmatmul.mubr.bf16.gmra.mrb[0].mxu0 %v940
      %v1205 = vpop.f32.mrb[0].mxu0
      %v1206 = vadd.f32 0.0, %v1205
      %v1207 = vpop.f32.mrb[0].mxu0
      %v1208 = vpop.f32.mrb[0].mxu0
      %v1209 = vadd.f32 0.0, %v1208
      %v1210 = vpop.f32.mrb[0].mxu0
      %1211 = vmatprep.mubr.bf16.mxu0 %v944
      %1212 = vmatmul.mubr.bf16.gmra.mrb[0].mxu0 %v943
      %v1213 = vpop.f32.mrb[0].mxu0
      %v1214 = vadd.f32 0.0, %v1213
      %v1215 = vpop.f32.mrb[0].mxu0
      %v1216 = vpop.f32.mrb[0].mxu0
      %v1217 = vadd.f32 0.0, %v1216
      %v1218 = vpop.f32.mrb[0].mxu0
      %1219 = vmatprep.mubr.bf16.mxu0 %v947
      %1220 = vmatmul.mubr.bf16.gmra.mrb[0].mxu0 %v946
      %v1221 = vpop.f32.mrb[0].mxu0
      %v1222 = vadd.f32 0.0, %v1221
      %v1223 = vpop.f32.mrb[0].mxu0
      %v1224 = vpop.f32.mrb[0].mxu0
      %v1225 = vadd.f32 0.0, %v1224
      %v1226 = vpop.f32.mrb[0].mxu0
      %1227 = vmatprep.mubr.bf16.mxu0 %v950
      %1228 = vmatmul.mubr.bf16.gmra.mrb[0].mxu0 %v949
      %v1229 = vpop.f32.mrb[0].mxu0
      %v1230 = vadd.f32 0.0, %v1229
      %v1231 = vpop.f32.mrb[0].mxu0
      %v1232 = vpop.f32.mrb[0].mxu0
      %v1233 = vadd.f32 0.0, %v1232
      %v1234 = vpop.f32.mrb[0].mxu0
      %1235 = vmatprep.mubr.bf16.mxu0 %v953
      %1236 = vmatmul.mubr.bf16.gmra.mrb[0].mxu0 %v952
      %v1237 = vpop.f32.mrb[0].mxu0
      %v1238 = vadd.f32 0.0, %v1237
      %v1239 = vpop.f32.mrb[0].mxu0
      %v1240 = vpop.f32.mrb[0].mxu0
      %v1241 = vadd.f32 0.0, %v1240
      %v1242 = vpop.f32.mrb[0].mxu0
      %1243 = vdwg.mxu0
      %1244 = vmatprep.subr.bf16.mxu0 0
      %1245 = vmatpush1.bf16.msra.mxu0 %v1115
      %1246 = vmatprep.subr.bf16.mxu0 0
      %1247 = vmatpush1.bf16.msra.mxu0 %v1116
      %1248 = vmatprep.subr.bf16.mxu0 0
      %1249 = vmatpush1.bf16.msra.mxu0 %v1117
      %1250 = vmatprep.subr.bf16.mxu0 0
      %1251 = vmatpush1.bf16.msra.mxu0 %v1118
      %1252 = vmatprep.subr.bf16.mxu0 0
      %1253 = vmatpush1.bf16.msra.mxu0 %v1119
      %1254 = vmatprep.subr.bf16.mxu0 0
      %1255 = vmatpush1.bf16.msra.mxu0 %v1120
      %1256 = vmatprep.subr.bf16.mxu0 0
      %1257 = vmatpush1.bf16.msra.mxu0 %v1121
      %1258 = vmatprep.subr.bf16.mxu0 0
      %1259 = vmatpush1.bf16.msra.mxu0 %v1122
      %1260 = vmatprep.subr.bf16.mxu0 0
      %1261 = vmatpush1.bf16.msra.mxu0 0
      %1262 = vmatprep.subr.bf16.mxu0 0
      %1263 = vmatpush1.bf16.msra.mxu0 0
      %1264 = vmatprep.subr.bf16.mxu0 0
      %1265 = vmatpush1.bf16.msra.mxu0 0
      %1266 = vmatprep.subr.bf16.mxu0 0
      %1267 = vmatpush1.bf16.msra.mxu0 0
      %1268 = vmatprep.subr.bf16.mxu0 0
      %1269 = vmatpush1.bf16.msra.mxu0 0
      %1270 = vmatprep.subr.bf16.mxu0 0
      %1271 = vmatpush1.bf16.msra.mxu0 0
      %1272 = vmatprep.subr.bf16.mxu0 0
      %1273 = vmatpush1.bf16.msra.mxu0 0
      %1274 = vmatprep.subr.bf16.mxu0 0
      %1275 = vmatpush1.bf16.msra.mxu0 0
      %1276 = vmatprep.mubr.bf16.mxu0 0
      %1277 = vmatmul.mubr.bf16.gmra.mrb[0].mxu0 %v933
      %v1278 = vpop.f32.mrb[0].mxu0
      %v1279 = vadd.f32 %v1182, %v1278
      %v1280 = vpop.f32.mrb[0].mxu0
      %v1281 = vpop.f32.mrb[0].mxu0
      %v1282 = vadd.f32 %v1185, %v1281
      %v1283 = vpop.f32.mrb[0].mxu0
      %1284 = vmatprep.mubr.bf16.mxu0 0
      %1285 = vmatmul.mubr.bf16.gmra.mrb[0].mxu0 %v936
      %v1286 = vpop.f32.mrb[0].mxu0
      %v1287 = vadd.f32 %v1190, %v1286
      %v1288 = vpop.f32.mrb[0].mxu0
      %v1289 = vpop.f32.mrb[0].mxu0
      %v1290 = vadd.f32 %v1193, %v1289
      %v1291 = vpop.f32.mrb[0].mxu0
      %1292 = vmatprep.mubr.bf16.mxu0 0
      %1293 = vmatmul.mubr.bf16.gmra.mrb[0].mxu0 %v939
      %v1294 = vpop.f32.mrb[0].mxu0
      %v1295 = vadd.f32 %v1198, %v1294
      %v1296 = vpop.f32.mrb[0].mxu0
      %v1297 = vpop.f32.mrb[0].mxu0
      %v1298 = vadd.f32 %v1201, %v1297
      %v1299 = vpop.f32.mrb[0].mxu0
      %1300 = vmatprep.mubr.bf16.mxu0 0
      %1301 = vmatmul.mubr.bf16.gmra.mrb[0].mxu0 %v942
      %v1302 = vpop.f32.mrb[0].mxu0
      %v1303 = vadd.f32 %v1206, %v1302
      %v1304 = vpop.f32.mrb[0].mxu0
      %v1305 = vpop.f32.mrb[0].mxu0
      %v1306 = vadd.f32 %v1209, %v1305
      %v1307 = vpop.f32.mrb[0].mxu0
      %1308 = vmatprep.mubr.bf16.mxu0 0
      %1309 = vmatmul.mubr.bf16.gmra.mrb[0].mxu0 %v945
      %v1310 = vpop.f32.mrb[0].mxu0
      %v1311 = vadd.f32 %v1214, %v1310
      %v1312 = vpop.f32.mrb[0].mxu0
      %v1313 = vpop.f32.mrb[0].mxu0
      %v1314 = vadd.f32 %v1217, %v1313
      %v1315 = vpop.f32.mrb[0].mxu0
      %1316 = vmatprep.mubr.bf16.mxu0 0
      %1317 = vmatmul.mubr.bf16.gmra.mrb[0].mxu0 %v948
      %v1318 = vpop.f32.mrb[0].mxu0
      %v1319 = vadd.f32 %v1222, %v1318
      %v1320 = vpop.f32.mrb[0].mxu0
      %v1321 = vpop.f32.mrb[0].mxu0
      %v1322 = vadd.f32 %v1225, %v1321
      %v1323 = vpop.f32.mrb[0].mxu0
      %1324 = vmatprep.mubr.bf16.mxu0 0
      %1325 = vmatmul.mubr.bf16.gmra.mrb[0].mxu0 %v951
      %v1326 = vpop.f32.mrb[0].mxu0
      %v1327 = vadd.f32 %v1230, %v1326
      %v1328 = vpop.f32.mrb[0].mxu0
      %v1329 = vpop.f32.mrb[0].mxu0
      %v1330 = vadd.f32 %v1233, %v1329
      %v1331 = vpop.f32.mrb[0].mxu0
      %1332 = vmatprep.mubr.bf16.mxu0 0
      %1333 = vmatmul.mubr.bf16.gmra.mrb[0].mxu0 %v954
      %v1334 = vpop.f32.mrb[0].mxu0
      %v1335 = vadd.f32 %v1238, %v1334
      %v1336 = vpop.f32.mrb[0].mxu0
      %v1337 = vpop.f32.mrb[0].mxu0
      %v1338 = vadd.f32 %v1241, %v1337
      %v1339 = vpop.f32.mrb[0].mxu0
      %1340 = vdwg.mxu0
      %1341 = vst [vmem:[#allocation3] sm:$0xff] %v1279
      %1342 = vst [vmem:[#allocation3 + $0x8] sm:$0xff] %v1282
      %1343 = vst [vmem:[#allocation3 + $0x10] sm:$0xff] %v1287
      %1344 = vst [vmem:[#allocation3 + $0x18] sm:$0xff] %v1290
      %1345 = vst [vmem:[#allocation3 + $0x20] sm:$0xff] %v1295
      %1346 = vst [vmem:[#allocation3 + $0x28] sm:$0xff] %v1298
      %1347 = vst [vmem:[#allocation3 + $0x30] sm:$0xff] %v1303
      %1348 = vst [vmem:[#allocation3 + $0x38] sm:$0xff] %v1306
      %1349 = vst [vmem:[#allocation3 + $0x40] sm:$0xff] %v1311
      %1350 = vst [vmem:[#allocation3 + $0x48] sm:$0xff] %v1314
      %1351 = vst [vmem:[#allocation3 + $0x50] sm:$0xff] %v1319
      %1352 = vst [vmem:[#allocation3 + $0x58] sm:$0xff] %v1322
      %1353 = vst [vmem:[#allocation3 + $0x60] sm:$0xff] %v1327
      %1354 = vst [vmem:[#allocation3 + $0x68] sm:$0xff] %v1330
      %1355 = vst [vmem:[#allocation3 + $0x70] sm:$0xff] %v1335
      %1356 = vst [vmem:[#allocation3 + $0x78] sm:$0xff] %v1338
      %v1357 = vld [vmem:[#allocation2 + $0x18] sm:$0xff]
      %v1358 = vld [vmem:[#allocation2 + $0x20] sm:$0xff]
      %v1359 = vld [vmem:[#allocation2 + $0x28] sm:$0xff]
      %v1360 = vld [vmem:[#allocation2 + $0x30] sm:$0xff]
      %v1361 = vld [vmem:[#allocation2 + $0x38] sm:$0xff]
      %v1362 = vld [vmem:[#allocation2 + $0x40] sm:$0xff]
      %v1363 = vld [vmem:[#allocation2 + $0x48] sm:$0xff]
      %v1364 = vld [vmem:[#allocation2 + $0x50] sm:$0xff]
      %v1365 = vld [vmem:[#allocation2 + $0x58] sm:$0xff]
      %v1366 = vld [vmem:[#allocation2 + $0x60] sm:$0xff]
      %v1367 = vld [vmem:[#allocation2 + $0x68] sm:$0xff]
      %v1368 = vld [vmem:[#allocation2 + $0x70] sm:$0xff]
      %v1369 = vld [vmem:[#allocation2 + $0x78] sm:$0xff]
      %v1370 = vld [vmem:[#allocation2 + $0x80] sm:$0xff]
      %v1371 = vld [vmem:[#allocation2 + $0x88] sm:$0xff]
      %v1372 = vld [vmem:[#allocation2 + $0x90] sm:$0xff]
      %v1373 = vld [vmem:[#allocation2 + $0x98] sm:$0xff]
      %v1374 = vld [vmem:[#allocation2 + $0xa0] sm:$0xff]
      %v1375 = vld [vmem:[#allocation2 + $0xa8] sm:$0xff]
      %v1376 = vld [vmem:[#allocation2 + $0xb0] sm:$0xff]
      %v1377 = vld [vmem:[#allocation2 + $0xb8] sm:$0xff]
      %v1378 = vld [vmem:[#allocation2 + $0xc0] sm:$0xff]
      %v1379 = vld [vmem:[#allocation2 + $0xc8] sm:$0xff]
      %v1380 = vld [vmem:[#allocation2 + $0xd0] sm:$0xff]
      %s1381 = scalar_lea.vmem %s3, 192
      %v1382 = vld [vmem:[%s1381] sm:$0xf]
      %v1383 = vld [vmem:[%s1381 + $0x4] sm:$0xf]
      %v1384 = vld [vmem:[%s1381 + $0x8] sm:$0xf]
      %v1385 = vld [vmem:[%s1381 + $0xc] sm:$0xf]
      %v1386 = vld [vmem:[%s1381 + $0x10] sm:$0xf]
      %v1387 = vld [vmem:[%s1381 + $0x14] sm:$0xf]
      %v1388 = vld [vmem:[%s1381 + $0x18] sm:$0xf]
      %v1389 = vld [vmem:[%s1381 + $0x1c] sm:$0xf]
      %v1390 = vld [vmem:[%s1381 + $0x20] sm:$0xf]
      %v1391 = vld [vmem:[%s1381 + $0x24] sm:$0xf]
      %v1392 = vld [vmem:[%s1381 + $0x28] sm:$0xf]
      %v1393 = vld [vmem:[%s1381 + $0x2c] sm:$0xf]
      %v1394 = vld [vmem:[%s1381 + $0x30] sm:$0xf]
      %v1395 = vld [vmem:[%s1381 + $0x34] sm:$0xf]
      %v1396 = vld [vmem:[%s1381 + $0x38] sm:$0xf]
      %v1397 = vld [vmem:[%s1381 + $0x3c] sm:$0xf]
      %v1398 = vld [vmem:[%s1381 + $0x40] sm:$0xf]
      %v1399 = vld [vmem:[%s1381 + $0x44] sm:$0xf]
      %v1400 = vld [vmem:[%s1381 + $0x48] sm:$0xf]
      %v1401 = vld [vmem:[%s1381 + $0x4c] sm:$0xf]
      %v1402 = vld [vmem:[%s1381 + $0x50] sm:$0xf]
      %v1403 = vld [vmem:[%s1381 + $0x54] sm:$0xf]
      %v1404 = vld [vmem:[%s1381 + $0x58] sm:$0xf]
      %v1405 = vld [vmem:[%s1381 + $0x5c] sm:$0xf]
      %v1406 = vld [vmem:[%s1381 + $0x60] sm:$0xf]
      %v1407 = vld [vmem:[%s1381 + $0x64] sm:$0xf]
      %v1408 = vld [vmem:[%s1381 + $0x68] sm:$0xf]
      %v1409 = vld [vmem:[%s1381 + $0x6c] sm:$0xf]
      %v1410 = vld [vmem:[%s1381 + $0x70] sm:$0xf]
      %v1411 = vld [vmem:[%s1381 + $0x74] sm:$0xf]
      %v1412 = vld [vmem:[%s1381 + $0x78] sm:$0xf]
      %v1413 = vld [vmem:[%s1381 + $0x7c] sm:$0xf]
      %v1414 = vld [vmem:[%s1381 + $0x80] sm:$0xf]
      %v1415 = vld [vmem:[%s1381 + $0x84] sm:$0xf]
      %v1416 = vld [vmem:[%s1381 + $0x88] sm:$0xf]
      %v1417 = vld [vmem:[%s1381 + $0x8c] sm:$0xf]
      %v1418 = vld [vmem:[%s1381 + $0x90] sm:$0xf]
      %v1419 = vld [vmem:[%s1381 + $0x94] sm:$0xf]
      %v1420 = vld [vmem:[%s1381 + $0x98] sm:$0xf]
      %v1421 = vld [vmem:[%s1381 + $0x9c] sm:$0xf]
      %v1422 = vld [vmem:[%s1381 + $0xa0] sm:$0xf]
      %v1423 = vld [vmem:[%s1381 + $0xa4] sm:$0xf]
      %v1424 = vld [vmem:[%s1381 + $0xa8] sm:$0xf]
      %v1425 = vld [vmem:[%s1381 + $0xac] sm:$0xf]
      %v1426 = vld [vmem:[%s1381 + $0xb0] sm:$0xf]
      %v1427 = vld [vmem:[%s1381 + $0xb4] sm:$0xf]
      %v1428 = vld [vmem:[%s1381 + $0xb8] sm:$0xf]
      %v1429 = vld [vmem:[%s1381 + $0xbc] sm:$0xf]
      %v1478 = vunpack.c.l.b16 %v1382
      %v1479 = vunpack.c.l.b16 %v1383
      %v1480 = vunpack.c.l.b16 %v1384
      %v1481 = vunpack.c.l.b16 %v1385
      %v1482 = vunpack.c.l.b16 %v1386
      %v1483 = vunpack.c.l.b16 %v1387
      %v1484 = vunpack.c.l.b16 %v1388
      %v1485 = vunpack.c.l.b16 %v1389
      %v1486 = vunpack.c.l.b16 %v1390
      %v1487 = vunpack.c.l.b16 %v1391
      %v1488 = vunpack.c.l.b16 %v1392
      %v1489 = vunpack.c.l.b16 %v1393
      %v1490 = vunpack.c.l.b16 %v1394
      %v1491 = vunpack.c.l.b16 %v1395
      %v1492 = vunpack.c.l.b16 %v1396
      %v1493 = vunpack.c.l.b16 %v1397
      %v1494 = vunpack.c.l.b16 %v1398
      %v1495 = vunpack.c.l.b16 %v1399
      %v1496 = vunpack.c.l.b16 %v1400
      %v1497 = vunpack.c.l.b16 %v1401
      %v1498 = vunpack.c.l.b16 %v1402
      %v1499 = vunpack.c.l.b16 %v1403
      %v1500 = vunpack.c.l.b16 %v1404
      %v1501 = vunpack.c.l.b16 %v1405
      %v1502 = vunpack.c.l.b16 %v1406
      %v1503 = vunpack.c.l.b16 %v1407
      %v1504 = vunpack.c.l.b16 %v1408
      %v1505 = vunpack.c.l.b16 %v1409
      %v1506 = vunpack.c.l.b16 %v1410
      %v1507 = vunpack.c.l.b16 %v1411
      %v1508 = vunpack.c.l.b16 %v1412
      %v1509 = vunpack.c.l.b16 %v1413
      %v1510 = vunpack.c.l.b16 %v1414
      %v1511 = vunpack.c.l.b16 %v1415
      %v1512 = vunpack.c.l.b16 %v1416
      %v1513 = vunpack.c.l.b16 %v1417
      %v1514 = vunpack.c.l.b16 %v1418
      %v1515 = vunpack.c.l.b16 %v1419
      %v1516 = vunpack.c.l.b16 %v1420
      %v1517 = vunpack.c.l.b16 %v1421
      %v1518 = vunpack.c.l.b16 %v1422
      %v1519 = vunpack.c.l.b16 %v1423
      %v1520 = vunpack.c.l.b16 %v1424
      %v1521 = vunpack.c.l.b16 %v1425
      %v1522 = vunpack.c.l.b16 %v1426
      %v1523 = vunpack.c.l.b16 %v1427
      %v1524 = vunpack.c.l.b16 %v1428
      %v1525 = vunpack.c.l.b16 %v1429
      %v1526 = vpack.c.b16 %v1479, %v1478
      %v1527 = vpack.c.b16 %v1481, %v1480
      %v1528 = vpack.c.b16 %v1483, %v1482
      %v1529 = vpack.c.b16 %v1485, %v1484
      %v1530 = vpack.c.b16 %v1487, %v1486
      %v1531 = vpack.c.b16 %v1489, %v1488
      %v1532 = vpack.c.b16 %v1491, %v1490
      %v1533 = vpack.c.b16 %v1493, %v1492
      %v1534 = vpack.c.b16 %v1495, %v1494
      %v1535 = vpack.c.b16 %v1497, %v1496
      %v1536 = vpack.c.b16 %v1499, %v1498
      %v1537 = vpack.c.b16 %v1501, %v1500
      %v1538 = vpack.c.b16 %v1503, %v1502
      %v1539 = vpack.c.b16 %v1505, %v1504
      %v1540 = vpack.c.b16 %v1507, %v1506
      %v1541 = vpack.c.b16 %v1509, %v1508
      %v1542 = vpack.c.b16 %v1511, %v1510
      %v1543 = vpack.c.b16 %v1513, %v1512
      %v1544 = vpack.c.b16 %v1515, %v1514
      %v1545 = vpack.c.b16 %v1517, %v1516
      %v1546 = vpack.c.b16 %v1519, %v1518
      %v1547 = vpack.c.b16 %v1521, %v1520
      %v1548 = vpack.c.b16 %v1523, %v1522
      %v1549 = vpack.c.b16 %v1525, %v1524
      %1574 = vmatprep.subr.bf16.mxu0 0
      %1575 = vmatpush1.bf16.msra.mxu0 %v1526
      %1576 = vmatprep.subr.bf16.mxu0 0
      %1577 = vmatpush1.bf16.msra.mxu0 %v1527
      %1578 = vmatprep.subr.bf16.mxu0 0
      %1579 = vmatpush1.bf16.msra.mxu0 %v1528
      %1580 = vmatprep.subr.bf16.mxu0 0
      %1581 = vmatpush1.bf16.msra.mxu0 %v1529
      %1582 = vmatprep.subr.bf16.mxu0 0
      %1583 = vmatpush1.bf16.msra.mxu0 %v1530
      %1584 = vmatprep.subr.bf16.mxu0 0
      %1585 = vmatpush1.bf16.msra.mxu0 %v1531
      %1586 = vmatprep.subr.bf16.mxu0 0
      %1587 = vmatpush1.bf16.msra.mxu0 %v1532
      %1588 = vmatprep.subr.bf16.mxu0 0
      %1589 = vmatpush1.bf16.msra.mxu0 %v1533
      %1590 = vmatprep.subr.bf16.mxu0 0
      %1591 = vmatpush1.bf16.msra.mxu0 %v1534
      %1592 = vmatprep.subr.bf16.mxu0 0
      %1593 = vmatpush1.bf16.msra.mxu0 %v1535
      %1594 = vmatprep.subr.bf16.mxu0 0
      %1595 = vmatpush1.bf16.msra.mxu0 %v1536
      %1596 = vmatprep.subr.bf16.mxu0 0
      %1597 = vmatpush1.bf16.msra.mxu0 %v1537
      %1598 = vmatprep.subr.bf16.mxu0 0
      %1599 = vmatpush1.bf16.msra.mxu0 %v1538
      %1600 = vmatprep.subr.bf16.mxu0 0
      %1601 = vmatpush1.bf16.msra.mxu0 %v1539
      %1602 = vmatprep.subr.bf16.mxu0 0
      %1603 = vmatpush1.bf16.msra.mxu0 %v1540
      %1604 = vmatprep.subr.bf16.mxu0 0
      %1605 = vmatpush1.bf16.msra.mxu0 %v1541
      %1606 = vmatprep.mubr.bf16.mxu0 %v1358
      %1607 = vmatmul.mubr.bf16.gmra.mrb[0].mxu0 %v1357
      %v1608 = vpop.f32.mrb[0].mxu0
      %v1609 = vadd.f32 0.0, %v1608
      %v1610 = vpop.f32.mrb[0].mxu0
      %v1611 = vpop.f32.mrb[0].mxu0
      %v1612 = vadd.f32 0.0, %v1611
      %v1613 = vpop.f32.mrb[0].mxu0
      %1614 = vmatprep.mubr.bf16.mxu0 %v1361
      %1615 = vmatmul.mubr.bf16.gmra.mrb[0].mxu0 %v1360
      %v1616 = vpop.f32.mrb[0].mxu0
      %v1617 = vadd.f32 0.0, %v1616
      %v1618 = vpop.f32.mrb[0].mxu0
      %v1619 = vpop.f32.mrb[0].mxu0
      %v1620 = vadd.f32 0.0, %v1619
      %v1621 = vpop.f32.mrb[0].mxu0
      %1622 = vmatprep.mubr.bf16.mxu0 %v1364
      %1623 = vmatmul.mubr.bf16.gmra.mrb[0].mxu0 %v1363
      %v1624 = vpop.f32.mrb[0].mxu0
      %v1625 = vadd.f32 0.0, %v1624
      %v1626 = vpop.f32.mrb[0].mxu0
      %v1627 = vpop.f32.mrb[0].mxu0
      %v1628 = vadd.f32 0.0, %v1627
      %v1629 = vpop.f32.mrb[0].mxu0
      %1630 = vmatprep.mubr.bf16.mxu0 %v1367
      %1631 = vmatmul.mubr.bf16.gmra.mrb[0].mxu0 %v1366
      %v1632 = vpop.f32.mrb[0].mxu0
      %v1633 = vadd.f32 0.0, %v1632
      %v1634 = vpop.f32.mrb[0].mxu0
      %v1635 = vpop.f32.mrb[0].mxu0
      %v1636 = vadd.f32 0.0, %v1635
      %v1637 = vpop.f32.mrb[0].mxu0
      %1638 = vmatprep.mubr.bf16.mxu0 %v1370
      %1639 = vmatmul.mubr.bf16.gmra.mrb[0].mxu0 %v1369
      %v1640 = vpop.f32.mrb[0].mxu0
      %v1641 = vadd.f32 0.0, %v1640
      %v1642 = vpop.f32.mrb[0].mxu0
      %v1643 = vpop.f32.mrb[0].mxu0
      %v1644 = vadd.f32 0.0, %v1643
      %v1645 = vpop.f32.mrb[0].mxu0
      %1646 = vmatprep.mubr.bf16.mxu0 %v1373
      %1647 = vmatmul.mubr.bf16.gmra.mrb[0].mxu0 %v1372
      %v1648 = vpop.f32.mrb[0].mxu0
      %v1649 = vadd.f32 0.0, %v1648
      %v1650 = vpop.f32.mrb[0].mxu0
      %v1651 = vpop.f32.mrb[0].mxu0
      %v1652 = vadd.f32 0.0, %v1651
      %v1653 = vpop.f32.mrb[0].mxu0
      %1654 = vmatprep.mubr.bf16.mxu0 %v1376
      %1655 = vmatmul.mubr.bf16.gmra.mrb[0].mxu0 %v1375
      %v1656 = vpop.f32.mrb[0].mxu0
      %v1657 = vadd.f32 0.0, %v1656
      %v1658 = vpop.f32.mrb[0].mxu0
      %v1659 = vpop.f32.mrb[0].mxu0
      %v1660 = vadd.f32 0.0, %v1659
      %v1661 = vpop.f32.mrb[0].mxu0
      %1662 = vmatprep.mubr.bf16.mxu0 %v1379
      %1663 = vmatmul.mubr.bf16.gmra.mrb[0].mxu0 %v1378
      %v1664 = vpop.f32.mrb[0].mxu0
      %v1665 = vadd.f32 0.0, %v1664
      %v1666 = vpop.f32.mrb[0].mxu0
      %v1667 = vpop.f32.mrb[0].mxu0
      %v1668 = vadd.f32 0.0, %v1667
      %v1669 = vpop.f32.mrb[0].mxu0
      %1670 = vdwg.mxu0
      %1671 = vmatprep.subr.bf16.mxu0 0
      %1672 = vmatpush1.bf16.msra.mxu0 %v1542
      %1673 = vmatprep.subr.bf16.mxu0 0
      %1674 = vmatpush1.bf16.msra.mxu0 %v1543
      %1675 = vmatprep.subr.bf16.mxu0 0
      %1676 = vmatpush1.bf16.msra.mxu0 %v1544
      %1677 = vmatprep.subr.bf16.mxu0 0
      %1678 = vmatpush1.bf16.msra.mxu0 %v1545
      %1679 = vmatprep.subr.bf16.mxu0 0
      %1680 = vmatpush1.bf16.msra.mxu0 %v1546
      %1681 = vmatprep.subr.bf16.mxu0 0
      %1682 = vmatpush1.bf16.msra.mxu0 %v1547
      %1683 = vmatprep.subr.bf16.mxu0 0
      %1684 = vmatpush1.bf16.msra.mxu0 %v1548
      %1685 = vmatprep.subr.bf16.mxu0 0
      %1686 = vmatpush1.bf16.msra.mxu0 %v1549
      %1687 = vmatprep.subr.bf16.mxu0 0
      %1688 = vmatpush1.bf16.msra.mxu0 0
      %1689 = vmatprep.subr.bf16.mxu0 0
      %1690 = vmatpush1.bf16.msra.mxu0 0
      %1691 = vmatprep.subr.bf16.mxu0 0
      %1692 = vmatpush1.bf16.msra.mxu0 0
      %1693 = vmatprep.subr.bf16.mxu0 0
      %1694 = vmatpush1.bf16.msra.mxu0 0
      %1695 = vmatprep.subr.bf16.mxu0 0
      %1696 = vmatpush1.bf16.msra.mxu0 0
      %1697 = vmatprep.subr.bf16.mxu0 0
      %1698 = vmatpush1.bf16.msra.mxu0 0
      %1699 = vmatprep.subr.bf16.mxu0 0
      %1700 = vmatpush1.bf16.msra.mxu0 0
      %1701 = vmatprep.subr.bf16.mxu0 0
      %1702 = vmatpush1.bf16.msra.mxu0 0
      %1703 = vmatprep.mubr.bf16.mxu0 0
      %1704 = vmatmul.mubr.bf16.gmra.mrb[0].mxu0 %v1359
      %v1705 = vpop.f32.mrb[0].mxu0
      %v1706 = vadd.f32 %v1609, %v1705
      %v1707 = vpop.f32.mrb[0].mxu0
      %v1708 = vpop.f32.mrb[0].mxu0
      %v1709 = vadd.f32 %v1612, %v1708
      %v1710 = vpop.f32.mrb[0].mxu0
      %1711 = vmatprep.mubr.bf16.mxu0 0
      %1712 = vmatmul.mubr.bf16.gmra.mrb[0].mxu0 %v1362
      %v1713 = vpop.f32.mrb[0].mxu0
      %v1714 = vadd.f32 %v1617, %v1713
      %v1715 = vpop.f32.mrb[0].mxu0
      %v1716 = vpop.f32.mrb[0].mxu0
      %v1717 = vadd.f32 %v1620, %v1716
      %v1718 = vpop.f32.mrb[0].mxu0
      %1719 = vmatprep.mubr.bf16.mxu0 0
      %1720 = vmatmul.mubr.bf16.gmra.mrb[0].mxu0 %v1365
      %v1721 = vpop.f32.mrb[0].mxu0
      %v1722 = vadd.f32 %v1625, %v1721
      %v1723 = vpop.f32.mrb[0].mxu0
      %v1724 = vpop.f32.mrb[0].mxu0
      %v1725 = vadd.f32 %v1628, %v1724
      %v1726 = vpop.f32.mrb[0].mxu0
      %1727 = vmatprep.mubr.bf16.mxu0 0
      %1728 = vmatmul.mubr.bf16.gmra.mrb[0].mxu0 %v1368
      %v1729 = vpop.f32.mrb[0].mxu0
      %v1730 = vadd.f32 %v1633, %v1729
      %v1731 = vpop.f32.mrb[0].mxu0
      %v1732 = vpop.f32.mrb[0].mxu0
      %v1733 = vadd.f32 %v1636, %v1732
      %v1734 = vpop.f32.mrb[0].mxu0
      %1735 = vmatprep.mubr.bf16.mxu0 0
      %1736 = vmatmul.mubr.bf16.gmra.mrb[0].mxu0 %v1371
      %v1737 = vpop.f32.mrb[0].mxu0
      %v1738 = vadd.f32 %v1641, %v1737
      %v1739 = vpop.f32.mrb[0].mxu0
      %v1740 = vpop.f32.mrb[0].mxu0
      %v1741 = vadd.f32 %v1644, %v1740
      %v1742 = vpop.f32.mrb[0].mxu0
      %1743 = vmatprep.mubr.bf16.mxu0 0
      %1744 = vmatmul.mubr.bf16.gmra.mrb[0].mxu0 %v1374
      %v1745 = vpop.f32.mrb[0].mxu0
      %v1746 = vadd.f32 %v1649, %v1745
      %v1747 = vpop.f32.mrb[0].mxu0
      %v1748 = vpop.f32.mrb[0].mxu0
      %v1749 = vadd.f32 %v1652, %v1748
      %v1750 = vpop.f32.mrb[0].mxu0
      %1751 = vmatprep.mubr.bf16.mxu0 0
      %1752 = vmatmul.mubr.bf16.gmra.mrb[0].mxu0 %v1377
      %v1753 = vpop.f32.mrb[0].mxu0
      %v1754 = vadd.f32 %v1657, %v1753
      %v1755 = vpop.f32.mrb[0].mxu0
      %v1756 = vpop.f32.mrb[0].mxu0
      %v1757 = vadd.f32 %v1660, %v1756
      %v1758 = vpop.f32.mrb[0].mxu0
      %1759 = vmatprep.mubr.bf16.mxu0 0
      %1760 = vmatmul.mubr.bf16.gmra.mrb[0].mxu0 %v1380
      %v1761 = vpop.f32.mrb[0].mxu0
      %v1762 = vadd.f32 %v1665, %v1761
      %v1763 = vpop.f32.mrb[0].mxu0
      %v1764 = vpop.f32.mrb[0].mxu0
      %v1765 = vadd.f32 %v1668, %v1764
      %v1766 = vpop.f32.mrb[0].mxu0
      %1767 = vdwg.mxu0
      %v1768 = vld [vmem:[#allocation3] sm:$0xff]
      %v1769 = vld [vmem:[#allocation3 + $0x8] sm:$0xff]
      %v1770 = vld [vmem:[#allocation3 + $0x10] sm:$0xff]
      %v1771 = vld [vmem:[#allocation3 + $0x18] sm:$0xff]
      %v1772 = vld [vmem:[#allocation3 + $0x20] sm:$0xff]
      %v1773 = vld [vmem:[#allocation3 + $0x28] sm:$0xff]
      %v1774 = vld [vmem:[#allocation3 + $0x30] sm:$0xff]
      %v1775 = vld [vmem:[#allocation3 + $0x38] sm:$0xff]
      %v1776 = vld [vmem:[#allocation3 + $0x40] sm:$0xff]
      %v1777 = vld [vmem:[#allocation3 + $0x48] sm:$0xff]
      %v1778 = vld [vmem:[#allocation3 + $0x50] sm:$0xff]
      %v1779 = vld [vmem:[#allocation3 + $0x58] sm:$0xff]
      %v1780 = vld [vmem:[#allocation3 + $0x60] sm:$0xff]
      %v1781 = vld [vmem:[#allocation3 + $0x68] sm:$0xff]
      %v1782 = vld [vmem:[#allocation3 + $0x70] sm:$0xff]
      %v1783 = vld [vmem:[#allocation3 + $0x78] sm:$0xff]
      %v1784 = vadd.f32 %v1768, %v1706
      %v1785 = vadd.f32 %v1769, %v1709
      %v1786 = vadd.f32 %v1770, %v1714
      %v1787 = vadd.f32 %v1771, %v1717
      %v1788 = vadd.f32 %v1772, %v1722
      %v1789 = vadd.f32 %v1773, %v1725
      %v1790 = vadd.f32 %v1774, %v1730
      %v1791 = vadd.f32 %v1775, %v1733
      %v1792 = vadd.f32 %v1776, %v1738
      %v1793 = vadd.f32 %v1777, %v1741
      %v1794 = vadd.f32 %v1778, %v1746
      %v1795 = vadd.f32 %v1779, %v1749
      %v1796 = vadd.f32 %v1780, %v1754
      %v1797 = vadd.f32 %v1781, %v1757
      %v1798 = vadd.f32 %v1782, %v1762
      %v1799 = vadd.f32 %v1783, %v1765
      %1800 = vst [vmem:[#allocation3] sm:$0xff] %v1784
      %1801 = vst [vmem:[#allocation3 + $0x8] sm:$0xff] %v1785
      %1802 = vst [vmem:[#allocation3 + $0x10] sm:$0xff] %v1786
      %1803 = vst [vmem:[#allocation3 + $0x18] sm:$0xff] %v1787
      %1804 = vst [vmem:[#allocation3 + $0x20] sm:$0xff] %v1788
      %1805 = vst [vmem:[#allocation3 + $0x28] sm:$0xff] %v1789
      %1806 = vst [vmem:[#allocation3 + $0x30] sm:$0xff] %v1790
      %1807 = vst [vmem:[#allocation3 + $0x38] sm:$0xff] %v1791
      %1808 = vst [vmem:[#allocation3 + $0x40] sm:$0xff] %v1792
      %1809 = vst [vmem:[#allocation3 + $0x48] sm:$0xff] %v1793
      %1810 = vst [vmem:[#allocation3 + $0x50] sm:$0xff] %v1794
      %1811 = vst [vmem:[#allocation3 + $0x58] sm:$0xff] %v1795
      %1812 = vst [vmem:[#allocation3 + $0x60] sm:$0xff] %v1796
      %1813 = vst [vmem:[#allocation3 + $0x68] sm:$0xff] %v1797
      %1814 = vst [vmem:[#allocation3 + $0x70] sm:$0xff] %v1798
      %1815 = vst [vmem:[#allocation3 + $0x78] sm:$0xff] %v1799
      %v1816 = vld [vmem:[#allocation2 + $0x30] sm:$0xff]
      %v1817 = vld [vmem:[#allocation2 + $0x38] sm:$0xff]
      %v1818 = vld [vmem:[#allocation2 + $0x40] sm:$0xff]
      %v1819 = vld [vmem:[#allocation2 + $0x48] sm:$0xff]
      %v1820 = vld [vmem:[#allocation2 + $0x50] sm:$0xff]
      %v1821 = vld [vmem:[#allocation2 + $0x58] sm:$0xff]
      %v1822 = vld [vmem:[#allocation2 + $0x60] sm:$0xff]
      %v1823 = vld [vmem:[#allocation2 + $0x68] sm:$0xff]
      %v1824 = vld [vmem:[#allocation2 + $0x70] sm:$0xff]
      %v1825 = vld [vmem:[#allocation2 + $0x78] sm:$0xff]
      %v1826 = vld [vmem:[#allocation2 + $0x80] sm:$0xff]
      %v1827 = vld [vmem:[#allocation2 + $0x88] sm:$0xff]
      %v1828 = vld [vmem:[#allocation2 + $0x90] sm:$0xff]
      %v1829 = vld [vmem:[#allocation2 + $0x98] sm:$0xff]
      %v1830 = vld [vmem:[#allocation2 + $0xa0] sm:$0xff]
      %v1831 = vld [vmem:[#allocation2 + $0xa8] sm:$0xff]
      %v1832 = vld [vmem:[#allocation2 + $0xb0] sm:$0xff]
      %v1833 = vld [vmem:[#allocation2 + $0xb8] sm:$0xff]
      %v1834 = vld [vmem:[#allocation2 + $0xc0] sm:$0xff]
      %v1835 = vld [vmem:[#allocation2 + $0xc8] sm:$0xff]
      %v1836 = vld [vmem:[#allocation2 + $0xd0] sm:$0xff]
      %v1837 = vld [vmem:[#allocation2 + $0xd8] sm:$0xff]
      %v1838 = vld [vmem:[#allocation2 + $0xe0] sm:$0xff]
      %v1839 = vld [vmem:[#allocation2 + $0xe8] sm:$0xff]
      %s1840 = scalar_lea.vmem %s3, 384
      %v1841 = vld [vmem:[%s1840] sm:$0xf]
      %v1842 = vld [vmem:[%s1840 + $0x4] sm:$0xf]
      %v1843 = vld [vmem:[%s1840 + $0x8] sm:$0xf]
      %v1844 = vld [vmem:[%s1840 + $0xc] sm:$0xf]
      %v1845 = vld [vmem:[%s1840 + $0x10] sm:$0xf]
      %v1846 = vld [vmem:[%s1840 + $0x14] sm:$0xf]
      %v1847 = vld [vmem:[%s1840 + $0x18] sm:$0xf]
      %v1848 = vld [vmem:[%s1840 + $0x1c] sm:$0xf]
      %v1849 = vld [vmem:[%s1840 + $0x20] sm:$0xf]
      %v1850 = vld [vmem:[%s1840 + $0x24] sm:$0xf]
      %v1851 = vld [vmem:[%s1840 + $0x28] sm:$0xf]
      %v1852 = vld [vmem:[%s1840 + $0x2c] sm:$0xf]
      %v1853 = vld [vmem:[%s1840 + $0x30] sm:$0xf]
      %v1854 = vld [vmem:[%s1840 + $0x34] sm:$0xf]
      %v1855 = vld [vmem:[%s1840 + $0x38] sm:$0xf]
      %v1856 = vld [vmem:[%s1840 + $0x3c] sm:$0xf]
      %v1857 = vld [vmem:[%s1840 + $0x40] sm:$0xf]
      %v1858 = vld [vmem:[%s1840 + $0x44] sm:$0xf]
      %v1859 = vld [vmem:[%s1840 + $0x48] sm:$0xf]
      %v1860 = vld [vmem:[%s1840 + $0x4c] sm:$0xf]
      %v1861 = vld [vmem:[%s1840 + $0x50] sm:$0xf]
      %v1862 = vld [vmem:[%s1840 + $0x54] sm:$0xf]
      %v1863 = vld [vmem:[%s1840 + $0x58] sm:$0xf]
      %v1864 = vld [vmem:[%s1840 + $0x5c] sm:$0xf]
      %v1865 = vld [vmem:[%s1840 + $0x60] sm:$0xf]
      %v1866 = vld [vmem:[%s1840 + $0x64] sm:$0xf]
      %v1867 = vld [vmem:[%s1840 + $0x68] sm:$0xf]
      %v1868 = vld [vmem:[%s1840 + $0x6c] sm:$0xf]
      %v1869 = vld [vmem:[%s1840 + $0x70] sm:$0xf]
      %v1870 = vld [vmem:[%s1840 + $0x74] sm:$0xf]
      %v1871 = vld [vmem:[%s1840 + $0x78] sm:$0xf]
      %v1872 = vld [vmem:[%s1840 + $0x7c] sm:$0xf]
      %v1873 = vld [vmem:[%s1840 + $0x80] sm:$0xf]
      %v1874 = vld [vmem:[%s1840 + $0x84] sm:$0xf]
      %v1875 = vld [vmem:[%s1840 + $0x88] sm:$0xf]
      %v1876 = vld [vmem:[%s1840 + $0x8c] sm:$0xf]
      %v1877 = vld [vmem:[%s1840 + $0x90] sm:$0xf]
      %v1878 = vld [vmem:[%s1840 + $0x94] sm:$0xf]
      %v1879 = vld [vmem:[%s1840 + $0x98] sm:$0xf]
      %v1880 = vld [vmem:[%s1840 + $0x9c] sm:$0xf]
      %v1881 = vld [vmem:[%s1840 + $0xa0] sm:$0xf]
      %v1882 = vld [vmem:[%s1840 + $0xa4] sm:$0xf]
      %v1883 = vld [vmem:[%s1840 + $0xa8] sm:$0xf]
      %v1884 = vld [vmem:[%s1840 + $0xac] sm:$0xf]
      %v1885 = vld [vmem:[%s1840 + $0xb0] sm:$0xf]
      %v1886 = vld [vmem:[%s1840 + $0xb4] sm:$0xf]
      %v1887 = vld [vmem:[%s1840 + $0xb8] sm:$0xf]
      %v1888 = vld [vmem:[%s1840 + $0xbc] sm:$0xf]
      %v1937 = vunpack.c.l.b16 %v1841
      %v1938 = vunpack.c.l.b16 %v1842
      %v1939 = vunpack.c.l.b16 %v1843
      %v1940 = vunpack.c.l.b16 %v1844
      %v1941 = vunpack.c.l.b16 %v1845
      %v1942 = vunpack.c.l.b16 %v1846
      %v1943 = vunpack.c.l.b16 %v1847
      %v1944 = vunpack.c.l.b16 %v1848
      %v1945 = vunpack.c.l.b16 %v1849
      %v1946 = vunpack.c.l.b16 %v1850
      %v1947 = vunpack.c.l.b16 %v1851
      %v1948 = vunpack.c.l.b16 %v1852
      %v1949 = vunpack.c.l.b16 %v1853
      %v1950 = vunpack.c.l.b16 %v1854
      %v1951 = vunpack.c.l.b16 %v1855
      %v1952 = vunpack.c.l.b16 %v1856
      %v1953 = vunpack.c.l.b16 %v1857
      %v1954 = vunpack.c.l.b16 %v1858
      %v1955 = vunpack.c.l.b16 %v1859
      %v1956 = vunpack.c.l.b16 %v1860
      %v1957 = vunpack.c.l.b16 %v1861
      %v1958 = vunpack.c.l.b16 %v1862
      %v1959 = vunpack.c.l.b16 %v1863
      %v1960 = vunpack.c.l.b16 %v1864
      %v1961 = vunpack.c.l.b16 %v1865
      %v1962 = vunpack.c.l.b16 %v1866
      %v1963 = vunpack.c.l.b16 %v1867
      %v1964 = vunpack.c.l.b16 %v1868
      %v1965 = vunpack.c.l.b16 %v1869
      %v1966 = vunpack.c.l.b16 %v1870
      %v1967 = vunpack.c.l.b16 %v1871
      %v1968 = vunpack.c.l.b16 %v1872
      %v1969 = vunpack.c.l.b16 %v1873
      %v1970 = vunpack.c.l.b16 %v1874
      %v1971 = vunpack.c.l.b16 %v1875
      %v1972 = vunpack.c.l.b16 %v1876
      %v1973 = vunpack.c.l.b16 %v1877
      %v1974 = vunpack.c.l.b16 %v1878
      %v1975 = vunpack.c.l.b16 %v1879
      %v1976 = vunpack.c.l.b16 %v1880
      %v1977 = vunpack.c.l.b16 %v1881
      %v1978 = vunpack.c.l.b16 %v1882
      %v1979 = vunpack.c.l.b16 %v1883
      %v1980 = vunpack.c.l.b16 %v1884
      %v1981 = vunpack.c.l.b16 %v1885
      %v1982 = vunpack.c.l.b16 %v1886
      %v1983 = vunpack.c.l.b16 %v1887
      %v1984 = vunpack.c.l.b16 %v1888
      %v1985 = vpack.c.b16 %v1938, %v1937
      %v1986 = vpack.c.b16 %v1940, %v1939
      %v1987 = vpack.c.b16 %v1942, %v1941
      %v1988 = vpack.c.b16 %v1944, %v1943
      %v1989 = vpack.c.b16 %v1946, %v1945
      %v1990 = vpack.c.b16 %v1948, %v1947
      %v1991 = vpack.c.b16 %v1950, %v1949
      %v1992 = vpack.c.b16 %v1952, %v1951
      %v1993 = vpack.c.b16 %v1954, %v1953
      %v1994 = vpack.c.b16 %v1956, %v1955
      %v1995 = vpack.c.b16 %v1958, %v1957
      %v1996 = vpack.c.b16 %v1960, %v1959
      %v1997 = vpack.c.b16 %v1962, %v1961
      %v1998 = vpack.c.b16 %v1964, %v1963
      %v1999 = vpack.c.b16 %v1966, %v1965
      %v2000 = vpack.c.b16 %v1968, %v1967
      %v2001 = vpack.c.b16 %v1970, %v1969
      %v2002 = vpack.c.b16 %v1972, %v1971
      %v2003 = vpack.c.b16 %v1974, %v1973
      %v2004 = vpack.c.b16 %v1976, %v1975
      %v2005 = vpack.c.b16 %v1978, %v1977
      %v2006 = vpack.c.b16 %v1980, %v1979
      %v2007 = vpack.c.b16 %v1982, %v1981
      %v2008 = vpack.c.b16 %v1984, %v1983
      %2033 = vmatprep.subr.bf16.mxu0 0
      %2034 = vmatpush1.bf16.msra.mxu0 %v1985
      %2035 = vmatprep.subr.bf16.mxu0 0
      %2036 = vmatpush1.bf16.msra.mxu0 %v1986
      %2037 = vmatprep.subr.bf16.mxu0 0
      %2038 = vmatpush1.bf16.msra.mxu0 %v1987
      %2039 = vmatprep.subr.bf16.mxu0 0
      %2040 = vmatpush1.bf16.msra.mxu0 %v1988
      %2041 = vmatprep.subr.bf16.mxu0 0
      %2042 = vmatpush1.bf16.msra.mxu0 %v1989
      %2043 = vmatprep.subr.bf16.mxu0 0
      %2044 = vmatpush1.bf16.msra.mxu0 %v1990
      %2045 = vmatprep.subr.bf16.mxu0 0
      %2046 = vmatpush1.bf16.msra.mxu0 %v1991
      %2047 = vmatprep.subr.bf16.mxu0 0
      %2048 = vmatpush1.bf16.msra.mxu0 %v1992
      %2049 = vmatprep.subr.bf16.mxu0 0
      %2050 = vmatpush1.bf16.msra.mxu0 %v1993
      %2051 = vmatprep.subr.bf16.mxu0 0
      %2052 = vmatpush1.bf16.msra.mxu0 %v1994
      %2053 = vmatprep.subr.bf16.mxu0 0
      %2054 = vmatpush1.bf16.msra.mxu0 %v1995
      %2055 = vmatprep.subr.bf16.mxu0 0
      %2056 = vmatpush1.bf16.msra.mxu0 %v1996
      %2057 = vmatprep.subr.bf16.mxu0 0
      %2058 = vmatpush1.bf16.msra.mxu0 %v1997
      %2059 = vmatprep.subr.bf16.mxu0 0
      %2060 = vmatpush1.bf16.msra.mxu0 %v1998
      %2061 = vmatprep.subr.bf16.mxu0 0
      %2062 = vmatpush1.bf16.msra.mxu0 %v1999
      %2063 = vmatprep.subr.bf16.mxu0 0
      %2064 = vmatpush1.bf16.msra.mxu0 %v2000
      %2065 = vmatprep.mubr.bf16.mxu0 %v1817
      %2066 = vmatmul.mubr.bf16.gmra.mrb[0].mxu0 %v1816
      %v2067 = vpop.f32.mrb[0].mxu0
      %v2068 = vadd.f32 0.0, %v2067
      %v2069 = vpop.f32.mrb[0].mxu0
      %v2070 = vpop.f32.mrb[0].mxu0
      %v2071 = vadd.f32 0.0, %v2070
      %v2072 = vpop.f32.mrb[0].mxu0
      %2073 = vmatprep.mubr.bf16.mxu0 %v1820
      %2074 = vmatmul.mubr.bf16.gmra.mrb[0].mxu0 %v1819
      %v2075 = vpop.f32.mrb[0].mxu0
      %v2076 = vadd.f32 0.0, %v2075
      %v2077 = vpop.f32.mrb[0].mxu0
      %v2078 = vpop.f32.mrb[0].mxu0
      %v2079 = vadd.f32 0.0, %v2078
      %v2080 = vpop.f32.mrb[0].mxu0
      %2081 = vmatprep.mubr.bf16.mxu0 %v1823
      %2082 = vmatmul.mubr.bf16.gmra.mrb[0].mxu0 %v1822
      %v2083 = vpop.f32.mrb[0].mxu0
      %v2084 = vadd.f32 0.0, %v2083
      %v2085 = vpop.f32.mrb[0].mxu0
      %v2086 = vpop.f32.mrb[0].mxu0
      %v2087 = vadd.f32 0.0, %v2086
      %v2088 = vpop.f32.mrb[0].mxu0
      %2089 = vmatprep.mubr.bf16.mxu0 %v1826
      %2090 = vmatmul.mubr.bf16.gmra.mrb[0].mxu0 %v1825
      %v2091 = vpop.f32.mrb[0].mxu0
      %v2092 = vadd.f32 0.0, %v2091
      %v2093 = vpop.f32.mrb[0].mxu0
      %v2094 = vpop.f32.mrb[0].mxu0
      %v2095 = vadd.f32 0.0, %v2094
      %v2096 = vpop.f32.mrb[0].mxu0
      %2097 = vmatprep.mubr.bf16.mxu0 %v1829
      %2098 = vmatmul.mubr.bf16.gmra.mrb[0].mxu0 %v1828
      %v2099 = vpop.f32.mrb[0].mxu0
      %v2100 = vadd.f32 0.0, %v2099
      %v2101 = vpop.f32.mrb[0].mxu0
      %v2102 = vpop.f32.mrb[0].mxu0
      %v2103 = vadd.f32 0.0, %v2102
      %v2104 = vpop.f32.mrb[0].mxu0
      %2105 = vmatprep.mubr.bf16.mxu0 %v1832
      %2106 = vmatmul.mubr.bf16.gmra.mrb[0].mxu0 %v1831
      %v2107 = vpop.f32.mrb[0].mxu0
      %v2108 = vadd.f32 0.0, %v2107
      %v2109 = vpop.f32.mrb[0].mxu0
      %v2110 = vpop.f32.mrb[0].mxu0
      %v2111 = vadd.f32 0.0, %v2110
      %v2112 = vpop.f32.mrb[0].mxu0
      %2113 = vmatprep.mubr.bf16.mxu0 %v1835
      %2114 = vmatmul.mubr.bf16.gmra.mrb[0].mxu0 %v1834
      %v2115 = vpop.f32.mrb[0].mxu0
      %v2116 = vadd.f32 0.0, %v2115
      %v2117 = vpop.f32.mrb[0].mxu0
      %v2118 = vpop.f32.mrb[0].mxu0
      %v2119 = vadd.f32 0.0, %v2118
      %v2120 = vpop.f32.mrb[0].mxu0
      %2121 = vmatprep.mubr.bf16.mxu0 %v1838
      %2122 = vmatmul.mubr.bf16.gmra.mrb[0].mxu0 %v1837
      %v2123 = vpop.f32.mrb[0].mxu0
      %v2124 = vadd.f32 0.0, %v2123
      %v2125 = vpop.f32.mrb[0].mxu0
      %v2126 = vpop.f32.mrb[0].mxu0
      %v2127 = vadd.f32 0.0, %v2126
      %v2128 = vpop.f32.mrb[0].mxu0
      %2129 = vdwg.mxu0
      %2130 = vmatprep.subr.bf16.mxu0 0
      %2131 = vmatpush1.bf16.msra.mxu0 %v2001
      %2132 = vmatprep.subr.bf16.mxu0 0
      %2133 = vmatpush1.bf16.msra.mxu0 %v2002
      %2134 = vmatprep.subr.bf16.mxu0 0
      %2135 = vmatpush1.bf16.msra.mxu0 %v2003
      %2136 = vmatprep.subr.bf16.mxu0 0
      %2137 = vmatpush1.bf16.msra.mxu0 %v2004
      %2138 = vmatprep.subr.bf16.mxu0 0
      %2139 = vmatpush1.bf16.msra.mxu0 %v2005
      %2140 = vmatprep.subr.bf16.mxu0 0
      %2141 = vmatpush1.bf16.msra.mxu0 %v2006
      %2142 = vmatprep.subr.bf16.mxu0 0
      %2143 = vmatpush1.bf16.msra.mxu0 %v2007
      %2144 = vmatprep.subr.bf16.mxu0 0
      %2145 = vmatpush1.bf16.msra.mxu0 %v2008
      %2146 = vmatprep.subr.bf16.mxu0 0
      %2147 = vmatpush1.bf16.msra.mxu0 0
      %2148 = vmatprep.subr.bf16.mxu0 0
      %2149 = vmatpush1.bf16.msra.mxu0 0
      %2150 = vmatprep.subr.bf16.mxu0 0
      %2151 = vmatpush1.bf16.msra.mxu0 0
      %2152 = vmatprep.subr.bf16.mxu0 0
      %2153 = vmatpush1.bf16.msra.mxu0 0
      %2154 = vmatprep.subr.bf16.mxu0 0
      %2155 = vmatpush1.bf16.msra.mxu0 0
      %2156 = vmatprep.subr.bf16.mxu0 0
      %2157 = vmatpush1.bf16.msra.mxu0 0
      %2158 = vmatprep.subr.bf16.mxu0 0
      %2159 = vmatpush1.bf16.msra.mxu0 0
      %2160 = vmatprep.subr.bf16.mxu0 0
      %2161 = vmatpush1.bf16.msra.mxu0 0
      %2162 = vmatprep.mubr.bf16.mxu0 0
      %2163 = vmatmul.mubr.bf16.gmra.mrb[0].mxu0 %v1818
      %v2164 = vpop.f32.mrb[0].mxu0
      %v2165 = vadd.f32 %v2068, %v2164
      %v2166 = vpop.f32.mrb[0].mxu0
      %v2167 = vpop.f32.mrb[0].mxu0
      %v2168 = vadd.f32 %v2071, %v2167
      %v2169 = vpop.f32.mrb[0].mxu0
      %2170 = vmatprep.mubr.bf16.mxu0 0
      %2171 = vmatmul.mubr.bf16.gmra.mrb[0].mxu0 %v1821
      %v2172 = vpop.f32.mrb[0].mxu0
      %v2173 = vadd.f32 %v2076, %v2172
      %v2174 = vpop.f32.mrb[0].mxu0
      %v2175 = vpop.f32.mrb[0].mxu0
      %v2176 = vadd.f32 %v2079, %v2175
      %v2177 = vpop.f32.mrb[0].mxu0
      %2178 = vmatprep.mubr.bf16.mxu0 0
      %2179 = vmatmul.mubr.bf16.gmra.mrb[0].mxu0 %v1824
      %v2180 = vpop.f32.mrb[0].mxu0
      %v2181 = vadd.f32 %v2084, %v2180
      %v2182 = vpop.f32.mrb[0].mxu0
      %v2183 = vpop.f32.mrb[0].mxu0
      %v2184 = vadd.f32 %v2087, %v2183
      %v2185 = vpop.f32.mrb[0].mxu0
      %2186 = vmatprep.mubr.bf16.mxu0 0
      %2187 = vmatmul.mubr.bf16.gmra.mrb[0].mxu0 %v1827
      %v2188 = vpop.f32.mrb[0].mxu0
      %v2189 = vadd.f32 %v2092, %v2188
      %v2190 = vpop.f32.mrb[0].mxu0
      %v2191 = vpop.f32.mrb[0].mxu0
      %v2192 = vadd.f32 %v2095, %v2191
      %v2193 = vpop.f32.mrb[0].mxu0
      %2194 = vmatprep.mubr.bf16.mxu0 0
      %2195 = vmatmul.mubr.bf16.gmra.mrb[0].mxu0 %v1830
      %v2196 = vpop.f32.mrb[0].mxu0
      %v2197 = vadd.f32 %v2100, %v2196
      %v2198 = vpop.f32.mrb[0].mxu0
      %v2199 = vpop.f32.mrb[0].mxu0
      %v2200 = vadd.f32 %v2103, %v2199
      %v2201 = vpop.f32.mrb[0].mxu0
      %2202 = vmatprep.mubr.bf16.mxu0 0
      %2203 = vmatmul.mubr.bf16.gmra.mrb[0].mxu0 %v1833
      %v2204 = vpop.f32.mrb[0].mxu0
      %v2205 = vadd.f32 %v2108, %v2204
      %v2206 = vpop.f32.mrb[0].mxu0
      %v2207 = vpop.f32.mrb[0].mxu0
      %v2208 = vadd.f32 %v2111, %v2207
      %v2209 = vpop.f32.mrb[0].mxu0
      %2210 = vmatprep.mubr.bf16.mxu0 0
      %2211 = vmatmul.mubr.bf16.gmra.mrb[0].mxu0 %v1836
      %v2212 = vpop.f32.mrb[0].mxu0
      %v2213 = vadd.f32 %v2116, %v2212
      %v2214 = vpop.f32.mrb[0].mxu0
      %v2215 = vpop.f32.mrb[0].mxu0
      %v2216 = vadd.f32 %v2119, %v2215
      %v2217 = vpop.f32.mrb[0].mxu0
      %2218 = vmatprep.mubr.bf16.mxu0 0
      %2219 = vmatmul.mubr.bf16.gmra.mrb[0].mxu0 %v1839
      %v2220 = vpop.f32.mrb[0].mxu0
      %v2221 = vadd.f32 %v2124, %v2220
      %v2222 = vpop.f32.mrb[0].mxu0
      %v2223 = vpop.f32.mrb[0].mxu0
      %v2224 = vadd.f32 %v2127, %v2223
      %v2225 = vpop.f32.mrb[0].mxu0
      %2226 = vdwg.mxu0
      %v2227 = vld [vmem:[#allocation3] sm:$0xff]
      %v2228 = vld [vmem:[#allocation3 + $0x8] sm:$0xff]
      %v2229 = vld [vmem:[#allocation3 + $0x10] sm:$0xff]
      %v2230 = vld [vmem:[#allocation3 + $0x18] sm:$0xff]
      %v2231 = vld [vmem:[#allocation3 + $0x20] sm:$0xff]
      %v2232 = vld [vmem:[#allocation3 + $0x28] sm:$0xff]
      %v2233 = vld [vmem:[#allocation3 + $0x30] sm:$0xff]
      %v2234 = vld [vmem:[#allocation3 + $0x38] sm:$0xff]
      %v2235 = vld [vmem:[#allocation3 + $0x40] sm:$0xff]
      %v2236 = vld [vmem:[#allocation3 + $0x48] sm:$0xff]
      %v2237 = vld [vmem:[#allocation3 + $0x50] sm:$0xff]
      %v2238 = vld [vmem:[#allocation3 + $0x58] sm:$0xff]
      %v2239 = vld [vmem:[#allocation3 + $0x60] sm:$0xff]
      %v2240 = vld [vmem:[#allocation3 + $0x68] sm:$0xff]
      %v2241 = vld [vmem:[#allocation3 + $0x70] sm:$0xff]
      %v2242 = vld [vmem:[#allocation3 + $0x78] sm:$0xff]
      %v2243 = vadd.f32 %v2227, %v2165
      %v2244 = vadd.f32 %v2228, %v2168
      %v2245 = vadd.f32 %v2229, %v2173
      %v2246 = vadd.f32 %v2230, %v2176
      %v2247 = vadd.f32 %v2231, %v2181
      %v2248 = vadd.f32 %v2232, %v2184
      %v2249 = vadd.f32 %v2233, %v2189
      %v2250 = vadd.f32 %v2234, %v2192
      %v2251 = vadd.f32 %v2235, %v2197
      %v2252 = vadd.f32 %v2236, %v2200
      %v2253 = vadd.f32 %v2237, %v2205
      %v2254 = vadd.f32 %v2238, %v2208
      %v2255 = vadd.f32 %v2239, %v2213
      %v2256 = vadd.f32 %v2240, %v2216
      %v2257 = vadd.f32 %v2241, %v2221
      %v2258 = vadd.f32 %v2242, %v2224
      %2259 = vst [vmem:[#allocation3] sm:$0xff] %v2243
      %2260 = vst [vmem:[#allocation3 + $0x8] sm:$0xff] %v2244
      %2261 = vst [vmem:[#allocation3 + $0x10] sm:$0xff] %v2245
      %2262 = vst [vmem:[#allocation3 + $0x18] sm:$0xff] %v2246
      %2263 = vst [vmem:[#allocation3 + $0x20] sm:$0xff] %v2247
      %2264 = vst [vmem:[#allocation3 + $0x28] sm:$0xff] %v2248
      %2265 = vst [vmem:[#allocation3 + $0x30] sm:$0xff] %v2249
      %2266 = vst [vmem:[#allocation3 + $0x38] sm:$0xff] %v2250
      %2267 = vst [vmem:[#allocation3 + $0x40] sm:$0xff] %v2251
      %2268 = vst [vmem:[#allocation3 + $0x48] sm:$0xff] %v2252
      %2269 = vst [vmem:[#allocation3 + $0x50] sm:$0xff] %v2253
      %2270 = vst [vmem:[#allocation3 + $0x58] sm:$0xff] %v2254
      %2271 = vst [vmem:[#allocation3 + $0x60] sm:$0xff] %v2255
      %2272 = vst [vmem:[#allocation3 + $0x68] sm:$0xff] %v2256
      %2273 = vst [vmem:[#allocation3 + $0x70] sm:$0xff] %v2257
      %2274 = vst [vmem:[#allocation3 + $0x78] sm:$0xff] %v2258
      %v2275 = vld [vmem:[#allocation3] sm:$0xff]
      %v2276 = vld [vmem:[#allocation3 + $0x8] sm:$0xff]
      %v2277 = vld [vmem:[#allocation3 + $0x10] sm:$0xff]
      %v2278 = vld [vmem:[#allocation3 + $0x18] sm:$0xff]
      %v2279 = vld [vmem:[#allocation3 + $0x20] sm:$0xff]
      %v2280 = vld [vmem:[#allocation3 + $0x28] sm:$0xff]
      %v2281 = vld [vmem:[#allocation3 + $0x30] sm:$0xff]
      %v2282 = vld [vmem:[#allocation3 + $0x38] sm:$0xff]
      %v2283 = vld [vmem:[#allocation3 + $0x40] sm:$0xff]
      %v2284 = vld [vmem:[#allocation3 + $0x48] sm:$0xff]
      %v2285 = vld [vmem:[#allocation3 + $0x50] sm:$0xff]
      %v2286 = vld [vmem:[#allocation3 + $0x58] sm:$0xff]
      %v2287 = vld [vmem:[#allocation3 + $0x60] sm:$0xff]
      %v2288 = vld [vmem:[#allocation3 + $0x68] sm:$0xff]
      %v2289 = vld [vmem:[#allocation3 + $0x70] sm:$0xff]
      %v2290 = vld [vmem:[#allocation3 + $0x78] sm:$0xff]
      %v2291 = vadd.f32 %v2275, %v2276
      %v2292 = vadd.f32 %v2291, %v2277
      %v2293 = vadd.f32 %v2292, %v2278
      %v2294 = vadd.f32 %v2293, %v2279
      %v2295 = vadd.f32 %v2294, %v2280
      %v2296 = vadd.f32 %v2295, %v2281
      %v2297 = vadd.f32 %v2296, %v2282
      %v2298 = vadd.f32 %v2297, %v2283
      %v2299 = vadd.f32 %v2298, %v2284
      %v2300 = vadd.f32 %v2299, %v2285
      %v2301 = vadd.f32 %v2300, %v2286
      %v2302 = vadd.f32 %v2301, %v2287
      %v2303 = vadd.f32 %v2302, %v2288
      %v2304 = vadd.f32 %v2303, %v2289
      %v2305 = vadd.f32 %v2304, %v2290
      %v2306 = vrot.slane %v2305, 4
      %v2307 = vadd.f32 %v2305, %v2306
      %v2308 = vrot.slane %v2307, 2
      %v2309 = vadd.f32 %v2307, %v2308
      %v2310 = vrot.slane %v2309, 1
      %v2311 = vadd.f32 %v2309, %v2310
      %v2312 = vmul.f32 %v2275, %v2275
      %v2313 = vmul.f32 %v2276, %v2276
      %v2314 = vmul.f32 %v2277, %v2277
      %v2315 = vmul.f32 %v2278, %v2278
      %v2316 = vmul.f32 %v2279, %v2279
      %v2317 = vmul.f32 %v2280, %v2280
      %v2318 = vmul.f32 %v2281, %v2281
      %v2319 = vmul.f32 %v2282, %v2282
      %v2320 = vmul.f32 %v2283, %v2283
      %v2321 = vmul.f32 %v2284, %v2284
      %v2322 = vmul.f32 %v2285, %v2285
      %v2323 = vmul.f32 %v2286, %v2286
      %v2324 = vmul.f32 %v2287, %v2287
      %v2325 = vmul.f32 %v2288, %v2288
      %v2326 = vmul.f32 %v2289, %v2289
      %v2327 = vmul.f32 %v2290, %v2290
      %v2328 = vadd.f32 %v2312, %v2313
      %v2329 = vadd.f32 %v2328, %v2314
      %v2330 = vadd.f32 %v2329, %v2315
      %v2331 = vadd.f32 %v2330, %v2316
      %v2332 = vadd.f32 %v2331, %v2317
      %v2333 = vadd.f32 %v2332, %v2318
      %v2334 = vadd.f32 %v2333, %v2319
      %v2335 = vadd.f32 %v2334, %v2320
      %v2336 = vadd.f32 %v2335, %v2321
      %v2337 = vadd.f32 %v2336, %v2322
      %v2338 = vadd.f32 %v2337, %v2323
      %v2339 = vadd.f32 %v2338, %v2324
      %v2340 = vadd.f32 %v2339, %v2325
      %v2341 = vadd.f32 %v2340, %v2326
      %v2342 = vadd.f32 %v2341, %v2327
      %v2343 = vrot.slane %v2342, 4
      %v2344 = vadd.f32 %v2342, %v2343
      %v2345 = vrot.slane %v2344, 2
      %v2346 = vadd.f32 %v2344, %v2345
      %v2347 = vrot.slane %v2346, 1
      %v2348 = vadd.f32 %v2346, %v2347
      %vm2349 = vcmask 1040384
      %v2350 = vsel %vm2349, %v2311, %v2348
      %2351 = vst [vmem:[%s463] sm:$0x3] %v2350
      %2352 = vst [vmem:[%s454] sm:$0xff] %v2275
      %2353 = vst [vmem:[%s454 + $0x8] sm:$0xff] %v2276
      %2354 = vst [vmem:[%s454 + $0x10] sm:$0xff] %v2277
      %2355 = vst [vmem:[%s454 + $0x18] sm:$0xff] %v2278
      %2356 = vst [vmem:[%s454 + $0x20] sm:$0xff] %v2279
      %2357 = vst [vmem:[%s454 + $0x28] sm:$0xff] %v2280
      %2358 = vst [vmem:[%s454 + $0x30] sm:$0xff] %v2281
      %2359 = vst [vmem:[%s454 + $0x38] sm:$0xff] %v2282
      %2360 = vst [vmem:[%s454 + $0x40] sm:$0xff] %v2283
      %2361 = vst [vmem:[%s454 + $0x48] sm:$0xff] %v2284
      %2362 = vst [vmem:[%s454 + $0x50] sm:$0xff] %v2285
      %2363 = vst [vmem:[%s454 + $0x58] sm:$0xff] %v2286
      %2364 = vst [vmem:[%s454 + $0x60] sm:$0xff] %v2287
      %2365 = vst [vmem:[%s454 + $0x68] sm:$0xff] %v2288
      %2366 = vst [vmem:[%s454 + $0x70] sm:$0xff] %v2289
      %2367 = vst [vmem:[%s454 + $0x78] sm:$0xff] %v2290
      %s2368 = smul.u32 8, %s24
      %p2369 = scmp.lt.s32.totalorder %s23, 1
      %s2370 = scalar_select %p2369, %s23, 1
      %p2371 = scmp.lt.s32.totalorder %s2368, 15
      %s2372 = scalar_select %p2371, %s2368, 15
      %s2373 = smul.addr %s2372, 2
      %s2374 = smul.addr %s2370, 32
      %s2375 = sadd.s32 %s2373, %s2374
      %s2376 = smul.addr %s2375, 8
      %s2377 = scalar_lea.vmem %s6, %s2376
      %p2378 = scmp.lt.s32.totalorder %s23, 1
      %s2379 = scalar_select %p2378, %s23, 1
      %p2380 = scmp.lt.s32.totalorder %s24, 1
      %s2381 = scalar_select %p2380, %s24, 1
      %s2382 = smul.addr %s2379, 2
      %s2383 = sadd.s32 %s2381, %s2382
      %s2384 = smul.addr %s2383, 2
      %s2385 = scalar_lea.vmem %s7, %s2384
      // Predicated region
      $region61: #{doubleconv_forward.3} parent=43 // pred_check
        %p2386 = pneg %p210
      $region62: #{doubleconv_forward.3} parent=43 // pred_check_branch
        %2388 = sbr.rel (%p2386) target = $region64
      $region63: #{doubleconv_forward.3} parent=43 // pred_region
        %s2389 = smul.u32 8, %s24
      $region64: #{doubleconv_forward.3} parent=43 // pred_fallthru
        _
      // Predicated region
      $region65: #{doubleconv_forward.3} parent=43 // pred_check
        %p2390 = pneg %p238
      $region66: #{doubleconv_forward.3} parent=43 // pred_check_branch
        %2392 = sbr.rel (%p2390) target = $region68
      $region67: #{doubleconv_forward.3} parent=43 // pred_region
        _
      $region68: #{doubleconv_forward.3} parent=43 // pred_fallthru
        _
    $region44: #{doubleconv_forward.3} parent=5 // pred_fallthru
      _
    %p2393 = scmp.le.s32.totalorder 2, %s14
    // Predicated region
    $region69: #{doubleconv_forward.3} parent=5 // pred_check
      %p2394 = pneg %p2393
    $region70: #{doubleconv_forward.3} parent=5 // pred_check_branch
      %2396 = sbr.rel (%p2394) target = $region72
    $region71: #{doubleconv_forward.3} parent=5 // pred_region
      %s2397 = ssub.s32 %s14, 2
      // Predicated region
      $region73: #{doubleconv_forward.3} parent=71 // pred_check
        %p2398 = pneg %p216
      $region74: #{doubleconv_forward.3} parent=71 // pred_check_branch
        %2400 = sbr.rel (%p2398) target = $region76
      $region75: #{doubleconv_forward.3} parent=71 // pred_region
        %s2401 = smul.u32 8, %s26
        %p2402 = scmp.lt.s32.totalorder %s25, 1
        %s2403 = scalar_select %p2402, %s25, 1
        %p2404 = scmp.lt.s32.totalorder %s2401, 15
        %s2405 = scalar_select %p2404, %s2401, 15
        %s2406 = smul.addr %s2405, 2
        %s2407 = smul.addr %s2403, 32
        %s2408 = sadd.s32 %s2406, %s2407
        %s2409 = smul.addr %s2408, 8
        %s2410 = scalar_lea.vmem %s6, %s2409
      $region76: #{doubleconv_forward.3} parent=71 // pred_fallthru
        _
      // Predicated region
      $region77: #{doubleconv_forward.3} parent=71 // pred_check
        %p2411 = pneg %p244
      $region78: #{doubleconv_forward.3} parent=71 // pred_check_branch
        %2413 = sbr.rel (%p2411) target = $region80
      $region79: #{doubleconv_forward.3} parent=71 // pred_region
        %p2414 = scmp.lt.s32.totalorder %s25, 1
        %s2415 = scalar_select %p2414, %s25, 1
        %p2416 = scmp.lt.s32.totalorder %s26, 1
        %s2417 = scalar_select %p2416, %s26, 1
        %s2418 = smul.addr %s2415, 2
        %s2419 = sadd.s32 %s2417, %s2418
        %s2420 = smul.addr %s2419, 2
        %s2421 = scalar_lea.vmem %s7, %s2420
      $region80: #{doubleconv_forward.3} parent=71 // pred_fallthru
        _
    $region72: #{doubleconv_forward.3} parent=5 // pred_fallthru
      _
  $region6: #{doubleconv_forward.3} parent=0 // loop_footer
    %s18 = sadd.s32 1, %s14
  $region7: #{doubleconv_forward.3} parent=0 // loop_footer_branch
    %13 = sbr.rel target = $region3
  $region8: #{doubleconv_forward.3} parent=0 // loop_exit
    _

// kernel: doubleconv_forward.4
$region0: #{doubleconv_forward.4}
  #allocation0 [shape = 'u32[]', space=smem, size = 0x4, offset = 0x4, fixed_abs, tag = 'smem constant byte address 0x4 - core index']
  #allocation1 [shape = 'u32[144,128]{1,0:T(1,128)}', space=vmem, size = 0x12000, scoped, tag = 'internal scratch']
  #allocation2 [shape = 'bf16[160,384]{1,0:T(16,128)(2,1)}', space=vmem, size = 0x1e000, scoped, tag = 'scratch operand']
  #allocation3 [shape = 'f32[128,128]{1,0:T(8,128)}', space=vmem, size = 0x10000, scoped, tag = 'scratch operand']
  %s0 = inlined_call_operand.vmem [shape: f32[2,16,16,128], index: 0, kind: input, shape index: {}, may-alias: {0,1,2}]
  %s1 = inlined_call_operand.vmem [shape: f32[2,16,16,128], index: 1, kind: input, shape index: {}, may-alias: {0,1,2}]
  %s2 = inlined_call_operand.vmem [shape: f32[2,16,16,128], index: 2, kind: input, shape index: {}, may-alias: {0,1,2}]
  %s3 = inlined_call_operand.vmem [shape: bf16[3,384,128], index: 3, kind: input, shape index: {}]
  %s4 = inlined_call_operand.vmem [shape: f32[1,128], index: 4, kind: input, shape index: {}]
  %s5 = inlined_call_operand.vmem [shape: f32[1,128], index: 5, kind: input, shape index: {}]
  %s6 = inlined_call_operand.vmem [shape: f32[2,16,16,128], index: 6, kind: output, shape index: {0}]
  %s7 = inlined_call_operand.vmem [shape: f32[2,2,2,128], index: 7, kind: output, shape index: {1}]
  %8 = xla_tuple %s6, %s7
  %s9 = sld [smem:[#allocation0]]
  $region81: #{doubleconv_forward.4} parent=0
    _
  %s11 = ssub.s32 1, %s9
  %s12 = scalar_select 0, %s11, %s9
  loop: start=0, step=1, limit=6
  $region2: #{doubleconv_forward.4} parent=0 // loop_pre_header
    _
  $region3: #{doubleconv_forward.4} parent=0 // loop_header
    %s14 = sphi 0, %s18
    %p15 = scmp.ge.s32.totalorder %s14, 6
    %s21 = sphi 0, %s33
    %s22 = sphi 0, %s29
    %s23 = sphi 0, %s21
    %s24 = sphi 0, %s22
    %s25 = sphi 0, %s23
    %s26 = sphi 0, %s24
    %s38 = sphi 0, %s40
    %s41 = sphi 0, %s38
    %s42 = sphi 0, %s41
    %s58 = sphi 0, %s42
    %s72 = sphi 0, %s74
    %s75 = sphi 0, %s72
    %s76 = sphi 0, %s75
    %s92 = sphi 0, %s76
    %s106 = sphi 0, %s108
    %s109 = sphi 0, %s106
    %s110 = sphi 0, %s109
    %s126 = sphi 0, %s110
    %s130 = sphi 0, %s130
    %s132 = sphi 0, %s130
    %s133 = sphi 0, %s132
    %s147 = sphi 0, %s133
    %s151 = sphi 0, %s151
    %s153 = sphi 0, %s151
    %s154 = sphi 0, %s153
    %s168 = sphi 0, %s154
    %s172 = sphi 0, %s172
    %s174 = sphi 0, %s172
    %s175 = sphi 0, %s174
    %s189 = sphi 0, %s175
    %s197 = sphi 0, %s199
    %s200 = sphi 0, %s197
    %s201 = sphi 0, %s200
    %s217 = sphi 0, %s201
    %s225 = sphi 0, %s227
    %s228 = sphi 0, %s225
    %s229 = sphi 0, %s228
    %s245 = sphi 0, %s229
  $region4: #{doubleconv_forward.4} parent=0 // loop_header_branch
    %17 = sbr.rel (%p15) target = $region8
  $region5: #{doubleconv_forward.4} parent=0 // loop_body
    %s19 = ssub.s32 %s14, 1
    %s20 = ssub.s32 %s14, 2
    %s27 = sadd.s32 1, %s22
    %p28 = scmp.ge.s32.totalorder %s27, 2
    %s29 = scalar_select %p28, 0, %s27
    %s30 = sadd.s32 1, %s21
    %s31 = scalar_select %p28, %s30, %s21
    %p32 = scmp.ge.s32.totalorder %s31, 2
    %s33 = scalar_select %p32, 0, %s31
    %s34 = ssub.s32 %s21, %s33
    %s35 = ssub.s32 %s22, %s29
    %s36 = sor.u32 %s34, %s35
    %p37 = scmp.eq.s32.totalorder %s36, 0
    %s39 = sadd.s32 %s38, 1
    %s40 = scalar_select %p37, %s38, %s39
    %p43 = pneg %p37
    %p44 = scmp.eq.s32.totalorder %s14, 3
    %p45 = por %p43, %p44
    %p46 = scmp.ne.s32.totalorder %s38, %s41
    %p47 = scmp.eq.s32.totalorder %s14, 0
    %p48 = por %p46, %p47
    %p49 = scmp.ne.s32.totalorder %s38, %s41
    %p50 = scmp.eq.s32.totalorder %s19, 3
    %p51 = por %p49, %p50
    %p52 = scmp.ne.s32.totalorder %s41, %s42
    %p53 = scmp.eq.s32.totalorder %s19, 0
    %p54 = por %p52, %p53
    %p55 = scmp.ne.s32.totalorder %s41, %s42
    %p56 = scmp.eq.s32.totalorder %s20, 3
    %p57 = por %p55, %p56
    %p59 = scmp.ne.s32.totalorder %s42, %s58
    %p60 = scmp.eq.s32.totalorder %s20, 0
    %p61 = por %p59, %p60
    %s62 = ssub.s32 %s22, 1
    %p63 = scmp.gt.s32.totalorder %s62, 0
    %s64 = scalar_select %p63, %s62, 0
    %s65 = ssub.s32 %s29, 1
    %p66 = scmp.gt.s32.totalorder %s65, 0
    %s67 = scalar_select %p66, %s65, 0
    %s68 = ssub.s32 %s21, %s33
    %s69 = ssub.s32 %s64, %s67
    %s70 = sor.u32 %s68, %s69
    %p71 = scmp.eq.s32.totalorder %s70, 0
    %s73 = sadd.s32 %s72, 1
    %s74 = scalar_select %p71, %s72, %s73
    %p77 = pneg %p71
    %p78 = scmp.eq.s32.totalorder %s14, 3
    %p79 = por %p77, %p78
    %p80 = scmp.ne.s32.totalorder %s72, %s75
    %p81 = scmp.eq.s32.totalorder %s14, 0
    %p82 = por %p80, %p81
    %p83 = scmp.ne.s32.totalorder %s72, %s75
    %p84 = scmp.eq.s32.totalorder %s19, 3
    %p85 = por %p83, %p84
    %p86 = scmp.ne.s32.totalorder %s75, %s76
    %p87 = scmp.eq.s32.totalorder %s19, 0
    %p88 = por %p86, %p87
    %p89 = scmp.ne.s32.totalorder %s75, %s76
    %p90 = scmp.eq.s32.totalorder %s20, 3
    %p91 = por %p89, %p90
    %p93 = scmp.ne.s32.totalorder %s76, %s92
    %p94 = scmp.eq.s32.totalorder %s20, 0
    %p95 = por %p93, %p94
    %s96 = sadd.s32 %s22, 1
    %p97 = scmp.lt.s32.totalorder %s96, 1
    %s98 = scalar_select %p97, %s96, 1
    %s99 = sadd.s32 %s29, 1
    %p100 = scmp.lt.s32.totalorder %s99, 1
    %s101 = scalar_select %p100, %s99, 1
    %s102 = ssub.s32 %s21, %s33
    %s103 = ssub.s32 %s98, %s101
    %s104 = sor.u32 %s102, %s103
    %p105 = scmp.eq.s32.totalorder %s104, 0
    %s107 = sadd.s32 %s106, 1
    %s108 = scalar_select %p105, %s106, %s107
    %p111 = pneg %p105
    %p112 = scmp.eq.s32.totalorder %s14, 3
    %p113 = por %p111, %p112
    %p114 = scmp.ne.s32.totalorder %s106, %s109
    %p115 = scmp.eq.s32.totalorder %s14, 0
    %p116 = por %p114, %p115
    %p117 = scmp.ne.s32.totalorder %s106, %s109
    %p118 = scmp.eq.s32.totalorder %s19, 3
    %p119 = por %p117, %p118
    %p120 = scmp.ne.s32.totalorder %s109, %s110
    %p121 = scmp.eq.s32.totalorder %s19, 0
    %p122 = por %p120, %p121
    %p123 = scmp.ne.s32.totalorder %s109, %s110
    %p124 = scmp.eq.s32.totalorder %s20, 3
    %p125 = por %p123, %p124
    %p127 = scmp.ne.s32.totalorder %s110, %s126
    %p128 = scmp.eq.s32.totalorder %s20, 0
    %p129 = por %p127, %p128
    %s131 = sadd.s32 %s130, 1
    %p134 = scmp.eq.s32.totalorder %s14, 3
    %p135 = scmp.ne.s32.totalorder %s130, %s132
    %p136 = scmp.eq.s32.totalorder %s14, 0
    %p137 = por %p135, %p136
    %p138 = scmp.ne.s32.totalorder %s130, %s132
    %p139 = scmp.eq.s32.totalorder %s19, 3
    %p140 = por %p138, %p139
    %p141 = scmp.ne.s32.totalorder %s132, %s133
    %p142 = scmp.eq.s32.totalorder %s19, 0
    %p143 = por %p141, %p142
    %p144 = scmp.ne.s32.totalorder %s132, %s133
    %p145 = scmp.eq.s32.totalorder %s20, 3
    %p146 = por %p144, %p145
    %p148 = scmp.ne.s32.totalorder %s133, %s147
    %p149 = scmp.eq.s32.totalorder %s20, 0
    %p150 = por %p148, %p149
    %s152 = sadd.s32 %s151, 1
    %p155 = scmp.eq.s32.totalorder %s14, 3
    %p156 = scmp.ne.s32.totalorder %s151, %s153
    %p157 = scmp.eq.s32.totalorder %s14, 0
    %p158 = por %p156, %p157
    %p159 = scmp.ne.s32.totalorder %s151, %s153
    %p160 = scmp.eq.s32.totalorder %s19, 3
    %p161 = por %p159, %p160
    %p162 = scmp.ne.s32.totalorder %s153, %s154
    %p163 = scmp.eq.s32.totalorder %s19, 0
    %p164 = por %p162, %p163
    %p165 = scmp.ne.s32.totalorder %s153, %s154
    %p166 = scmp.eq.s32.totalorder %s20, 3
    %p167 = por %p165, %p166
    %p169 = scmp.ne.s32.totalorder %s154, %s168
    %p170 = scmp.eq.s32.totalorder %s20, 0
    %p171 = por %p169, %p170
    %s173 = sadd.s32 %s172, 1
    %p176 = scmp.eq.s32.totalorder %s14, 3
    %p177 = scmp.ne.s32.totalorder %s172, %s174
    %p178 = scmp.eq.s32.totalorder %s14, 0
    %p179 = por %p177, %p178
    %p180 = scmp.ne.s32.totalorder %s172, %s174
    %p181 = scmp.eq.s32.totalorder %s19, 3
    %p182 = por %p180, %p181
    %p183 = scmp.ne.s32.totalorder %s174, %s175
    %p184 = scmp.eq.s32.totalorder %s19, 0
    %p185 = por %p183, %p184
    %p186 = scmp.ne.s32.totalorder %s174, %s175
    %p187 = scmp.eq.s32.totalorder %s20, 3
    %p188 = por %p186, %p187
    %p190 = scmp.ne.s32.totalorder %s175, %s189
    %p191 = scmp.eq.s32.totalorder %s20, 0
    %p192 = por %p190, %p191
    %s193 = ssub.s32 %s21, %s33
    %s194 = ssub.s32 %s22, %s29
    %s195 = sor.u32 %s193, %s194
    %p196 = scmp.eq.s32.totalorder %s195, 0
    %s198 = sadd.s32 %s197, 1
    %s199 = scalar_select %p196, %s197, %s198
    %p202 = pneg %p196
    %p203 = scmp.eq.s32.totalorder %s14, 3
    %p204 = por %p202, %p203
    %p205 = scmp.ne.s32.totalorder %s197, %s200
    %p206 = scmp.eq.s32.totalorder %s14, 0
    %p207 = por %p205, %p206
    %p208 = scmp.ne.s32.totalorder %s197, %s200
    %p209 = scmp.eq.s32.totalorder %s19, 3
    %p210 = por %p208, %p209
    %p211 = scmp.ne.s32.totalorder %s200, %s201
    %p212 = scmp.eq.s32.totalorder %s19, 0
    %p213 = por %p211, %p212
    %p214 = scmp.ne.s32.totalorder %s200, %s201
    %p215 = scmp.eq.s32.totalorder %s20, 3
    %p216 = por %p214, %p215
    %p218 = scmp.ne.s32.totalorder %s201, %s217
    %p219 = scmp.eq.s32.totalorder %s20, 0
    %p220 = por %p218, %p219
    %s221 = ssub.s32 %s21, %s33
    %s222 = ssub.s32 %s22, %s29
    %s223 = sor.u32 %s221, %s222
    %p224 = scmp.eq.s32.totalorder %s223, 0
    %s226 = sadd.s32 %s225, 1
    %s227 = scalar_select %p224, %s225, %s226
    %p230 = pneg %p224
    %p231 = scmp.eq.s32.totalorder %s14, 3
    %p232 = por %p230, %p231
    %p233 = scmp.ne.s32.totalorder %s225, %s228
    %p234 = scmp.eq.s32.totalorder %s14, 0
    %p235 = por %p233, %p234
    %p236 = scmp.ne.s32.totalorder %s225, %s228
    %p237 = scmp.eq.s32.totalorder %s19, 3
    %p238 = por %p236, %p237
    %p239 = scmp.ne.s32.totalorder %s228, %s229
    %p240 = scmp.eq.s32.totalorder %s19, 0
    %p241 = por %p239, %p240
    %p242 = scmp.ne.s32.totalorder %s228, %s229
    %p243 = scmp.eq.s32.totalorder %s20, 3
    %p244 = por %p242, %p243
    %p246 = scmp.ne.s32.totalorder %s229, %s245
    %p247 = scmp.eq.s32.totalorder %s20, 0
    %p248 = por %p246, %p247
    %p249 = scmp.le.s32.totalorder 1, %s14
    %p250 = scmp.lt.s32.totalorder %s14, 5
    %p251 = pnand %p249, %p250
    %p252 = pneg %p251
    // Predicated region
    $region9: #{doubleconv_forward.4} parent=5 // pred_check
      _
    $region10: #{doubleconv_forward.4} parent=5 // pred_check_branch
      %254 = sbr.rel (%p251) target = $region12
    $region11: #{doubleconv_forward.4} parent=5 // pred_region
      %s255 = ssub.s32 %s14, 1
      // Predicated region
      $region13: #{doubleconv_forward.4} parent=11 // pred_check
        %p256 = pneg %p143
      $region14: #{doubleconv_forward.4} parent=11 // pred_check_branch
        %258 = sbr.rel (%p256) target = $region16
      $region15: #{doubleconv_forward.4} parent=11 // pred_region
        _
      $region16: #{doubleconv_forward.4} parent=11 // pred_fallthru
        _
      // Predicated region
      $region17: #{doubleconv_forward.4} parent=11 // pred_check
        %p259 = pneg %p164
      $region18: #{doubleconv_forward.4} parent=11 // pred_check_branch
        %261 = sbr.rel (%p259) target = $region20
      $region19: #{doubleconv_forward.4} parent=11 // pred_region
        _
      $region20: #{doubleconv_forward.4} parent=11 // pred_fallthru
        _
      // Predicated region
      $region21: #{doubleconv_forward.4} parent=11 // pred_check
        %p262 = pneg %p185
      $region22: #{doubleconv_forward.4} parent=11 // pred_check_branch
        %264 = sbr.rel (%p262) target = $region24
      $region23: #{doubleconv_forward.4} parent=11 // pred_region
        _
      $region24: #{doubleconv_forward.4} parent=11 // pred_fallthru
        _
    $region12: #{doubleconv_forward.4} parent=5 // pred_fallthru
      _
    %p265 = scmp.lt.s32.totalorder %s14, 4
    // Predicated region
    $region25: #{doubleconv_forward.4} parent=5 // pred_check
      %p266 = pneg %p265
    $region26: #{doubleconv_forward.4} parent=5 // pred_check_branch
      %268 = sbr.rel (%p266) target = $region28
    $region27: #{doubleconv_forward.4} parent=5 // pred_region
      // Predicated region
      $region29: #{doubleconv_forward.4} parent=27 // pred_check
        %p269 = pneg %p48
      $region30: #{doubleconv_forward.4} parent=27 // pred_check_branch
        %271 = sbr.rel (%p269) target = $region32
      $region31: #{doubleconv_forward.4} parent=27 // pred_region
        %s272 = smul.u32 8, %s22
        %p273 = scmp.lt.s32.totalorder %s21, 1
        %s274 = scalar_select %p273, %s21, 1
        %p275 = scmp.lt.s32.totalorder %s272, 15
        %s276 = scalar_select %p275, %s272, 15
        %s277 = smul.addr %s276, 2
        %s278 = smul.addr %s274, 32
        %s279 = sadd.s32 %s277, %s278
        %s280 = smul.addr %s279, 8
        %s281 = scalar_lea.vmem %s0, %s280
        %s282 = smul.u32 8, %s22
      $region32: #{doubleconv_forward.4} parent=27 // pred_fallthru
        _
      // Predicated region
      $region33: #{doubleconv_forward.4} parent=27 // pred_check
        %p283 = pneg %p82
      $region34: #{doubleconv_forward.4} parent=27 // pred_check_branch
        %285 = sbr.rel (%p283) target = $region36
      $region35: #{doubleconv_forward.4} parent=27 // pred_region
        %s286 = ssub.s32 %s22, 1
        %p287 = scmp.gt.s32.totalorder %s286, 0
        %s288 = scalar_select %p287, %s286, 0
        %s289 = smul.u32 8, %s288
        %p290 = scmp.lt.s32.totalorder %s21, 1
        %s291 = scalar_select %p290, %s21, 1
        %p292 = scmp.lt.s32.totalorder %s289, 15
        %s293 = scalar_select %p292, %s289, 15
        %s294 = smul.addr %s293, 2
        %s295 = smul.addr %s291, 32
        %s296 = sadd.s32 %s294, %s295
        %s297 = smul.addr %s296, 8
        %s298 = scalar_lea.vmem %s1, %s297
        %s299 = ssub.s32 %s22, 1
        %p300 = scmp.gt.s32.totalorder %s299, 0
        %s301 = scalar_select %p300, %s299, 0
        %s302 = smul.u32 8, %s301
      $region36: #{doubleconv_forward.4} parent=27 // pred_fallthru
        _
      // Predicated region
      $region37: #{doubleconv_forward.4} parent=27 // pred_check
        %p303 = pneg %p116
      $region38: #{doubleconv_forward.4} parent=27 // pred_check_branch
        %305 = sbr.rel (%p303) target = $region40
      $region39: #{doubleconv_forward.4} parent=27 // pred_region
        %s306 = sadd.s32 %s22, 1
        %p307 = scmp.lt.s32.totalorder %s306, 1
        %s308 = scalar_select %p307, %s306, 1
        %s309 = smul.u32 8, %s308
        %p310 = scmp.lt.s32.totalorder %s21, 1
        %s311 = scalar_select %p310, %s21, 1
        %p312 = scmp.lt.s32.totalorder %s309, 15
        %s313 = scalar_select %p312, %s309, 15
        %s314 = smul.addr %s313, 2
        %s315 = smul.addr %s311, 32
        %s316 = sadd.s32 %s314, %s315
        %s317 = smul.addr %s316, 8
        %s318 = scalar_lea.vmem %s2, %s317
        %s319 = sadd.s32 %s22, 1
        %p320 = scmp.lt.s32.totalorder %s319, 1
        %s321 = scalar_select %p320, %s319, 1
        %s322 = smul.u32 8, %s321
      $region40: #{doubleconv_forward.4} parent=27 // pred_fallthru
        _
    $region28: #{doubleconv_forward.4} parent=5 // pred_fallthru
      _
    %p323 = scmp.le.s32.totalorder 1, %s14
    %p324 = scmp.lt.s32.totalorder %s14, 5
    %p325 = pnand %p323, %p324
    %p326 = pneg %p325
    // Predicated region
    $region41: #{doubleconv_forward.4} parent=5 // pred_check
      _
    $region42: #{doubleconv_forward.4} parent=5 // pred_check_branch
      %328 = sbr.rel (%p325) target = $region44
    $region43: #{doubleconv_forward.4} parent=5 // pred_region
      %s329 = ssub.s32 %s14, 1
      %s330 = smul.u32 8, %s24
      %p331 = scmp.lt.s32.totalorder %s23, 1
      %s332 = scalar_select %p331, %s23, 1
      %p333 = scmp.lt.s32.totalorder %s330, 15
      %s334 = scalar_select %p333, %s330, 15
      %s335 = smul.addr %s334, 2
      %s336 = smul.addr %s332, 32
      %s337 = sadd.s32 %s335, %s336
      %s338 = smul.addr %s337, 8
      %s339 = scalar_lea.vmem %s0, %s338
      %p340 = pneg %p54
      %p341 = pneg %p51
      %s342 = ssub.s32 %s24, 1
      %p343 = scmp.gt.s32.totalorder %s342, 0
      %s344 = scalar_select %p343, %s342, 0
      %s345 = smul.u32 8, %s344
      %p346 = scmp.lt.s32.totalorder %s23, 1
      %s347 = scalar_select %p346, %s23, 1
      %p348 = scmp.lt.s32.totalorder %s345, 15
      %s349 = scalar_select %p348, %s345, 15
      %s350 = smul.addr %s349, 2
      %s351 = smul.addr %s347, 32
      %s352 = sadd.s32 %s350, %s351
      %s353 = smul.addr %s352, 8
      %s354 = scalar_lea.vmem %s1, %s353
      %p355 = pneg %p88
      %p356 = pneg %p85
      %s357 = sadd.s32 %s24, 1
      %p358 = scmp.lt.s32.totalorder %s357, 1
      %s359 = scalar_select %p358, %s357, 1
      %s360 = smul.u32 8, %s359
      %p361 = scmp.lt.s32.totalorder %s23, 1
      %s362 = scalar_select %p361, %s23, 1
      %p363 = scmp.lt.s32.totalorder %s360, 15
      %s364 = scalar_select %p363, %s360, 15
      %s365 = smul.addr %s364, 2
      %s366 = smul.addr %s362, 32
      %s367 = sadd.s32 %s365, %s366
      %s368 = smul.addr %s367, 8
      %s369 = scalar_lea.vmem %s2, %s368
      %p370 = pneg %p122
      %p371 = pneg %p119
      %p372 = pneg %p143
      %p373 = pneg %p140
      %p374 = pneg %p164
      %p375 = pneg %p161
      %p376 = pneg %p185
      %p377 = pneg %p182
      %p378 = pneg %p213
      %p379 = pneg %p210
      %s380 = smul.u32 8, %s24
      %p381 = scmp.lt.s32.totalorder %s23, 1
      %s382 = scalar_select %p381, %s23, 1
      %p383 = scmp.lt.s32.totalorder %s380, 15
      %s384 = scalar_select %p383, %s380, 15
      %s385 = smul.addr %s384, 2
      %s386 = smul.addr %s382, 32
      %s387 = sadd.s32 %s385, %s386
      %s388 = smul.addr %s387, 8
      %s389 = scalar_lea.vmem %s6, %s388
      %p390 = pneg %p241
      %p391 = pneg %p238
      %p392 = scmp.lt.s32.totalorder %s23, 1
      %s393 = scalar_select %p392, %s23, 1
      %p394 = scmp.lt.s32.totalorder %s24, 1
      %s395 = scalar_select %p394, %s24, 1
      %s396 = smul.addr %s393, 2
      %s397 = sadd.s32 %s395, %s396
      %s398 = smul.addr %s397, 2
      %s399 = scalar_lea.vmem %s7, %s398
      %s400 = smul.u32 8, %s24
      %p401 = scmp.lt.s32.totalorder %s23, 1
      %s402 = scalar_select %p401, %s23, 1
      %p403 = scmp.lt.s32.totalorder %s400, 15
      %s404 = scalar_select %p403, %s400, 15
      %s405 = smul.addr %s404, 2
      %s406 = smul.addr %s402, 32
      %s407 = sadd.s32 %s405, %s406
      %s408 = smul.addr %s407, 8
      %s409 = scalar_lea.vmem %s0, %s408
      %s410 = smul.u32 8, %s24
      %s411 = ssub.s32 %s24, 1
      %p412 = scmp.gt.s32.totalorder %s411, 0
      %s413 = scalar_select %p412, %s411, 0
      %s414 = smul.u32 8, %s413
      %p415 = scmp.lt.s32.totalorder %s23, 1
      %s416 = scalar_select %p415, %s23, 1
      %p417 = scmp.lt.s32.totalorder %s414, 15
      %s418 = scalar_select %p417, %s414, 15
      %s419 = smul.addr %s418, 2
      %s420 = smul.addr %s416, 32
      %s421 = sadd.s32 %s419, %s420
      %s422 = smul.addr %s421, 8
      %s423 = scalar_lea.vmem %s1, %s422
      %s424 = ssub.s32 %s24, 1
      %p425 = scmp.gt.s32.totalorder %s424, 0
      %s426 = scalar_select %p425, %s424, 0
      %s427 = smul.u32 8, %s426
      %s428 = sadd.s32 %s24, 1
      %p429 = scmp.lt.s32.totalorder %s428, 1
      %s430 = scalar_select %p429, %s428, 1
      %s431 = smul.u32 8, %s430
      %p432 = scmp.lt.s32.totalorder %s23, 1
      %s433 = scalar_select %p432, %s23, 1
      %p434 = scmp.lt.s32.totalorder %s431, 15
      %s435 = scalar_select %p434, %s431, 15
      %s436 = smul.addr %s435, 2
      %s437 = smul.addr %s433, 32
      %s438 = sadd.s32 %s436, %s437
      %s439 = smul.addr %s438, 8
      %s440 = scalar_lea.vmem %s2, %s439
      %s441 = sadd.s32 %s24, 1
      %p442 = scmp.lt.s32.totalorder %s441, 1
      %s443 = scalar_select %p442, %s441, 1
      %s444 = smul.u32 8, %s443
      %s445 = smul.u32 8, %s24
      %p446 = scmp.lt.s32.totalorder %s23, 1
      %s447 = scalar_select %p446, %s23, 1
      %p448 = scmp.lt.s32.totalorder %s445, 15
      %s449 = scalar_select %p448, %s445, 15
      %s450 = smul.addr %s449, 2
      %s451 = smul.addr %s447, 32
      %s452 = sadd.s32 %s450, %s451
      %s453 = smul.addr %s452, 8
      %s454 = scalar_lea.vmem %s6, %s453
      %s455 = smul.u32 8, %s24
      %p456 = scmp.lt.s32.totalorder %s23, 1
      %s457 = scalar_select %p456, %s23, 1
      %p458 = scmp.lt.s32.totalorder %s24, 1
      %s459 = scalar_select %p458, %s24, 1
      %s460 = smul.addr %s457, 2
      %s461 = sadd.s32 %s459, %s460
      %s462 = smul.addr %s461, 2
      %s463 = scalar_lea.vmem %s7, %s462
      %v465 = vld [vmem:[%s409] sm:$0xff]
      %v466 = vld [vmem:[%s409 + $0x8] sm:$0xff]
      %v467 = vld [vmem:[%s409 + $0x10] sm:$0xff]
      %v468 = vld [vmem:[%s409 + $0x18] sm:$0xff]
      %v469 = vld [vmem:[%s409 + $0x20] sm:$0xff]
      %v470 = vld [vmem:[%s409 + $0x28] sm:$0xff]
      %v471 = vld [vmem:[%s409 + $0x30] sm:$0xff]
      %v472 = vld [vmem:[%s409 + $0x38] sm:$0xff]
      %v473 = vld [vmem:[%s409 + $0x40] sm:$0xff]
      %v474 = vld [vmem:[%s409 + $0x48] sm:$0xff]
      %v475 = vld [vmem:[%s409 + $0x50] sm:$0xff]
      %v476 = vld [vmem:[%s409 + $0x58] sm:$0xff]
      %v477 = vld [vmem:[%s409 + $0x60] sm:$0xff]
      %v478 = vld [vmem:[%s409 + $0x68] sm:$0xff]
      %v479 = vld [vmem:[%s409 + $0x70] sm:$0xff]
      %v480 = vld [vmem:[%s409 + $0x78] sm:$0xff]
      %v481 = vld [vmem:[%s4] sm:$0x1]
      %v483 = vlaneseq
      %v484 = vshrl.u32 %v483, 7
      %v485 = vsub.s32 0, %v484
      %v486 = vrot.slane %v481, %v485
      %v488 = vmul.f32 %v465, %v486
      %v489 = vmul.f32 %v466, %v486
      %v490 = vmul.f32 %v467, %v486
      %v491 = vmul.f32 %v468, %v486
      %v492 = vmul.f32 %v469, %v486
      %v493 = vmul.f32 %v470, %v486
      %v494 = vmul.f32 %v471, %v486
      %v495 = vmul.f32 %v472, %v486
      %v496 = vmul.f32 %v473, %v486
      %v497 = vmul.f32 %v474, %v486
      %v498 = vmul.f32 %v475, %v486
      %v499 = vmul.f32 %v476, %v486
      %v500 = vmul.f32 %v477, %v486
      %v501 = vmul.f32 %v478, %v486
      %v502 = vmul.f32 %v479, %v486
      %v503 = vmul.f32 %v480, %v486
      %v504 = vld [vmem:[%s5] sm:$0x1]
      %v506 = vlaneseq
      %v507 = vshrl.u32 %v506, 7
      %v508 = vsub.s32 0, %v507
      %v509 = vrot.slane %v504, %v508
      %v511 = vadd.f32 %v488, %v509
      %v512 = vadd.f32 %v489, %v509
      %v513 = vadd.f32 %v490, %v509
      %v514 = vadd.f32 %v491, %v509
      %v515 = vadd.f32 %v492, %v509
      %v516 = vadd.f32 %v493, %v509
      %v517 = vadd.f32 %v494, %v509
      %v518 = vadd.f32 %v495, %v509
      %v519 = vadd.f32 %v496, %v509
      %v520 = vadd.f32 %v497, %v509
      %v521 = vadd.f32 %v498, %v509
      %v522 = vadd.f32 %v499, %v509
      %v523 = vadd.f32 %v500, %v509
      %v524 = vadd.f32 %v501, %v509
      %v525 = vadd.f32 %v502, %v509
      %v526 = vadd.f32 %v503, %v509
      %v527 = vmax.f32 %v511, 0.0
      %v528 = vmax.f32 %v512, 0.0
      %v529 = vmax.f32 %v513, 0.0
      %v530 = vmax.f32 %v514, 0.0
      %v531 = vmax.f32 %v515, 0.0
      %v532 = vmax.f32 %v516, 0.0
      %v533 = vmax.f32 %v517, 0.0
      %v534 = vmax.f32 %v518, 0.0
      %v535 = vmax.f32 %v519, 0.0
      %v536 = vmax.f32 %v520, 0.0
      %v537 = vmax.f32 %v521, 0.0
      %v538 = vmax.f32 %v522, 0.0
      %v539 = vmax.f32 %v523, 0.0
      %v540 = vmax.f32 %v524, 0.0
      %v541 = vmax.f32 %v525, 0.0
      %v542 = vmax.f32 %v526, 0.0
      %v543 = vlaneseq
      %v544 = vshrl.u32 %v543, 7
      %v545 = vadd.s32 %v544, 8
      %v546 = vadd.s32 %v544, 16
      %v547 = vadd.s32 %v544, 24
      %v548 = vadd.s32 %v544, 32
      %v549 = vadd.s32 %v544, 40
      %v550 = vadd.s32 %v544, 48
      %v551 = vadd.s32 %v544, 56
      %v552 = vadd.s32 %v544, 64
      %v553 = vadd.s32 %v544, 72
      %v554 = vadd.s32 %v544, 80
      %v555 = vadd.s32 %v544, 88
      %v556 = vadd.s32 %v544, 96
      %v557 = vadd.s32 %v544, 104
      %v558 = vadd.s32 %v544, 112
      %v559 = vadd.s32 %v544, 120
      %vm560 = vcmp.lt.s32.totalorder %v544, 0
      %v561 = vsub.s32 0, %v544
      %v562 = vsel %vm560, %v561, %v544
      %v563 = vshrl.u32 %v562, 4
      %v564 = vand.u32 %v562, 15
      %v565 = vsub.s32 0, %v564
      %v566 = vsel %vm560, %v565, %v564
      %vm567 = vcmp.lt.s32.totalorder %v545, 0
      %v568 = vsub.s32 0, %v545
      %v569 = vsel %vm567, %v568, %v545
      %v570 = vshrl.u32 %v569, 4
      %v571 = vand.u32 %v569, 15
      %v572 = vsub.s32 0, %v571
      %v573 = vsel %vm567, %v572, %v571
      %vm574 = vcmp.lt.s32.totalorder %v546, 0
      %v575 = vsub.s32 0, %v546
      %v576 = vsel %vm574, %v575, %v546
      %v577 = vshrl.u32 %v576, 4
      %v578 = vand.u32 %v576, 15
      %v579 = vsub.s32 0, %v578
      %v580 = vsel %vm574, %v579, %v578
      %vm581 = vcmp.lt.s32.totalorder %v547, 0
      %v582 = vsub.s32 0, %v547
      %v583 = vsel %vm581, %v582, %v547
      %v584 = vshrl.u32 %v583, 4
      %v585 = vand.u32 %v583, 15
      %v586 = vsub.s32 0, %v585
      %v587 = vsel %vm581, %v586, %v585
      %vm588 = vcmp.lt.s32.totalorder %v548, 0
      %v589 = vsub.s32 0, %v548
      %v590 = vsel %vm588, %v589, %v548
      %v591 = vshrl.u32 %v590, 4
      %v592 = vand.u32 %v590, 15
      %v593 = vsub.s32 0, %v592
      %v594 = vsel %vm588, %v593, %v592
      %vm595 = vcmp.lt.s32.totalorder %v549, 0
      %v596 = vsub.s32 0, %v549
      %v597 = vsel %vm595, %v596, %v549
      %v598 = vshrl.u32 %v597, 4
      %v599 = vand.u32 %v597, 15
      %v600 = vsub.s32 0, %v599
      %v601 = vsel %vm595, %v600, %v599
      %vm602 = vcmp.lt.s32.totalorder %v550, 0
      %v603 = vsub.s32 0, %v550
      %v604 = vsel %vm602, %v603, %v550
      %v605 = vshrl.u32 %v604, 4
      %v606 = vand.u32 %v604, 15
      %v607 = vsub.s32 0, %v606
      %v608 = vsel %vm602, %v607, %v606
      %vm609 = vcmp.lt.s32.totalorder %v551, 0
      %v610 = vsub.s32 0, %v551
      %v611 = vsel %vm609, %v610, %v551
      %v612 = vshrl.u32 %v611, 4
      %v613 = vand.u32 %v611, 15
      %v614 = vsub.s32 0, %v613
      %v615 = vsel %vm609, %v614, %v613
      %vm616 = vcmp.lt.s32.totalorder %v552, 0
      %v617 = vsub.s32 0, %v552
      %v618 = vsel %vm616, %v617, %v552
      %v619 = vshrl.u32 %v618, 4
      %v620 = vand.u32 %v618, 15
      %v621 = vsub.s32 0, %v620
      %v622 = vsel %vm616, %v621, %v620
      %vm623 = vcmp.lt.s32.totalorder %v553, 0
      %v624 = vsub.s32 0, %v553
      %v625 = vsel %vm623, %v624, %v553
      %v626 = vshrl.u32 %v625, 4
      %v627 = vand.u32 %v625, 15
      %v628 = vsub.s32 0, %v627
      %v629 = vsel %vm623, %v628, %v627
      %vm630 = vcmp.lt.s32.totalorder %v554, 0
      %v631 = vsub.s32 0, %v554
      %v632 = vsel %vm630, %v631, %v554
      %v633 = vshrl.u32 %v632, 4
      %v634 = vand.u32 %v632, 15
      %v635 = vsub.s32 0, %v634
      %v636 = vsel %vm630, %v635, %v634
      %vm637 = vcmp.lt.s32.totalorder %v555, 0
      %v638 = vsub.s32 0, %v555
      %v639 = vsel %vm637, %v638, %v555
      %v640 = vshrl.u32 %v639, 4
      %v641 = vand.u32 %v639, 15
      %v642 = vsub.s32 0, %v641
      %v643 = vsel %vm637, %v642, %v641
      %vm644 = vcmp.lt.s32.totalorder %v556, 0
      %v645 = vsub.s32 0, %v556
      %v646 = vsel %vm644, %v645, %v556
      %v647 = vshrl.u32 %v646, 4
      %v648 = vand.u32 %v646, 15
      %v649 = vsub.s32 0, %v648
      %v650 = vsel %vm644, %v649, %v648
      %vm651 = vcmp.lt.s32.totalorder %v557, 0
      %v652 = vsub.s32 0, %v557
      %v653 = vsel %vm651, %v652, %v557
      %v654 = vshrl.u32 %v653, 4
      %v655 = vand.u32 %v653, 15
      %v656 = vsub.s32 0, %v655
      %v657 = vsel %vm651, %v656, %v655
      %vm658 = vcmp.lt.s32.totalorder %v558, 0
      %v659 = vsub.s32 0, %v558
      %v660 = vsel %vm658, %v659, %v558
      %v661 = vshrl.u32 %v660, 4
      %v662 = vand.u32 %v660, 15
      %v663 = vsub.s32 0, %v662
      %v664 = vsel %vm658, %v663, %v662
      %vm665 = vcmp.lt.s32.totalorder %v559, 0
      %v666 = vsub.s32 0, %v559
      %v667 = vsel %vm665, %v666, %v559
      %v668 = vshrl.u32 %v667, 4
      %v669 = vand.u32 %v667, 15
      %v670 = vsub.s32 0, %v669
      %v671 = vsel %vm665, %v670, %v669
      %vm672 = vcmp.ne.s32.totalorder %v566, 0
      %vm673 = vcmp.ne.s32.totalorder %v573, 0
      %vm674 = vcmp.ne.s32.totalorder %v580, 0
      %vm675 = vcmp.ne.s32.totalorder %v587, 0
      %vm676 = vcmp.ne.s32.totalorder %v594, 0
      %vm677 = vcmp.ne.s32.totalorder %v601, 0
      %vm678 = vcmp.ne.s32.totalorder %v608, 0
      %vm679 = vcmp.ne.s32.totalorder %v615, 0
      %vm680 = vcmp.ne.s32.totalorder %v622, 0
      %vm681 = vcmp.ne.s32.totalorder %v629, 0
      %vm682 = vcmp.ne.s32.totalorder %v636, 0
      %vm683 = vcmp.ne.s32.totalorder %v643, 0
      %vm684 = vcmp.ne.s32.totalorder %v650, 0
      %vm685 = vcmp.ne.s32.totalorder %v657, 0
      %vm686 = vcmp.ne.s32.totalorder %v664, 0
      %vm687 = vcmp.ne.s32.totalorder %v671, 0
      %vm688 = vcmp.lt.s32.totalorder %v566, 0
      %vm689 = vcmp.lt.s32.totalorder %v573, 0
      %vm690 = vcmp.lt.s32.totalorder %v580, 0
      %vm691 = vcmp.lt.s32.totalorder %v587, 0
      %vm692 = vcmp.lt.s32.totalorder %v594, 0
      %vm693 = vcmp.lt.s32.totalorder %v601, 0
      %vm694 = vcmp.lt.s32.totalorder %v608, 0
      %vm695 = vcmp.lt.s32.totalorder %v615, 0
      %vm696 = vcmp.lt.s32.totalorder %v622, 0
      %vm697 = vcmp.lt.s32.totalorder %v629, 0
      %vm698 = vcmp.lt.s32.totalorder %v636, 0
      %vm699 = vcmp.lt.s32.totalorder %v643, 0
      %vm700 = vcmp.lt.s32.totalorder %v650, 0
      %vm701 = vcmp.lt.s32.totalorder %v657, 0
      %vm702 = vcmp.lt.s32.totalorder %v664, 0
      %vm703 = vcmp.lt.s32.totalorder %v671, 0
      %vm704 = vmand %vm688, %vm672
      %vm705 = vmand %vm689, %vm673
      %vm706 = vmand %vm690, %vm674
      %vm707 = vmand %vm691, %vm675
      %vm708 = vmand %vm692, %vm676
      %vm709 = vmand %vm693, %vm677
      %vm710 = vmand %vm694, %vm678
      %vm711 = vmand %vm695, %vm679
      %vm712 = vmand %vm696, %vm680
      %vm713 = vmand %vm697, %vm681
      %vm714 = vmand %vm698, %vm682
      %vm715 = vmand %vm699, %vm683
      %vm716 = vmand %vm700, %vm684
      %vm717 = vmand %vm701, %vm685
      %vm718 = vmand %vm702, %vm686
      %vm719 = vmand %vm703, %vm687
      %v720 = vadd.s32 %v566, 16
      %v721 = vadd.s32 %v573, 16
      %v722 = vadd.s32 %v580, 16
      %v723 = vadd.s32 %v587, 16
      %v724 = vadd.s32 %v594, 16
      %v725 = vadd.s32 %v601, 16
      %v726 = vadd.s32 %v608, 16
      %v727 = vadd.s32 %v615, 16
      %v728 = vadd.s32 %v622, 16
      %v729 = vadd.s32 %v629, 16
      %v730 = vadd.s32 %v636, 16
      %v731 = vadd.s32 %v643, 16
      %v732 = vadd.s32 %v650, 16
      %v733 = vadd.s32 %v657, 16
      %v734 = vadd.s32 %v664, 16
      %v735 = vadd.s32 %v671, 16
      %v736 = vsel %vm704, %v720, %v566
      %v737 = vsel %vm705, %v721, %v573
      %v738 = vsel %vm706, %v722, %v580
      %v739 = vsel %vm707, %v723, %v587
      %v740 = vsel %vm708, %v724, %v594
      %v741 = vsel %vm709, %v725, %v601
      %v742 = vsel %vm710, %v726, %v608
      %v743 = vsel %vm711, %v727, %v615
      %v744 = vsel %vm712, %v728, %v622
      %v745 = vsel %vm713, %v729, %v629
      %v746 = vsel %vm714, %v730, %v636
      %v747 = vsel %vm715, %v731, %v643
      %v748 = vsel %vm716, %v732, %v650
      %v749 = vsel %vm717, %v733, %v657
      %v750 = vsel %vm718, %v734, %v664
      %v751 = vsel %vm719, %v735, %v671
      %vm752 = vcmp.eq.s32.totalorder %v736, 0
      %vm753 = vcmp.eq.s32.totalorder %v737, 0
      %vm754 = vcmp.eq.s32.totalorder %v738, 0
      %vm755 = vcmp.eq.s32.totalorder %v739, 0
      %vm756 = vcmp.eq.s32.totalorder %v740, 0
      %vm757 = vcmp.eq.s32.totalorder %v741, 0
      %vm758 = vcmp.eq.s32.totalorder %v742, 0
      %vm759 = vcmp.eq.s32.totalorder %v743, 0
      %vm760 = vcmp.eq.s32.totalorder %v744, 0
      %vm761 = vcmp.eq.s32.totalorder %v745, 0
      %vm762 = vcmp.eq.s32.totalorder %v746, 0
      %vm763 = vcmp.eq.s32.totalorder %v747, 0
      %vm764 = vcmp.eq.s32.totalorder %v748, 0
      %vm765 = vcmp.eq.s32.totalorder %v749, 0
      %vm766 = vcmp.eq.s32.totalorder %v750, 0
      %vm767 = vcmp.eq.s32.totalorder %v751, 0
      %v768 = vrot.slane %v527, 7
      %v769 = vrot.slane %v528, 7
      %v770 = vrot.slane %v529, 7
      %v771 = vrot.slane %v530, 7
      %v772 = vrot.slane %v531, 7
      %v773 = vrot.slane %v532, 7
      %v774 = vrot.slane %v533, 7
      %v775 = vrot.slane %v534, 7
      %v776 = vrot.slane %v535, 7
      %v777 = vrot.slane %v536, 7
      %v778 = vrot.slane %v537, 7
      %v779 = vrot.slane %v538, 7
      %v780 = vrot.slane %v539, 7
      %v781 = vrot.slane %v540, 7
      %v782 = vrot.slane %v541, 7
      %v783 = vrot.slane %v542, 7
      %vm784 = vcmp.lt.s32.totalorder %v544, 1
      %v785 = vsel %vm784, %v782, %v783
      %v786 = vsel %vm784, %v781, %v782
      %v787 = vsel %vm784, %v780, %v781
      %v788 = vsel %vm784, %v779, %v780
      %v789 = vsel %vm784, %v778, %v779
      %v790 = vsel %vm784, %v777, %v778
      %v791 = vsel %vm784, %v776, %v777
      %v792 = vsel %vm784, %v775, %v776
      %v793 = vsel %vm784, %v774, %v775
      %v794 = vsel %vm784, %v773, %v774
      %v795 = vsel %vm784, %v772, %v773
      %v796 = vsel %vm784, %v771, %v772
      %v797 = vsel %vm784, %v770, %v771
      %v798 = vsel %vm784, %v769, %v770
      %v799 = vsel %vm784, %v768, %v769
      %v800 = vsel %vm784, %v783, %v768
      %v801 = vsel %vm752, 0.0, %v800
      %v802 = vsel %vm753, 0.0, %v799
      %v803 = vsel %vm754, 0.0, %v798
      %v804 = vsel %vm755, 0.0, %v797
      %v805 = vsel %vm756, 0.0, %v796
      %v806 = vsel %vm757, 0.0, %v795
      %v807 = vsel %vm758, 0.0, %v794
      %v808 = vsel %vm759, 0.0, %v793
      %v809 = vsel %vm760, 0.0, %v792
      %v810 = vsel %vm761, 0.0, %v791
      %v811 = vsel %vm762, 0.0, %v790
      %v812 = vsel %vm763, 0.0, %v789
      %v813 = vsel %vm764, 0.0, %v788
      %v814 = vsel %vm765, 0.0, %v787
      %v815 = vsel %vm766, 0.0, %v786
      %v816 = vsel %vm767, 0.0, %v785
      %vm817 = vcmp.eq.s32.totalorder %v736, 15
      %vm818 = vcmp.eq.s32.totalorder %v737, 15
      %vm819 = vcmp.eq.s32.totalorder %v738, 15
      %vm820 = vcmp.eq.s32.totalorder %v739, 15
      %vm821 = vcmp.eq.s32.totalorder %v740, 15
      %vm822 = vcmp.eq.s32.totalorder %v741, 15
      %vm823 = vcmp.eq.s32.totalorder %v742, 15
      %vm824 = vcmp.eq.s32.totalorder %v743, 15
      %vm825 = vcmp.eq.s32.totalorder %v744, 15
      %vm826 = vcmp.eq.s32.totalorder %v745, 15
      %vm827 = vcmp.eq.s32.totalorder %v746, 15
      %vm828 = vcmp.eq.s32.totalorder %v747, 15
      %vm829 = vcmp.eq.s32.totalorder %v748, 15
      %vm830 = vcmp.eq.s32.totalorder %v749, 15
      %vm831 = vcmp.eq.s32.totalorder %v750, 15
      %vm832 = vcmp.eq.s32.totalorder %v751, 15
      %v833 = vrot.slane %v527, 1
      %v834 = vrot.slane %v528, 1
      %v835 = vrot.slane %v529, 1
      %v836 = vrot.slane %v530, 1
      %v837 = vrot.slane %v531, 1
      %v838 = vrot.slane %v532, 1
      %v839 = vrot.slane %v533, 1
      %v840 = vrot.slane %v534, 1
      %v841 = vrot.slane %v535, 1
      %v842 = vrot.slane %v536, 1
      %v843 = vrot.slane %v537, 1
      %v844 = vrot.slane %v538, 1
      %v845 = vrot.slane %v539, 1
      %v846 = vrot.slane %v540, 1
      %v847 = vrot.slane %v541, 1
      %v848 = vrot.slane %v542, 1
      %vm849 = vcmp.lt.s32.totalorder %v544, 7
      %v850 = vsel %vm849, %v847, %v848
      %v851 = vsel %vm849, %v846, %v847
      %v852 = vsel %vm849, %v845, %v846
      %v853 = vsel %vm849, %v844, %v845
      %v854 = vsel %vm849, %v843, %v844
      %v855 = vsel %vm849, %v842, %v843
      %v856 = vsel %vm849, %v841, %v842
      %v857 = vsel %vm849, %v840, %v841
      %v858 = vsel %vm849, %v839, %v840
      %v859 = vsel %vm849, %v838, %v839
      %v860 = vsel %vm849, %v837, %v838
      %v861 = vsel %vm849, %v836, %v837
      %v862 = vsel %vm849, %v835, %v836
      %v863 = vsel %vm849, %v834, %v835
      %v864 = vsel %vm849, %v833, %v834
      %v865 = vsel %vm849, %v848, %v833
      %v866 = vsel %vm817, 0.0, %v864
      %v867 = vsel %vm818, 0.0, %v863
      %v868 = vsel %vm819, 0.0, %v862
      %v869 = vsel %vm820, 0.0, %v861
      %v870 = vsel %vm821, 0.0, %v860
      %v871 = vsel %vm822, 0.0, %v859
      %v872 = vsel %vm823, 0.0, %v858
      %v873 = vsel %vm824, 0.0, %v857
      %v874 = vsel %vm825, 0.0, %v856
      %v875 = vsel %vm826, 0.0, %v855
      %v876 = vsel %vm827, 0.0, %v854
      %v877 = vsel %vm828, 0.0, %v853
      %v878 = vsel %vm829, 0.0, %v852
      %v879 = vsel %vm830, 0.0, %v851
      %v880 = vsel %vm831, 0.0, %v850
      %v881 = vsel %vm832, 0.0, %v865
      %v882 = vpack.c.bf16 %v802, %v801
      %v883 = vpack.c.bf16 %v804, %v803
      %v884 = vpack.c.bf16 %v806, %v805
      %v885 = vpack.c.bf16 %v808, %v807
      %v886 = vpack.c.bf16 %v810, %v809
      %v887 = vpack.c.bf16 %v812, %v811
      %v888 = vpack.c.bf16 %v814, %v813
      %v889 = vpack.c.bf16 %v816, %v815
      %890 = vst [vmem:[#allocation2 + $0x18] sm:$0xff] %v882
      %891 = vst [vmem:[#allocation2 + $0x30] sm:$0xff] %v883
      %892 = vst [vmem:[#allocation2 + $0x48] sm:$0xff] %v884
      %893 = vst [vmem:[#allocation2 + $0x60] sm:$0xff] %v885
      %894 = vst [vmem:[#allocation2 + $0x78] sm:$0xff] %v886
      %895 = vst [vmem:[#allocation2 + $0x90] sm:$0xff] %v887
      %896 = vst [vmem:[#allocation2 + $0xa8] sm:$0xff] %v888
      %897 = vst [vmem:[#allocation2 + $0xc0] sm:$0xff] %v889
      %v898 = vpack.c.bf16 %v528, %v527
      %v899 = vpack.c.bf16 %v530, %v529
      %v900 = vpack.c.bf16 %v532, %v531
      %v901 = vpack.c.bf16 %v534, %v533
      %v902 = vpack.c.bf16 %v536, %v535
      %v903 = vpack.c.bf16 %v538, %v537
      %v904 = vpack.c.bf16 %v540, %v539
      %v905 = vpack.c.bf16 %v542, %v541
      %906 = vst [vmem:[#allocation2 + $0x20] sm:$0xff] %v898
      %907 = vst [vmem:[#allocation2 + $0x38] sm:$0xff] %v899
      %908 = vst [vmem:[#allocation2 + $0x50] sm:$0xff] %v900
      %909 = vst [vmem:[#allocation2 + $0x68] sm:$0xff] %v901
      %910 = vst [vmem:[#allocation2 + $0x80] sm:$0xff] %v902
      %911 = vst [vmem:[#allocation2 + $0x98] sm:$0xff] %v903
      %912 = vst [vmem:[#allocation2 + $0xb0] sm:$0xff] %v904
      %913 = vst [vmem:[#allocation2 + $0xc8] sm:$0xff] %v905
      %v914 = vpack.c.bf16 %v867, %v866
      %v915 = vpack.c.bf16 %v869, %v868
      %v916 = vpack.c.bf16 %v871, %v870
      %v917 = vpack.c.bf16 %v873, %v872
      %v918 = vpack.c.bf16 %v875, %v874
      %v919 = vpack.c.bf16 %v877, %v876
      %v920 = vpack.c.bf16 %v879, %v878
      %v921 = vpack.c.bf16 %v881, %v880
      %922 = vst [vmem:[#allocation2 + $0x28] sm:$0xff] %v914
      %923 = vst [vmem:[#allocation2 + $0x40] sm:$0xff] %v915
      %924 = vst [vmem:[#allocation2 + $0x58] sm:$0xff] %v916
      %925 = vst [vmem:[#allocation2 + $0x70] sm:$0xff] %v917
      %926 = vst [vmem:[#allocation2 + $0x88] sm:$0xff] %v918
      %927 = vst [vmem:[#allocation2 + $0xa0] sm:$0xff] %v919
      %928 = vst [vmem:[#allocation2 + $0xb8] sm:$0xff] %v920
      %929 = vst [vmem:[#allocation2 + $0xd0] sm:$0xff] %v921
      %p930 = scmp.eq.s32.totalorder %s24, 0
      // Predicated region
      $region45: #{doubleconv_forward.4} parent=43 // pred_check
        %p931 = pneg %p930
      $region46: #{doubleconv_forward.4} parent=43 // pred_check_branch
        %933 = sbr.rel (%p931) target = $region48
      $region47: #{doubleconv_forward.4} parent=43 // pred_region
        %934 = vst [vmem:[#allocation2] sm:$0xff] 0
        %935 = vst [vmem:[#allocation2 + $0x8] sm:$0xff] 0
        %936 = vst [vmem:[#allocation2 + $0x10] sm:$0xff] 0
      $region48: #{doubleconv_forward.4} parent=43 // pred_fallthru
        _
      %p937 = scmp.gt.s32.totalorder %s24, 0
      // Predicated region
      $region49: #{doubleconv_forward.4} parent=43 // pred_check
        %p938 = pneg %p937
      $region50: #{doubleconv_forward.4} parent=43 // pred_check_branch
        %940 = sbr.rel (%p938) target = $region52
      $region51: #{doubleconv_forward.4} parent=43 // pred_region
        %s941 = scalar_lea.vmem %s423, 112
        %v942 = vld [vmem:[%s941] sm:$0xff]
        %v943 = vld [vmem:[%s941 + $0x8] sm:$0xff]
        %v944 = vld [vmem:[%s4] sm:$0x1]
        %v946 = vlaneseq
        %v947 = vshrl.u32 %v946, 7
        %v948 = vsub.s32 0, %v947
        %v949 = vrot.slane %v944, %v948
        %v951 = vmul.f32 %v942, %v949
        %v952 = vmul.f32 %v943, %v949
        %v953 = vld [vmem:[%s5] sm:$0x1]
        %v955 = vlaneseq
        %v956 = vshrl.u32 %v955, 7
        %v957 = vsub.s32 0, %v956
        %v958 = vrot.slane %v953, %v957
        %v960 = vadd.f32 %v951, %v958
        %v961 = vadd.f32 %v952, %v958
        %v962 = vmax.f32 %v960, 0.0
        %v963 = vmax.f32 %v961, 0.0
        %v964 = vrot.slane %v962, 7
        %v965 = vrot.slane %v963, 7
        %v966 = vsel %vm784, %v964, %v965
        %v967 = vsel %vm784, %v965, %v964
        %v968 = vsel %vm752, 0.0, %v967
        %v969 = vsel %vm753, 0.0, %v966
        %v970 = vrot.slane %v962, 1
        %v971 = vrot.slane %v963, 1
        %v972 = vsel %vm849, %v970, %v971
        %v973 = vsel %vm849, %v971, %v970
        %v974 = vsel %vm817, 0.0, %v972
        %v975 = vsel %vm818, 0.0, %v973
        %v976 = vpack.c.bf16 %v969, %v968
        %977 = vst [vmem:[#allocation2] sm:$0xff] %v976
        %v978 = vpack.c.bf16 %v963, %v962
        %979 = vst [vmem:[#allocation2 + $0x8] sm:$0xff] %v978
        %v980 = vpack.c.bf16 %v975, %v974
        %981 = vst [vmem:[#allocation2 + $0x10] sm:$0xff] %v980
      $region52: #{doubleconv_forward.4} parent=43 // pred_fallthru
        _
      %p982 = scmp.eq.s32.totalorder %s24, 1
      // Predicated region
      $region53: #{doubleconv_forward.4} parent=43 // pred_check
        %p983 = pneg %p982
      $region54: #{doubleconv_forward.4} parent=43 // pred_check_branch
        %985 = sbr.rel (%p983) target = $region56
      $region55: #{doubleconv_forward.4} parent=43 // pred_region
        %986 = vst [vmem:[#allocation2 + $0xd8] sm:$0xff] 0
        %987 = vst [vmem:[#allocation2 + $0xe0] sm:$0xff] 0
        %988 = vst [vmem:[#allocation2 + $0xe8] sm:$0xff] 0
      $region56: #{doubleconv_forward.4} parent=43 // pred_fallthru
        _
      %p989 = scmp.lt.s32.totalorder %s24, 1
      // Predicated region
      $region57: #{doubleconv_forward.4} parent=43 // pred_check
        %p990 = pneg %p989
      $region58: #{doubleconv_forward.4} parent=43 // pred_check_branch
        %992 = sbr.rel (%p990) target = $region60
      $region59: #{doubleconv_forward.4} parent=43 // pred_region
        %v993 = vld [vmem:[%s440] sm:$0xff]
        %v994 = vld [vmem:[%s440 + $0x8] sm:$0xff]
        %v995 = vld [vmem:[%s4] sm:$0x1]
        %v997 = vlaneseq
        %v998 = vshrl.u32 %v997, 7
        %v999 = vsub.s32 0, %v998
        %v1000 = vrot.slane %v995, %v999
        %v1002 = vmul.f32 %v993, %v1000
        %v1003 = vmul.f32 %v994, %v1000
        %v1004 = vld [vmem:[%s5] sm:$0x1]
        %v1006 = vlaneseq
        %v1007 = vshrl.u32 %v1006, 7
        %v1008 = vsub.s32 0, %v1007
        %v1009 = vrot.slane %v1004, %v1008
        %v1011 = vadd.f32 %v1002, %v1009
        %v1012 = vadd.f32 %v1003, %v1009
        %v1013 = vmax.f32 %v1011, 0.0
        %v1014 = vmax.f32 %v1012, 0.0
        %v1015 = vrot.slane %v1013, 7
        %v1016 = vrot.slane %v1014, 7
        %v1017 = vsel %vm784, %v1015, %v1016
        %v1018 = vsel %vm784, %v1016, %v1015
        %v1019 = vsel %vm752, 0.0, %v1018
        %v1020 = vsel %vm753, 0.0, %v1017
        %v1021 = vrot.slane %v1013, 1
        %v1022 = vrot.slane %v1014, 1
        %v1023 = vsel %vm849, %v1021, %v1022
        %v1024 = vsel %vm849, %v1022, %v1021
        %v1025 = vsel %vm817, 0.0, %v1023
        %v1026 = vsel %vm818, 0.0, %v1024
        %v1027 = vpack.c.bf16 %v1020, %v1019
        %1028 = vst [vmem:[#allocation2 + $0xd8] sm:$0xff] %v1027
        %v1029 = vpack.c.bf16 %v1014, %v1013
        %1030 = vst [vmem:[#allocation2 + $0xe0] sm:$0xff] %v1029
        %v1031 = vpack.c.bf16 %v1026, %v1025
        %1032 = vst [vmem:[#allocation2 + $0xe8] sm:$0xff] %v1031
      $region60: #{doubleconv_forward.4} parent=43 // pred_fallthru
        _
      %v1033 = vld [vmem:[#allocation2] sm:$0xff]
      %v1034 = vld [vmem:[#allocation2 + $0x8] sm:$0xff]
      %v1035 = vld [vmem:[#allocation2 + $0x10] sm:$0xff]
      %v1036 = vld [vmem:[#allocation2 + $0x18] sm:$0xff]
      %v1037 = vld [vmem:[#allocation2 + $0x20] sm:$0xff]
      %v1038 = vld [vmem:[#allocation2 + $0x28] sm:$0xff]
      %v1039 = vld [vmem:[#allocation2 + $0x30] sm:$0xff]
      %v1040 = vld [vmem:[#allocation2 + $0x38] sm:$0xff]
      %v1041 = vld [vmem:[#allocation2 + $0x40] sm:$0xff]
      %v1042 = vld [vmem:[#allocation2 + $0x48] sm:$0xff]
      %v1043 = vld [vmem:[#allocation2 + $0x50] sm:$0xff]
      %v1044 = vld [vmem:[#allocation2 + $0x58] sm:$0xff]
      %v1045 = vld [vmem:[#allocation2 + $0x60] sm:$0xff]
      %v1046 = vld [vmem:[#allocation2 + $0x68] sm:$0xff]
      %v1047 = vld [vmem:[#allocation2 + $0x70] sm:$0xff]
      %v1048 = vld [vmem:[#allocation2 + $0x78] sm:$0xff]
      %v1049 = vld [vmem:[#allocation2 + $0x80] sm:$0xff]
      %v1050 = vld [vmem:[#allocation2 + $0x88] sm:$0xff]
      %v1051 = vld [vmem:[#allocation2 + $0x90] sm:$0xff]
      %v1052 = vld [vmem:[#allocation2 + $0x98] sm:$0xff]
      %v1053 = vld [vmem:[#allocation2 + $0xa0] sm:$0xff]
      %v1054 = vld [vmem:[#allocation2 + $0xa8] sm:$0xff]
      %v1055 = vld [vmem:[#allocation2 + $0xb0] sm:$0xff]
      %v1056 = vld [vmem:[#allocation2 + $0xb8] sm:$0xff]
      %v1057 = vld [vmem:[%s3] sm:$0xf]
      %v1058 = vld [vmem:[%s3 + $0x4] sm:$0xf]
      %v1059 = vld [vmem:[%s3 + $0x8] sm:$0xf]
      %v1060 = vld [vmem:[%s3 + $0xc] sm:$0xf]
      %v1061 = vld [vmem:[%s3 + $0x10] sm:$0xf]
      %v1062 = vld [vmem:[%s3 + $0x14] sm:$0xf]
      %v1063 = vld [vmem:[%s3 + $0x18] sm:$0xf]
      %v1064 = vld [vmem:[%s3 + $0x1c] sm:$0xf]
      %v1065 = vld [vmem:[%s3 + $0x20] sm:$0xf]
      %v1066 = vld [vmem:[%s3 + $0x24] sm:$0xf]
      %v1067 = vld [vmem:[%s3 + $0x28] sm:$0xf]
      %v1068 = vld [vmem:[%s3 + $0x2c] sm:$0xf]
      %v1069 = vld [vmem:[%s3 + $0x30] sm:$0xf]
      %v1070 = vld [vmem:[%s3 + $0x34] sm:$0xf]
      %v1071 = vld [vmem:[%s3 + $0x38] sm:$0xf]
      %v1072 = vld [vmem:[%s3 + $0x3c] sm:$0xf]
      %v1073 = vld [vmem:[%s3 + $0x40] sm:$0xf]
      %v1074 = vld [vmem:[%s3 + $0x44] sm:$0xf]
      %v1075 = vld [vmem:[%s3 + $0x48] sm:$0xf]
      %v1076 = vld [vmem:[%s3 + $0x4c] sm:$0xf]
      %v1077 = vld [vmem:[%s3 + $0x50] sm:$0xf]
      %v1078 = vld [vmem:[%s3 + $0x54] sm:$0xf]
      %v1079 = vld [vmem:[%s3 + $0x58] sm:$0xf]
      %v1080 = vld [vmem:[%s3 + $0x5c] sm:$0xf]
      %v1081 = vld [vmem:[%s3 + $0x60] sm:$0xf]
      %v1082 = vld [vmem:[%s3 + $0x64] sm:$0xf]
      %v1083 = vld [vmem:[%s3 + $0x68] sm:$0xf]
      %v1084 = vld [vmem:[%s3 + $0x6c] sm:$0xf]
      %v1085 = vld [vmem:[%s3 + $0x70] sm:$0xf]
      %v1086 = vld [vmem:[%s3 + $0x74] sm:$0xf]
      %v1087 = vld [vmem:[%s3 + $0x78] sm:$0xf]
      %v1088 = vld [vmem:[%s3 + $0x7c] sm:$0xf]
      %v1089 = vld [vmem:[%s3 + $0x80] sm:$0xf]
      %v1090 = vld [vmem:[%s3 + $0x84] sm:$0xf]
      %v1091 = vld [vmem:[%s3 + $0x88] sm:$0xf]
      %v1092 = vld [vmem:[%s3 + $0x8c] sm:$0xf]
      %v1093 = vld [vmem:[%s3 + $0x90] sm:$0xf]
      %v1094 = vld [vmem:[%s3 + $0x94] sm:$0xf]
      %v1095 = vld [vmem:[%s3 + $0x98] sm:$0xf]
      %v1096 = vld [vmem:[%s3 + $0x9c] sm:$0xf]
      %v1097 = vld [vmem:[%s3 + $0xa0] sm:$0xf]
      %v1098 = vld [vmem:[%s3 + $0xa4] sm:$0xf]
      %v1099 = vld [vmem:[%s3 + $0xa8] sm:$0xf]
      %v1100 = vld [vmem:[%s3 + $0xac] sm:$0xf]
      %v1101 = vld [vmem:[%s3 + $0xb0] sm:$0xf]
      %v1102 = vld [vmem:[%s3 + $0xb4] sm:$0xf]
      %v1103 = vld [vmem:[%s3 + $0xb8] sm:$0xf]
      %v1104 = vld [vmem:[%s3 + $0xbc] sm:$0xf]
      %v1153 = vunpack.c.l.b16 %v1057
      %v1154 = vunpack.c.l.b16 %v1058
      %v1155 = vunpack.c.l.b16 %v1059
      %v1156 = vunpack.c.l.b16 %v1060
      %v1157 = vunpack.c.l.b16 %v1061
      %v1158 = vunpack.c.l.b16 %v1062
      %v1159 = vunpack.c.l.b16 %v1063
      %v1160 = vunpack.c.l.b16 %v1064
      %v1161 = vunpack.c.l.b16 %v1065
      %v1162 = vunpack.c.l.b16 %v1066
      %v1163 = vunpack.c.l.b16 %v1067
      %v1164 = vunpack.c.l.b16 %v1068
      %v1165 = vunpack.c.l.b16 %v1069
      %v1166 = vunpack.c.l.b16 %v1070
      %v1167 = vunpack.c.l.b16 %v1071
      %v1168 = vunpack.c.l.b16 %v1072
      %v1169 = vunpack.c.l.b16 %v1073
      %v1170 = vunpack.c.l.b16 %v1074
      %v1171 = vunpack.c.l.b16 %v1075
      %v1172 = vunpack.c.l.b16 %v1076
      %v1173 = vunpack.c.l.b16 %v1077
      %v1174 = vunpack.c.l.b16 %v1078
      %v1175 = vunpack.c.l.b16 %v1079
      %v1176 = vunpack.c.l.b16 %v1080
      %v1177 = vunpack.c.l.b16 %v1081
      %v1178 = vunpack.c.l.b16 %v1082
      %v1179 = vunpack.c.l.b16 %v1083
      %v1180 = vunpack.c.l.b16 %v1084
      %v1181 = vunpack.c.l.b16 %v1085
      %v1182 = vunpack.c.l.b16 %v1086
      %v1183 = vunpack.c.l.b16 %v1087
      %v1184 = vunpack.c.l.b16 %v1088
      %v1185 = vunpack.c.l.b16 %v1089
      %v1186 = vunpack.c.l.b16 %v1090
      %v1187 = vunpack.c.l.b16 %v1091
      %v1188 = vunpack.c.l.b16 %v1092
      %v1189 = vunpack.c.l.b16 %v1093
      %v1190 = vunpack.c.l.b16 %v1094
      %v1191 = vunpack.c.l.b16 %v1095
      %v1192 = vunpack.c.l.b16 %v1096
      %v1193 = vunpack.c.l.b16 %v1097
      %v1194 = vunpack.c.l.b16 %v1098
      %v1195 = vunpack.c.l.b16 %v1099
      %v1196 = vunpack.c.l.b16 %v1100
      %v1197 = vunpack.c.l.b16 %v1101
      %v1198 = vunpack.c.l.b16 %v1102
      %v1199 = vunpack.c.l.b16 %v1103
      %v1200 = vunpack.c.l.b16 %v1104
      %v1201 = vpack.c.b16 %v1154, %v1153
      %v1202 = vpack.c.b16 %v1156, %v1155
      %v1203 = vpack.c.b16 %v1158, %v1157
      %v1204 = vpack.c.b16 %v1160, %v1159
      %v1205 = vpack.c.b16 %v1162, %v1161
      %v1206 = vpack.c.b16 %v1164, %v1163
      %v1207 = vpack.c.b16 %v1166, %v1165
      %v1208 = vpack.c.b16 %v1168, %v1167
      %v1209 = vpack.c.b16 %v1170, %v1169
      %v1210 = vpack.c.b16 %v1172, %v1171
      %v1211 = vpack.c.b16 %v1174, %v1173
      %v1212 = vpack.c.b16 %v1176, %v1175
      %v1213 = vpack.c.b16 %v1178, %v1177
      %v1214 = vpack.c.b16 %v1180, %v1179
      %v1215 = vpack.c.b16 %v1182, %v1181
      %v1216 = vpack.c.b16 %v1184, %v1183
      %v1217 = vpack.c.b16 %v1186, %v1185
      %v1218 = vpack.c.b16 %v1188, %v1187
      %v1219 = vpack.c.b16 %v1190, %v1189
      %v1220 = vpack.c.b16 %v1192, %v1191
      %v1221 = vpack.c.b16 %v1194, %v1193
      %v1222 = vpack.c.b16 %v1196, %v1195
      %v1223 = vpack.c.b16 %v1198, %v1197
      %v1224 = vpack.c.b16 %v1200, %v1199
      %1249 = vmatprep.subr.bf16.mxu0 0
      %1250 = vmatpush1.bf16.msra.mxu0 %v1201
      %1251 = vmatprep.subr.bf16.mxu0 0
      %1252 = vmatpush1.bf16.msra.mxu0 %v1202
      %1253 = vmatprep.subr.bf16.mxu0 0
      %1254 = vmatpush1.bf16.msra.mxu0 %v1203
      %1255 = vmatprep.subr.bf16.mxu0 0
      %1256 = vmatpush1.bf16.msra.mxu0 %v1204
      %1257 = vmatprep.subr.bf16.mxu0 0
      %1258 = vmatpush1.bf16.msra.mxu0 %v1205
      %1259 = vmatprep.subr.bf16.mxu0 0
      %1260 = vmatpush1.bf16.msra.mxu0 %v1206
      %1261 = vmatprep.subr.bf16.mxu0 0
      %1262 = vmatpush1.bf16.msra.mxu0 %v1207
      %1263 = vmatprep.subr.bf16.mxu0 0
      %1264 = vmatpush1.bf16.msra.mxu0 %v1208
      %1265 = vmatprep.subr.bf16.mxu0 0
      %1266 = vmatpush1.bf16.msra.mxu0 %v1209
      %1267 = vmatprep.subr.bf16.mxu0 0
      %1268 = vmatpush1.bf16.msra.mxu0 %v1210
      %1269 = vmatprep.subr.bf16.mxu0 0
      %1270 = vmatpush1.bf16.msra.mxu0 %v1211
      %1271 = vmatprep.subr.bf16.mxu0 0
      %1272 = vmatpush1.bf16.msra.mxu0 %v1212
      %1273 = vmatprep.subr.bf16.mxu0 0
      %1274 = vmatpush1.bf16.msra.mxu0 %v1213
      %1275 = vmatprep.subr.bf16.mxu0 0
      %1276 = vmatpush1.bf16.msra.mxu0 %v1214
      %1277 = vmatprep.subr.bf16.mxu0 0
      %1278 = vmatpush1.bf16.msra.mxu0 %v1215
      %1279 = vmatprep.subr.bf16.mxu0 0
      %1280 = vmatpush1.bf16.msra.mxu0 %v1216
      %1281 = vmatprep.mubr.bf16.mxu0 %v1034
      %1282 = vmatmul.mubr.bf16.gmra.mrb[0].mxu0 %v1033
      %v1283 = vpop.f32.mrb[0].mxu0
      %v1284 = vadd.f32 0.0, %v1283
      %v1285 = vpop.f32.mrb[0].mxu0
      %v1286 = vpop.f32.mrb[0].mxu0
      %v1287 = vadd.f32 0.0, %v1286
      %v1288 = vpop.f32.mrb[0].mxu0
      %1289 = vmatprep.mubr.bf16.mxu0 %v1037
      %1290 = vmatmul.mubr.bf16.gmra.mrb[0].mxu0 %v1036
      %v1291 = vpop.f32.mrb[0].mxu0
      %v1292 = vadd.f32 0.0, %v1291
      %v1293 = vpop.f32.mrb[0].mxu0
      %v1294 = vpop.f32.mrb[0].mxu0
      %v1295 = vadd.f32 0.0, %v1294
      %v1296 = vpop.f32.mrb[0].mxu0
      %1297 = vmatprep.mubr.bf16.mxu0 %v1040
      %1298 = vmatmul.mubr.bf16.gmra.mrb[0].mxu0 %v1039
      %v1299 = vpop.f32.mrb[0].mxu0
      %v1300 = vadd.f32 0.0, %v1299
      %v1301 = vpop.f32.mrb[0].mxu0
      %v1302 = vpop.f32.mrb[0].mxu0
      %v1303 = vadd.f32 0.0, %v1302
      %v1304 = vpop.f32.mrb[0].mxu0
      %1305 = vmatprep.mubr.bf16.mxu0 %v1043
      %1306 = vmatmul.mubr.bf16.gmra.mrb[0].mxu0 %v1042
      %v1307 = vpop.f32.mrb[0].mxu0
      %v1308 = vadd.f32 0.0, %v1307
      %v1309 = vpop.f32.mrb[0].mxu0
      %v1310 = vpop.f32.mrb[0].mxu0
      %v1311 = vadd.f32 0.0, %v1310
      %v1312 = vpop.f32.mrb[0].mxu0
      %1313 = vmatprep.mubr.bf16.mxu0 %v1046
      %1314 = vmatmul.mubr.bf16.gmra.mrb[0].mxu0 %v1045
      %v1315 = vpop.f32.mrb[0].mxu0
      %v1316 = vadd.f32 0.0, %v1315
      %v1317 = vpop.f32.mrb[0].mxu0
      %v1318 = vpop.f32.mrb[0].mxu0
      %v1319 = vadd.f32 0.0, %v1318
      %v1320 = vpop.f32.mrb[0].mxu0
      %1321 = vmatprep.mubr.bf16.mxu0 %v1049
      %1322 = vmatmul.mubr.bf16.gmra.mrb[0].mxu0 %v1048
      %v1323 = vpop.f32.mrb[0].mxu0
      %v1324 = vadd.f32 0.0, %v1323
      %v1325 = vpop.f32.mrb[0].mxu0
      %v1326 = vpop.f32.mrb[0].mxu0
      %v1327 = vadd.f32 0.0, %v1326
      %v1328 = vpop.f32.mrb[0].mxu0
      %1329 = vmatprep.mubr.bf16.mxu0 %v1052
      %1330 = vmatmul.mubr.bf16.gmra.mrb[0].mxu0 %v1051
      %v1331 = vpop.f32.mrb[0].mxu0
      %v1332 = vadd.f32 0.0, %v1331
      %v1333 = vpop.f32.mrb[0].mxu0
      %v1334 = vpop.f32.mrb[0].mxu0
      %v1335 = vadd.f32 0.0, %v1334
      %v1336 = vpop.f32.mrb[0].mxu0
      %1337 = vmatprep.mubr.bf16.mxu0 %v1055
      %1338 = vmatmul.mubr.bf16.gmra.mrb[0].mxu0 %v1054
      %v1339 = vpop.f32.mrb[0].mxu0
      %v1340 = vadd.f32 0.0, %v1339
      %v1341 = vpop.f32.mrb[0].mxu0
      %v1342 = vpop.f32.mrb[0].mxu0
      %v1343 = vadd.f32 0.0, %v1342
      %v1344 = vpop.f32.mrb[0].mxu0
      %1345 = vdwg.mxu0
      %1346 = vmatprep.subr.bf16.mxu0 0
      %1347 = vmatpush1.bf16.msra.mxu0 %v1217
      %1348 = vmatprep.subr.bf16.mxu0 0
      %1349 = vmatpush1.bf16.msra.mxu0 %v1218
      %1350 = vmatprep.subr.bf16.mxu0 0
      %1351 = vmatpush1.bf16.msra.mxu0 %v1219
      %1352 = vmatprep.subr.bf16.mxu0 0
      %1353 = vmatpush1.bf16.msra.mxu0 %v1220
      %1354 = vmatprep.subr.bf16.mxu0 0
      %1355 = vmatpush1.bf16.msra.mxu0 %v1221
      %1356 = vmatprep.subr.bf16.mxu0 0
      %1357 = vmatpush1.bf16.msra.mxu0 %v1222
      %1358 = vmatprep.subr.bf16.mxu0 0
      %1359 = vmatpush1.bf16.msra.mxu0 %v1223
      %1360 = vmatprep.subr.bf16.mxu0 0
      %1361 = vmatpush1.bf16.msra.mxu0 %v1224
      %1362 = vmatprep.subr.bf16.mxu0 0
      %1363 = vmatpush1.bf16.msra.mxu0 0
      %1364 = vmatprep.subr.bf16.mxu0 0
      %1365 = vmatpush1.bf16.msra.mxu0 0
      %1366 = vmatprep.subr.bf16.mxu0 0
      %1367 = vmatpush1.bf16.msra.mxu0 0
      %1368 = vmatprep.subr.bf16.mxu0 0
      %1369 = vmatpush1.bf16.msra.mxu0 0
      %1370 = vmatprep.subr.bf16.mxu0 0
      %1371 = vmatpush1.bf16.msra.mxu0 0
      %1372 = vmatprep.subr.bf16.mxu0 0
      %1373 = vmatpush1.bf16.msra.mxu0 0
      %1374 = vmatprep.subr.bf16.mxu0 0
      %1375 = vmatpush1.bf16.msra.mxu0 0
      %1376 = vmatprep.subr.bf16.mxu0 0
      %1377 = vmatpush1.bf16.msra.mxu0 0
      %1378 = vmatprep.mubr.bf16.mxu0 0
      %1379 = vmatmul.mubr.bf16.gmra.mrb[0].mxu0 %v1035
      %v1380 = vpop.f32.mrb[0].mxu0
      %v1381 = vadd.f32 %v1284, %v1380
      %v1382 = vpop.f32.mrb[0].mxu0
      %v1383 = vpop.f32.mrb[0].mxu0
      %v1384 = vadd.f32 %v1287, %v1383
      %v1385 = vpop.f32.mrb[0].mxu0
      %1386 = vmatprep.mubr.bf16.mxu0 0
      %1387 = vmatmul.mubr.bf16.gmra.mrb[0].mxu0 %v1038
      %v1388 = vpop.f32.mrb[0].mxu0
      %v1389 = vadd.f32 %v1292, %v1388
      %v1390 = vpop.f32.mrb[0].mxu0
      %v1391 = vpop.f32.mrb[0].mxu0
      %v1392 = vadd.f32 %v1295, %v1391
      %v1393 = vpop.f32.mrb[0].mxu0
      %1394 = vmatprep.mubr.bf16.mxu0 0
      %1395 = vmatmul.mubr.bf16.gmra.mrb[0].mxu0 %v1041
      %v1396 = vpop.f32.mrb[0].mxu0
      %v1397 = vadd.f32 %v1300, %v1396
      %v1398 = vpop.f32.mrb[0].mxu0
      %v1399 = vpop.f32.mrb[0].mxu0
      %v1400 = vadd.f32 %v1303, %v1399
      %v1401 = vpop.f32.mrb[0].mxu0
      %1402 = vmatprep.mubr.bf16.mxu0 0
      %1403 = vmatmul.mubr.bf16.gmra.mrb[0].mxu0 %v1044
      %v1404 = vpop.f32.mrb[0].mxu0
      %v1405 = vadd.f32 %v1308, %v1404
      %v1406 = vpop.f32.mrb[0].mxu0
      %v1407 = vpop.f32.mrb[0].mxu0
      %v1408 = vadd.f32 %v1311, %v1407
      %v1409 = vpop.f32.mrb[0].mxu0
      %1410 = vmatprep.mubr.bf16.mxu0 0
      %1411 = vmatmul.mubr.bf16.gmra.mrb[0].mxu0 %v1047
      %v1412 = vpop.f32.mrb[0].mxu0
      %v1413 = vadd.f32 %v1316, %v1412
      %v1414 = vpop.f32.mrb[0].mxu0
      %v1415 = vpop.f32.mrb[0].mxu0
      %v1416 = vadd.f32 %v1319, %v1415
      %v1417 = vpop.f32.mrb[0].mxu0
      %1418 = vmatprep.mubr.bf16.mxu0 0
      %1419 = vmatmul.mubr.bf16.gmra.mrb[0].mxu0 %v1050
      %v1420 = vpop.f32.mrb[0].mxu0
      %v1421 = vadd.f32 %v1324, %v1420
      %v1422 = vpop.f32.mrb[0].mxu0
      %v1423 = vpop.f32.mrb[0].mxu0
      %v1424 = vadd.f32 %v1327, %v1423
      %v1425 = vpop.f32.mrb[0].mxu0
      %1426 = vmatprep.mubr.bf16.mxu0 0
      %1427 = vmatmul.mubr.bf16.gmra.mrb[0].mxu0 %v1053
      %v1428 = vpop.f32.mrb[0].mxu0
      %v1429 = vadd.f32 %v1332, %v1428
      %v1430 = vpop.f32.mrb[0].mxu0
      %v1431 = vpop.f32.mrb[0].mxu0
      %v1432 = vadd.f32 %v1335, %v1431
      %v1433 = vpop.f32.mrb[0].mxu0
      %1434 = vmatprep.mubr.bf16.mxu0 0
      %1435 = vmatmul.mubr.bf16.gmra.mrb[0].mxu0 %v1056
      %v1436 = vpop.f32.mrb[0].mxu0
      %v1437 = vadd.f32 %v1340, %v1436
      %v1438 = vpop.f32.mrb[0].mxu0
      %v1439 = vpop.f32.mrb[0].mxu0
      %v1440 = vadd.f32 %v1343, %v1439
      %v1441 = vpop.f32.mrb[0].mxu0
      %1442 = vdwg.mxu0
      %1443 = vst [vmem:[#allocation3] sm:$0xff] %v1381
      %1444 = vst [vmem:[#allocation3 + $0x8] sm:$0xff] %v1384
      %1445 = vst [vmem:[#allocation3 + $0x10] sm:$0xff] %v1389
      %1446 = vst [vmem:[#allocation3 + $0x18] sm:$0xff] %v1392
      %1447 = vst [vmem:[#allocation3 + $0x20] sm:$0xff] %v1397
      %1448 = vst [vmem:[#allocation3 + $0x28] sm:$0xff] %v1400
      %1449 = vst [vmem:[#allocation3 + $0x30] sm:$0xff] %v1405
      %1450 = vst [vmem:[#allocation3 + $0x38] sm:$0xff] %v1408
      %1451 = vst [vmem:[#allocation3 + $0x40] sm:$0xff] %v1413
      %1452 = vst [vmem:[#allocation3 + $0x48] sm:$0xff] %v1416
      %1453 = vst [vmem:[#allocation3 + $0x50] sm:$0xff] %v1421
      %1454 = vst [vmem:[#allocation3 + $0x58] sm:$0xff] %v1424
      %1455 = vst [vmem:[#allocation3 + $0x60] sm:$0xff] %v1429
      %1456 = vst [vmem:[#allocation3 + $0x68] sm:$0xff] %v1432
      %1457 = vst [vmem:[#allocation3 + $0x70] sm:$0xff] %v1437
      %1458 = vst [vmem:[#allocation3 + $0x78] sm:$0xff] %v1440
      %v1459 = vld [vmem:[#allocation2 + $0x18] sm:$0xff]
      %v1460 = vld [vmem:[#allocation2 + $0x20] sm:$0xff]
      %v1461 = vld [vmem:[#allocation2 + $0x28] sm:$0xff]
      %v1462 = vld [vmem:[#allocation2 + $0x30] sm:$0xff]
      %v1463 = vld [vmem:[#allocation2 + $0x38] sm:$0xff]
      %v1464 = vld [vmem:[#allocation2 + $0x40] sm:$0xff]
      %v1465 = vld [vmem:[#allocation2 + $0x48] sm:$0xff]
      %v1466 = vld [vmem:[#allocation2 + $0x50] sm:$0xff]
      %v1467 = vld [vmem:[#allocation2 + $0x58] sm:$0xff]
      %v1468 = vld [vmem:[#allocation2 + $0x60] sm:$0xff]
      %v1469 = vld [vmem:[#allocation2 + $0x68] sm:$0xff]
      %v1470 = vld [vmem:[#allocation2 + $0x70] sm:$0xff]
      %v1471 = vld [vmem:[#allocation2 + $0x78] sm:$0xff]
      %v1472 = vld [vmem:[#allocation2 + $0x80] sm:$0xff]
      %v1473 = vld [vmem:[#allocation2 + $0x88] sm:$0xff]
      %v1474 = vld [vmem:[#allocation2 + $0x90] sm:$0xff]
      %v1475 = vld [vmem:[#allocation2 + $0x98] sm:$0xff]
      %v1476 = vld [vmem:[#allocation2 + $0xa0] sm:$0xff]
      %v1477 = vld [vmem:[#allocation2 + $0xa8] sm:$0xff]
      %v1478 = vld [vmem:[#allocation2 + $0xb0] sm:$0xff]
      %v1479 = vld [vmem:[#allocation2 + $0xb8] sm:$0xff]
      %v1480 = vld [vmem:[#allocation2 + $0xc0] sm:$0xff]
      %v1481 = vld [vmem:[#allocation2 + $0xc8] sm:$0xff]
      %v1482 = vld [vmem:[#allocation2 + $0xd0] sm:$0xff]
      %s1483 = scalar_lea.vmem %s3, 192
      %v1484 = vld [vmem:[%s1483] sm:$0xf]
      %v1485 = vld [vmem:[%s1483 + $0x4] sm:$0xf]
      %v1486 = vld [vmem:[%s1483 + $0x8] sm:$0xf]
      %v1487 = vld [vmem:[%s1483 + $0xc] sm:$0xf]
      %v1488 = vld [vmem:[%s1483 + $0x10] sm:$0xf]
      %v1489 = vld [vmem:[%s1483 + $0x14] sm:$0xf]
      %v1490 = vld [vmem:[%s1483 + $0x18] sm:$0xf]
      %v1491 = vld [vmem:[%s1483 + $0x1c] sm:$0xf]
      %v1492 = vld [vmem:[%s1483 + $0x20] sm:$0xf]
      %v1493 = vld [vmem:[%s1483 + $0x24] sm:$0xf]
      %v1494 = vld [vmem:[%s1483 + $0x28] sm:$0xf]
      %v1495 = vld [vmem:[%s1483 + $0x2c] sm:$0xf]
      %v1496 = vld [vmem:[%s1483 + $0x30] sm:$0xf]
      %v1497 = vld [vmem:[%s1483 + $0x34] sm:$0xf]
      %v1498 = vld [vmem:[%s1483 + $0x38] sm:$0xf]
      %v1499 = vld [vmem:[%s1483 + $0x3c] sm:$0xf]
      %v1500 = vld [vmem:[%s1483 + $0x40] sm:$0xf]
      %v1501 = vld [vmem:[%s1483 + $0x44] sm:$0xf]
      %v1502 = vld [vmem:[%s1483 + $0x48] sm:$0xf]
      %v1503 = vld [vmem:[%s1483 + $0x4c] sm:$0xf]
      %v1504 = vld [vmem:[%s1483 + $0x50] sm:$0xf]
      %v1505 = vld [vmem:[%s1483 + $0x54] sm:$0xf]
      %v1506 = vld [vmem:[%s1483 + $0x58] sm:$0xf]
      %v1507 = vld [vmem:[%s1483 + $0x5c] sm:$0xf]
      %v1508 = vld [vmem:[%s1483 + $0x60] sm:$0xf]
      %v1509 = vld [vmem:[%s1483 + $0x64] sm:$0xf]
      %v1510 = vld [vmem:[%s1483 + $0x68] sm:$0xf]
      %v1511 = vld [vmem:[%s1483 + $0x6c] sm:$0xf]
      %v1512 = vld [vmem:[%s1483 + $0x70] sm:$0xf]
      %v1513 = vld [vmem:[%s1483 + $0x74] sm:$0xf]
      %v1514 = vld [vmem:[%s1483 + $0x78] sm:$0xf]
      %v1515 = vld [vmem:[%s1483 + $0x7c] sm:$0xf]
      %v1516 = vld [vmem:[%s1483 + $0x80] sm:$0xf]
      %v1517 = vld [vmem:[%s1483 + $0x84] sm:$0xf]
      %v1518 = vld [vmem:[%s1483 + $0x88] sm:$0xf]
      %v1519 = vld [vmem:[%s1483 + $0x8c] sm:$0xf]
      %v1520 = vld [vmem:[%s1483 + $0x90] sm:$0xf]
      %v1521 = vld [vmem:[%s1483 + $0x94] sm:$0xf]
      %v1522 = vld [vmem:[%s1483 + $0x98] sm:$0xf]
      %v1523 = vld [vmem:[%s1483 + $0x9c] sm:$0xf]
      %v1524 = vld [vmem:[%s1483 + $0xa0] sm:$0xf]
      %v1525 = vld [vmem:[%s1483 + $0xa4] sm:$0xf]
      %v1526 = vld [vmem:[%s1483 + $0xa8] sm:$0xf]
      %v1527 = vld [vmem:[%s1483 + $0xac] sm:$0xf]
      %v1528 = vld [vmem:[%s1483 + $0xb0] sm:$0xf]
      %v1529 = vld [vmem:[%s1483 + $0xb4] sm:$0xf]
      %v1530 = vld [vmem:[%s1483 + $0xb8] sm:$0xf]
      %v1531 = vld [vmem:[%s1483 + $0xbc] sm:$0xf]
      %v1580 = vunpack.c.l.b16 %v1484
      %v1581 = vunpack.c.l.b16 %v1485
      %v1582 = vunpack.c.l.b16 %v1486
      %v1583 = vunpack.c.l.b16 %v1487
      %v1584 = vunpack.c.l.b16 %v1488
      %v1585 = vunpack.c.l.b16 %v1489
      %v1586 = vunpack.c.l.b16 %v1490
      %v1587 = vunpack.c.l.b16 %v1491
      %v1588 = vunpack.c.l.b16 %v1492
      %v1589 = vunpack.c.l.b16 %v1493
      %v1590 = vunpack.c.l.b16 %v1494
      %v1591 = vunpack.c.l.b16 %v1495
      %v1592 = vunpack.c.l.b16 %v1496
      %v1593 = vunpack.c.l.b16 %v1497
      %v1594 = vunpack.c.l.b16 %v1498
      %v1595 = vunpack.c.l.b16 %v1499
      %v1596 = vunpack.c.l.b16 %v1500
      %v1597 = vunpack.c.l.b16 %v1501
      %v1598 = vunpack.c.l.b16 %v1502
      %v1599 = vunpack.c.l.b16 %v1503
      %v1600 = vunpack.c.l.b16 %v1504
      %v1601 = vunpack.c.l.b16 %v1505
      %v1602 = vunpack.c.l.b16 %v1506
      %v1603 = vunpack.c.l.b16 %v1507
      %v1604 = vunpack.c.l.b16 %v1508
      %v1605 = vunpack.c.l.b16 %v1509
      %v1606 = vunpack.c.l.b16 %v1510
      %v1607 = vunpack.c.l.b16 %v1511
      %v1608 = vunpack.c.l.b16 %v1512
      %v1609 = vunpack.c.l.b16 %v1513
      %v1610 = vunpack.c.l.b16 %v1514
      %v1611 = vunpack.c.l.b16 %v1515
      %v1612 = vunpack.c.l.b16 %v1516
      %v1613 = vunpack.c.l.b16 %v1517
      %v1614 = vunpack.c.l.b16 %v1518
      %v1615 = vunpack.c.l.b16 %v1519
      %v1616 = vunpack.c.l.b16 %v1520
      %v1617 = vunpack.c.l.b16 %v1521
      %v1618 = vunpack.c.l.b16 %v1522
      %v1619 = vunpack.c.l.b16 %v1523
      %v1620 = vunpack.c.l.b16 %v1524
      %v1621 = vunpack.c.l.b16 %v1525
      %v1622 = vunpack.c.l.b16 %v1526
      %v1623 = vunpack.c.l.b16 %v1527
      %v1624 = vunpack.c.l.b16 %v1528
      %v1625 = vunpack.c.l.b16 %v1529
      %v1626 = vunpack.c.l.b16 %v1530
      %v1627 = vunpack.c.l.b16 %v1531
      %v1628 = vpack.c.b16 %v1581, %v1580
      %v1629 = vpack.c.b16 %v1583, %v1582
      %v1630 = vpack.c.b16 %v1585, %v1584
      %v1631 = vpack.c.b16 %v1587, %v1586
      %v1632 = vpack.c.b16 %v1589, %v1588
      %v1633 = vpack.c.b16 %v1591, %v1590
      %v1634 = vpack.c.b16 %v1593, %v1592
      %v1635 = vpack.c.b16 %v1595, %v1594
      %v1636 = vpack.c.b16 %v1597, %v1596
      %v1637 = vpack.c.b16 %v1599, %v1598
      %v1638 = vpack.c.b16 %v1601, %v1600
      %v1639 = vpack.c.b16 %v1603, %v1602
      %v1640 = vpack.c.b16 %v1605, %v1604
      %v1641 = vpack.c.b16 %v1607, %v1606
      %v1642 = vpack.c.b16 %v1609, %v1608
      %v1643 = vpack.c.b16 %v1611, %v1610
      %v1644 = vpack.c.b16 %v1613, %v1612
      %v1645 = vpack.c.b16 %v1615, %v1614
      %v1646 = vpack.c.b16 %v1617, %v1616
      %v1647 = vpack.c.b16 %v1619, %v1618
      %v1648 = vpack.c.b16 %v1621, %v1620
      %v1649 = vpack.c.b16 %v1623, %v1622
      %v1650 = vpack.c.b16 %v1625, %v1624
      %v1651 = vpack.c.b16 %v1627, %v1626
      %1676 = vmatprep.subr.bf16.mxu0 0
      %1677 = vmatpush1.bf16.msra.mxu0 %v1628
      %1678 = vmatprep.subr.bf16.mxu0 0
      %1679 = vmatpush1.bf16.msra.mxu0 %v1629
      %1680 = vmatprep.subr.bf16.mxu0 0
      %1681 = vmatpush1.bf16.msra.mxu0 %v1630
      %1682 = vmatprep.subr.bf16.mxu0 0
      %1683 = vmatpush1.bf16.msra.mxu0 %v1631
      %1684 = vmatprep.subr.bf16.mxu0 0
      %1685 = vmatpush1.bf16.msra.mxu0 %v1632
      %1686 = vmatprep.subr.bf16.mxu0 0
      %1687 = vmatpush1.bf16.msra.mxu0 %v1633
      %1688 = vmatprep.subr.bf16.mxu0 0
      %1689 = vmatpush1.bf16.msra.mxu0 %v1634
      %1690 = vmatprep.subr.bf16.mxu0 0
      %1691 = vmatpush1.bf16.msra.mxu0 %v1635
      %1692 = vmatprep.subr.bf16.mxu0 0
      %1693 = vmatpush1.bf16.msra.mxu0 %v1636
      %1694 = vmatprep.subr.bf16.mxu0 0
      %1695 = vmatpush1.bf16.msra.mxu0 %v1637
      %1696 = vmatprep.subr.bf16.mxu0 0
      %1697 = vmatpush1.bf16.msra.mxu0 %v1638
      %1698 = vmatprep.subr.bf16.mxu0 0
      %1699 = vmatpush1.bf16.msra.mxu0 %v1639
      %1700 = vmatprep.subr.bf16.mxu0 0
      %1701 = vmatpush1.bf16.msra.mxu0 %v1640
      %1702 = vmatprep.subr.bf16.mxu0 0
      %1703 = vmatpush1.bf16.msra.mxu0 %v1641
      %1704 = vmatprep.subr.bf16.mxu0 0
      %1705 = vmatpush1.bf16.msra.mxu0 %v1642
      %1706 = vmatprep.subr.bf16.mxu0 0
      %1707 = vmatpush1.bf16.msra.mxu0 %v1643
      %1708 = vmatprep.mubr.bf16.mxu0 %v1460
      %1709 = vmatmul.mubr.bf16.gmra.mrb[0].mxu0 %v1459
      %v1710 = vpop.f32.mrb[0].mxu0
      %v1711 = vadd.f32 0.0, %v1710
      %v1712 = vpop.f32.mrb[0].mxu0
      %v1713 = vpop.f32.mrb[0].mxu0
      %v1714 = vadd.f32 0.0, %v1713
      %v1715 = vpop.f32.mrb[0].mxu0
      %1716 = vmatprep.mubr.bf16.mxu0 %v1463
      %1717 = vmatmul.mubr.bf16.gmra.mrb[0].mxu0 %v1462
      %v1718 = vpop.f32.mrb[0].mxu0
      %v1719 = vadd.f32 0.0, %v1718
      %v1720 = vpop.f32.mrb[0].mxu0
      %v1721 = vpop.f32.mrb[0].mxu0
      %v1722 = vadd.f32 0.0, %v1721
      %v1723 = vpop.f32.mrb[0].mxu0
      %1724 = vmatprep.mubr.bf16.mxu0 %v1466
      %1725 = vmatmul.mubr.bf16.gmra.mrb[0].mxu0 %v1465
      %v1726 = vpop.f32.mrb[0].mxu0
      %v1727 = vadd.f32 0.0, %v1726
      %v1728 = vpop.f32.mrb[0].mxu0
      %v1729 = vpop.f32.mrb[0].mxu0
      %v1730 = vadd.f32 0.0, %v1729
      %v1731 = vpop.f32.mrb[0].mxu0
      %1732 = vmatprep.mubr.bf16.mxu0 %v1469
      %1733 = vmatmul.mubr.bf16.gmra.mrb[0].mxu0 %v1468
      %v1734 = vpop.f32.mrb[0].mxu0
      %v1735 = vadd.f32 0.0, %v1734
      %v1736 = vpop.f32.mrb[0].mxu0
      %v1737 = vpop.f32.mrb[0].mxu0
      %v1738 = vadd.f32 0.0, %v1737
      %v1739 = vpop.f32.mrb[0].mxu0
      %1740 = vmatprep.mubr.bf16.mxu0 %v1472
      %1741 = vmatmul.mubr.bf16.gmra.mrb[0].mxu0 %v1471
      %v1742 = vpop.f32.mrb[0].mxu0
      %v1743 = vadd.f32 0.0, %v1742
      %v1744 = vpop.f32.mrb[0].mxu0
      %v1745 = vpop.f32.mrb[0].mxu0
      %v1746 = vadd.f32 0.0, %v1745
      %v1747 = vpop.f32.mrb[0].mxu0
      %1748 = vmatprep.mubr.bf16.mxu0 %v1475
      %1749 = vmatmul.mubr.bf16.gmra.mrb[0].mxu0 %v1474
      %v1750 = vpop.f32.mrb[0].mxu0
      %v1751 = vadd.f32 0.0, %v1750
      %v1752 = vpop.f32.mrb[0].mxu0
      %v1753 = vpop.f32.mrb[0].mxu0
      %v1754 = vadd.f32 0.0, %v1753
      %v1755 = vpop.f32.mrb[0].mxu0
      %1756 = vmatprep.mubr.bf16.mxu0 %v1478
      %1757 = vmatmul.mubr.bf16.gmra.mrb[0].mxu0 %v1477
      %v1758 = vpop.f32.mrb[0].mxu0
      %v1759 = vadd.f32 0.0, %v1758
      %v1760 = vpop.f32.mrb[0].mxu0
      %v1761 = vpop.f32.mrb[0].mxu0
      %v1762 = vadd.f32 0.0, %v1761
      %v1763 = vpop.f32.mrb[0].mxu0
      %1764 = vmatprep.mubr.bf16.mxu0 %v1481
      %1765 = vmatmul.mubr.bf16.gmra.mrb[0].mxu0 %v1480
      %v1766 = vpop.f32.mrb[0].mxu0
      %v1767 = vadd.f32 0.0, %v1766
      %v1768 = vpop.f32.mrb[0].mxu0
      %v1769 = vpop.f32.mrb[0].mxu0
      %v1770 = vadd.f32 0.0, %v1769
      %v1771 = vpop.f32.mrb[0].mxu0
      %1772 = vdwg.mxu0
      %1773 = vmatprep.subr.bf16.mxu0 0
      %1774 = vmatpush1.bf16.msra.mxu0 %v1644
      %1775 = vmatprep.subr.bf16.mxu0 0
      %1776 = vmatpush1.bf16.msra.mxu0 %v1645
      %1777 = vmatprep.subr.bf16.mxu0 0
      %1778 = vmatpush1.bf16.msra.mxu0 %v1646
      %1779 = vmatprep.subr.bf16.mxu0 0
      %1780 = vmatpush1.bf16.msra.mxu0 %v1647
      %1781 = vmatprep.subr.bf16.mxu0 0
      %1782 = vmatpush1.bf16.msra.mxu0 %v1648
      %1783 = vmatprep.subr.bf16.mxu0 0
      %1784 = vmatpush1.bf16.msra.mxu0 %v1649
      %1785 = vmatprep.subr.bf16.mxu0 0
      %1786 = vmatpush1.bf16.msra.mxu0 %v1650
      %1787 = vmatprep.subr.bf16.mxu0 0
      %1788 = vmatpush1.bf16.msra.mxu0 %v1651
      %1789 = vmatprep.subr.bf16.mxu0 0
      %1790 = vmatpush1.bf16.msra.mxu0 0
      %1791 = vmatprep.subr.bf16.mxu0 0
      %1792 = vmatpush1.bf16.msra.mxu0 0
      %1793 = vmatprep.subr.bf16.mxu0 0
      %1794 = vmatpush1.bf16.msra.mxu0 0
      %1795 = vmatprep.subr.bf16.mxu0 0
      %1796 = vmatpush1.bf16.msra.mxu0 0
      %1797 = vmatprep.subr.bf16.mxu0 0
      %1798 = vmatpush1.bf16.msra.mxu0 0
      %1799 = vmatprep.subr.bf16.mxu0 0
      %1800 = vmatpush1.bf16.msra.mxu0 0
      %1801 = vmatprep.subr.bf16.mxu0 0
      %1802 = vmatpush1.bf16.msra.mxu0 0
      %1803 = vmatprep.subr.bf16.mxu0 0
      %1804 = vmatpush1.bf16.msra.mxu0 0
      %1805 = vmatprep.mubr.bf16.mxu0 0
      %1806 = vmatmul.mubr.bf16.gmra.mrb[0].mxu0 %v1461
      %v1807 = vpop.f32.mrb[0].mxu0
      %v1808 = vadd.f32 %v1711, %v1807
      %v1809 = vpop.f32.mrb[0].mxu0
      %v1810 = vpop.f32.mrb[0].mxu0
      %v1811 = vadd.f32 %v1714, %v1810
      %v1812 = vpop.f32.mrb[0].mxu0
      %1813 = vmatprep.mubr.bf16.mxu0 0
      %1814 = vmatmul.mubr.bf16.gmra.mrb[0].mxu0 %v1464
      %v1815 = vpop.f32.mrb[0].mxu0
      %v1816 = vadd.f32 %v1719, %v1815
      %v1817 = vpop.f32.mrb[0].mxu0
      %v1818 = vpop.f32.mrb[0].mxu0
      %v1819 = vadd.f32 %v1722, %v1818
      %v1820 = vpop.f32.mrb[0].mxu0
      %1821 = vmatprep.mubr.bf16.mxu0 0
      %1822 = vmatmul.mubr.bf16.gmra.mrb[0].mxu0 %v1467
      %v1823 = vpop.f32.mrb[0].mxu0
      %v1824 = vadd.f32 %v1727, %v1823
      %v1825 = vpop.f32.mrb[0].mxu0
      %v1826 = vpop.f32.mrb[0].mxu0
      %v1827 = vadd.f32 %v1730, %v1826
      %v1828 = vpop.f32.mrb[0].mxu0
      %1829 = vmatprep.mubr.bf16.mxu0 0
      %1830 = vmatmul.mubr.bf16.gmra.mrb[0].mxu0 %v1470
      %v1831 = vpop.f32.mrb[0].mxu0
      %v1832 = vadd.f32 %v1735, %v1831
      %v1833 = vpop.f32.mrb[0].mxu0
      %v1834 = vpop.f32.mrb[0].mxu0
      %v1835 = vadd.f32 %v1738, %v1834
      %v1836 = vpop.f32.mrb[0].mxu0
      %1837 = vmatprep.mubr.bf16.mxu0 0
      %1838 = vmatmul.mubr.bf16.gmra.mrb[0].mxu0 %v1473
      %v1839 = vpop.f32.mrb[0].mxu0
      %v1840 = vadd.f32 %v1743, %v1839
      %v1841 = vpop.f32.mrb[0].mxu0
      %v1842 = vpop.f32.mrb[0].mxu0
      %v1843 = vadd.f32 %v1746, %v1842
      %v1844 = vpop.f32.mrb[0].mxu0
      %1845 = vmatprep.mubr.bf16.mxu0 0
      %1846 = vmatmul.mubr.bf16.gmra.mrb[0].mxu0 %v1476
      %v1847 = vpop.f32.mrb[0].mxu0
      %v1848 = vadd.f32 %v1751, %v1847
      %v1849 = vpop.f32.mrb[0].mxu0
      %v1850 = vpop.f32.mrb[0].mxu0
      %v1851 = vadd.f32 %v1754, %v1850
      %v1852 = vpop.f32.mrb[0].mxu0
      %1853 = vmatprep.mubr.bf16.mxu0 0
      %1854 = vmatmul.mubr.bf16.gmra.mrb[0].mxu0 %v1479
      %v1855 = vpop.f32.mrb[0].mxu0
      %v1856 = vadd.f32 %v1759, %v1855
      %v1857 = vpop.f32.mrb[0].mxu0
      %v1858 = vpop.f32.mrb[0].mxu0
      %v1859 = vadd.f32 %v1762, %v1858
      %v1860 = vpop.f32.mrb[0].mxu0
      %1861 = vmatprep.mubr.bf16.mxu0 0
      %1862 = vmatmul.mubr.bf16.gmra.mrb[0].mxu0 %v1482
      %v1863 = vpop.f32.mrb[0].mxu0
      %v1864 = vadd.f32 %v1767, %v1863
      %v1865 = vpop.f32.mrb[0].mxu0
      %v1866 = vpop.f32.mrb[0].mxu0
      %v1867 = vadd.f32 %v1770, %v1866
      %v1868 = vpop.f32.mrb[0].mxu0
      %1869 = vdwg.mxu0
      %v1870 = vld [vmem:[#allocation3] sm:$0xff]
      %v1871 = vld [vmem:[#allocation3 + $0x8] sm:$0xff]
      %v1872 = vld [vmem:[#allocation3 + $0x10] sm:$0xff]
      %v1873 = vld [vmem:[#allocation3 + $0x18] sm:$0xff]
      %v1874 = vld [vmem:[#allocation3 + $0x20] sm:$0xff]
      %v1875 = vld [vmem:[#allocation3 + $0x28] sm:$0xff]
      %v1876 = vld [vmem:[#allocation3 + $0x30] sm:$0xff]
      %v1877 = vld [vmem:[#allocation3 + $0x38] sm:$0xff]
      %v1878 = vld [vmem:[#allocation3 + $0x40] sm:$0xff]
      %v1879 = vld [vmem:[#allocation3 + $0x48] sm:$0xff]
      %v1880 = vld [vmem:[#allocation3 + $0x50] sm:$0xff]
      %v1881 = vld [vmem:[#allocation3 + $0x58] sm:$0xff]
      %v1882 = vld [vmem:[#allocation3 + $0x60] sm:$0xff]
      %v1883 = vld [vmem:[#allocation3 + $0x68] sm:$0xff]
      %v1884 = vld [vmem:[#allocation3 + $0x70] sm:$0xff]
      %v1885 = vld [vmem:[#allocation3 + $0x78] sm:$0xff]
      %v1886 = vadd.f32 %v1870, %v1808
      %v1887 = vadd.f32 %v1871, %v1811
      %v1888 = vadd.f32 %v1872, %v1816
      %v1889 = vadd.f32 %v1873, %v1819
      %v1890 = vadd.f32 %v1874, %v1824
      %v1891 = vadd.f32 %v1875, %v1827
      %v1892 = vadd.f32 %v1876, %v1832
      %v1893 = vadd.f32 %v1877, %v1835
      %v1894 = vadd.f32 %v1878, %v1840
      %v1895 = vadd.f32 %v1879, %v1843
      %v1896 = vadd.f32 %v1880, %v1848
      %v1897 = vadd.f32 %v1881, %v1851
      %v1898 = vadd.f32 %v1882, %v1856
      %v1899 = vadd.f32 %v1883, %v1859
      %v1900 = vadd.f32 %v1884, %v1864
      %v1901 = vadd.f32 %v1885, %v1867
      %1902 = vst [vmem:[#allocation3] sm:$0xff] %v1886
      %1903 = vst [vmem:[#allocation3 + $0x8] sm:$0xff] %v1887
      %1904 = vst [vmem:[#allocation3 + $0x10] sm:$0xff] %v1888
      %1905 = vst [vmem:[#allocation3 + $0x18] sm:$0xff] %v1889
      %1906 = vst [vmem:[#allocation3 + $0x20] sm:$0xff] %v1890
      %1907 = vst [vmem:[#allocation3 + $0x28] sm:$0xff] %v1891
      %1908 = vst [vmem:[#allocation3 + $0x30] sm:$0xff] %v1892
      %1909 = vst [vmem:[#allocation3 + $0x38] sm:$0xff] %v1893
      %1910 = vst [vmem:[#allocation3 + $0x40] sm:$0xff] %v1894
      %1911 = vst [vmem:[#allocation3 + $0x48] sm:$0xff] %v1895
      %1912 = vst [vmem:[#allocation3 + $0x50] sm:$0xff] %v1896
      %1913 = vst [vmem:[#allocation3 + $0x58] sm:$0xff] %v1897
      %1914 = vst [vmem:[#allocation3 + $0x60] sm:$0xff] %v1898
      %1915 = vst [vmem:[#allocation3 + $0x68] sm:$0xff] %v1899
      %1916 = vst [vmem:[#allocation3 + $0x70] sm:$0xff] %v1900
      %1917 = vst [vmem:[#allocation3 + $0x78] sm:$0xff] %v1901
      %v1918 = vld [vmem:[#allocation2 + $0x30] sm:$0xff]
      %v1919 = vld [vmem:[#allocation2 + $0x38] sm:$0xff]
      %v1920 = vld [vmem:[#allocation2 + $0x40] sm:$0xff]
      %v1921 = vld [vmem:[#allocation2 + $0x48] sm:$0xff]
      %v1922 = vld [vmem:[#allocation2 + $0x50] sm:$0xff]
      %v1923 = vld [vmem:[#allocation2 + $0x58] sm:$0xff]
      %v1924 = vld [vmem:[#allocation2 + $0x60] sm:$0xff]
      %v1925 = vld [vmem:[#allocation2 + $0x68] sm:$0xff]
      %v1926 = vld [vmem:[#allocation2 + $0x70] sm:$0xff]
      %v1927 = vld [vmem:[#allocation2 + $0x78] sm:$0xff]
      %v1928 = vld [vmem:[#allocation2 + $0x80] sm:$0xff]
      %v1929 = vld [vmem:[#allocation2 + $0x88] sm:$0xff]
      %v1930 = vld [vmem:[#allocation2 + $0x90] sm:$0xff]
      %v1931 = vld [vmem:[#allocation2 + $0x98] sm:$0xff]
      %v1932 = vld [vmem:[#allocation2 + $0xa0] sm:$0xff]
      %v1933 = vld [vmem:[#allocation2 + $0xa8] sm:$0xff]
      %v1934 = vld [vmem:[#allocation2 + $0xb0] sm:$0xff]
      %v1935 = vld [vmem:[#allocation2 + $0xb8] sm:$0xff]
      %v1936 = vld [vmem:[#allocation2 + $0xc0] sm:$0xff]
      %v1937 = vld [vmem:[#allocation2 + $0xc8] sm:$0xff]
      %v1938 = vld [vmem:[#allocation2 + $0xd0] sm:$0xff]
      %v1939 = vld [vmem:[#allocation2 + $0xd8] sm:$0xff]
      %v1940 = vld [vmem:[#allocation2 + $0xe0] sm:$0xff]
      %v1941 = vld [vmem:[#allocation2 + $0xe8] sm:$0xff]
      %s1942 = scalar_lea.vmem %s3, 384
      %v1943 = vld [vmem:[%s1942] sm:$0xf]
      %v1944 = vld [vmem:[%s1942 + $0x4] sm:$0xf]
      %v1945 = vld [vmem:[%s1942 + $0x8] sm:$0xf]
      %v1946 = vld [vmem:[%s1942 + $0xc] sm:$0xf]
      %v1947 = vld [vmem:[%s1942 + $0x10] sm:$0xf]
      %v1948 = vld [vmem:[%s1942 + $0x14] sm:$0xf]
      %v1949 = vld [vmem:[%s1942 + $0x18] sm:$0xf]
      %v1950 = vld [vmem:[%s1942 + $0x1c] sm:$0xf]
      %v1951 = vld [vmem:[%s1942 + $0x20] sm:$0xf]
      %v1952 = vld [vmem:[%s1942 + $0x24] sm:$0xf]
      %v1953 = vld [vmem:[%s1942 + $0x28] sm:$0xf]
      %v1954 = vld [vmem:[%s1942 + $0x2c] sm:$0xf]
      %v1955 = vld [vmem:[%s1942 + $0x30] sm:$0xf]
      %v1956 = vld [vmem:[%s1942 + $0x34] sm:$0xf]
      %v1957 = vld [vmem:[%s1942 + $0x38] sm:$0xf]
      %v1958 = vld [vmem:[%s1942 + $0x3c] sm:$0xf]
      %v1959 = vld [vmem:[%s1942 + $0x40] sm:$0xf]
      %v1960 = vld [vmem:[%s1942 + $0x44] sm:$0xf]
      %v1961 = vld [vmem:[%s1942 + $0x48] sm:$0xf]
      %v1962 = vld [vmem:[%s1942 + $0x4c] sm:$0xf]
      %v1963 = vld [vmem:[%s1942 + $0x50] sm:$0xf]
      %v1964 = vld [vmem:[%s1942 + $0x54] sm:$0xf]
      %v1965 = vld [vmem:[%s1942 + $0x58] sm:$0xf]
      %v1966 = vld [vmem:[%s1942 + $0x5c] sm:$0xf]
      %v1967 = vld [vmem:[%s1942 + $0x60] sm:$0xf]
      %v1968 = vld [vmem:[%s1942 + $0x64] sm:$0xf]
      %v1969 = vld [vmem:[%s1942 + $0x68] sm:$0xf]
      %v1970 = vld [vmem:[%s1942 + $0x6c] sm:$0xf]
      %v1971 = vld [vmem:[%s1942 + $0x70] sm:$0xf]
      %v1972 = vld [vmem:[%s1942 + $0x74] sm:$0xf]
      %v1973 = vld [vmem:[%s1942 + $0x78] sm:$0xf]
      %v1974 = vld [vmem:[%s1942 + $0x7c] sm:$0xf]
      %v1975 = vld [vmem:[%s1942 + $0x80] sm:$0xf]
      %v1976 = vld [vmem:[%s1942 + $0x84] sm:$0xf]
      %v1977 = vld [vmem:[%s1942 + $0x88] sm:$0xf]
      %v1978 = vld [vmem:[%s1942 + $0x8c] sm:$0xf]
      %v1979 = vld [vmem:[%s1942 + $0x90] sm:$0xf]
      %v1980 = vld [vmem:[%s1942 + $0x94] sm:$0xf]
      %v1981 = vld [vmem:[%s1942 + $0x98] sm:$0xf]
      %v1982 = vld [vmem:[%s1942 + $0x9c] sm:$0xf]
      %v1983 = vld [vmem:[%s1942 + $0xa0] sm:$0xf]
      %v1984 = vld [vmem:[%s1942 + $0xa4] sm:$0xf]
      %v1985 = vld [vmem:[%s1942 + $0xa8] sm:$0xf]
      %v1986 = vld [vmem:[%s1942 + $0xac] sm:$0xf]
      %v1987 = vld [vmem:[%s1942 + $0xb0] sm:$0xf]
      %v1988 = vld [vmem:[%s1942 + $0xb4] sm:$0xf]
      %v1989 = vld [vmem:[%s1942 + $0xb8] sm:$0xf]
      %v1990 = vld [vmem:[%s1942 + $0xbc] sm:$0xf]
      %v2039 = vunpack.c.l.b16 %v1943
      %v2040 = vunpack.c.l.b16 %v1944
      %v2041 = vunpack.c.l.b16 %v1945
      %v2042 = vunpack.c.l.b16 %v1946
      %v2043 = vunpack.c.l.b16 %v1947
      %v2044 = vunpack.c.l.b16 %v1948
      %v2045 = vunpack.c.l.b16 %v1949
      %v2046 = vunpack.c.l.b16 %v1950
      %v2047 = vunpack.c.l.b16 %v1951
      %v2048 = vunpack.c.l.b16 %v1952
      %v2049 = vunpack.c.l.b16 %v1953
      %v2050 = vunpack.c.l.b16 %v1954
      %v2051 = vunpack.c.l.b16 %v1955
      %v2052 = vunpack.c.l.b16 %v1956
      %v2053 = vunpack.c.l.b16 %v1957
      %v2054 = vunpack.c.l.b16 %v1958
      %v2055 = vunpack.c.l.b16 %v1959
      %v2056 = vunpack.c.l.b16 %v1960
      %v2057 = vunpack.c.l.b16 %v1961
      %v2058 = vunpack.c.l.b16 %v1962
      %v2059 = vunpack.c.l.b16 %v1963
      %v2060 = vunpack.c.l.b16 %v1964
      %v2061 = vunpack.c.l.b16 %v1965
      %v2062 = vunpack.c.l.b16 %v1966
      %v2063 = vunpack.c.l.b16 %v1967
      %v2064 = vunpack.c.l.b16 %v1968
      %v2065 = vunpack.c.l.b16 %v1969
      %v2066 = vunpack.c.l.b16 %v1970
      %v2067 = vunpack.c.l.b16 %v1971
      %v2068 = vunpack.c.l.b16 %v1972
      %v2069 = vunpack.c.l.b16 %v1973
      %v2070 = vunpack.c.l.b16 %v1974
      %v2071 = vunpack.c.l.b16 %v1975
      %v2072 = vunpack.c.l.b16 %v1976
      %v2073 = vunpack.c.l.b16 %v1977
      %v2074 = vunpack.c.l.b16 %v1978
      %v2075 = vunpack.c.l.b16 %v1979
      %v2076 = vunpack.c.l.b16 %v1980
      %v2077 = vunpack.c.l.b16 %v1981
      %v2078 = vunpack.c.l.b16 %v1982
      %v2079 = vunpack.c.l.b16 %v1983
      %v2080 = vunpack.c.l.b16 %v1984
      %v2081 = vunpack.c.l.b16 %v1985
      %v2082 = vunpack.c.l.b16 %v1986
      %v2083 = vunpack.c.l.b16 %v1987
      %v2084 = vunpack.c.l.b16 %v1988
      %v2085 = vunpack.c.l.b16 %v1989
      %v2086 = vunpack.c.l.b16 %v1990
      %v2087 = vpack.c.b16 %v2040, %v2039
      %v2088 = vpack.c.b16 %v2042, %v2041
      %v2089 = vpack.c.b16 %v2044, %v2043
      %v2090 = vpack.c.b16 %v2046, %v2045
      %v2091 = vpack.c.b16 %v2048, %v2047
      %v2092 = vpack.c.b16 %v2050, %v2049
      %v2093 = vpack.c.b16 %v2052, %v2051
      %v2094 = vpack.c.b16 %v2054, %v2053
      %v2095 = vpack.c.b16 %v2056, %v2055
      %v2096 = vpack.c.b16 %v2058, %v2057
      %v2097 = vpack.c.b16 %v2060, %v2059
      %v2098 = vpack.c.b16 %v2062, %v2061
      %v2099 = vpack.c.b16 %v2064, %v2063
      %v2100 = vpack.c.b16 %v2066, %v2065
      %v2101 = vpack.c.b16 %v2068, %v2067
      %v2102 = vpack.c.b16 %v2070, %v2069
      %v2103 = vpack.c.b16 %v2072, %v2071
      %v2104 = vpack.c.b16 %v2074, %v2073
      %v2105 = vpack.c.b16 %v2076, %v2075
      %v2106 = vpack.c.b16 %v2078, %v2077
      %v2107 = vpack.c.b16 %v2080, %v2079
      %v2108 = vpack.c.b16 %v2082, %v2081
      %v2109 = vpack.c.b16 %v2084, %v2083
      %v2110 = vpack.c.b16 %v2086, %v2085
      %2135 = vmatprep.subr.bf16.mxu0 0
      %2136 = vmatpush1.bf16.msra.mxu0 %v2087
      %2137 = vmatprep.subr.bf16.mxu0 0
      %2138 = vmatpush1.bf16.msra.mxu0 %v2088
      %2139 = vmatprep.subr.bf16.mxu0 0
      %2140 = vmatpush1.bf16.msra.mxu0 %v2089
      %2141 = vmatprep.subr.bf16.mxu0 0
      %2142 = vmatpush1.bf16.msra.mxu0 %v2090
      %2143 = vmatprep.subr.bf16.mxu0 0
      %2144 = vmatpush1.bf16.msra.mxu0 %v2091
      %2145 = vmatprep.subr.bf16.mxu0 0
      %2146 = vmatpush1.bf16.msra.mxu0 %v2092
      %2147 = vmatprep.subr.bf16.mxu0 0
      %2148 = vmatpush1.bf16.msra.mxu0 %v2093
      %2149 = vmatprep.subr.bf16.mxu0 0
      %2150 = vmatpush1.bf16.msra.mxu0 %v2094
      %2151 = vmatprep.subr.bf16.mxu0 0
      %2152 = vmatpush1.bf16.msra.mxu0 %v2095
      %2153 = vmatprep.subr.bf16.mxu0 0
      %2154 = vmatpush1.bf16.msra.mxu0 %v2096
      %2155 = vmatprep.subr.bf16.mxu0 0
      %2156 = vmatpush1.bf16.msra.mxu0 %v2097
      %2157 = vmatprep.subr.bf16.mxu0 0
      %2158 = vmatpush1.bf16.msra.mxu0 %v2098
      %2159 = vmatprep.subr.bf16.mxu0 0
      %2160 = vmatpush1.bf16.msra.mxu0 %v2099
      %2161 = vmatprep.subr.bf16.mxu0 0
      %2162 = vmatpush1.bf16.msra.mxu0 %v2100
      %2163 = vmatprep.subr.bf16.mxu0 0
      %2164 = vmatpush1.bf16.msra.mxu0 %v2101
      %2165 = vmatprep.subr.bf16.mxu0 0
      %2166 = vmatpush1.bf16.msra.mxu0 %v2102
      %2167 = vmatprep.mubr.bf16.mxu0 %v1919
      %2168 = vmatmul.mubr.bf16.gmra.mrb[0].mxu0 %v1918
      %v2169 = vpop.f32.mrb[0].mxu0
      %v2170 = vadd.f32 0.0, %v2169
      %v2171 = vpop.f32.mrb[0].mxu0
      %v2172 = vpop.f32.mrb[0].mxu0
      %v2173 = vadd.f32 0.0, %v2172
      %v2174 = vpop.f32.mrb[0].mxu0
      %2175 = vmatprep.mubr.bf16.mxu0 %v1922
      %2176 = vmatmul.mubr.bf16.gmra.mrb[0].mxu0 %v1921
      %v2177 = vpop.f32.mrb[0].mxu0
      %v2178 = vadd.f32 0.0, %v2177
      %v2179 = vpop.f32.mrb[0].mxu0
      %v2180 = vpop.f32.mrb[0].mxu0
      %v2181 = vadd.f32 0.0, %v2180
      %v2182 = vpop.f32.mrb[0].mxu0
      %2183 = vmatprep.mubr.bf16.mxu0 %v1925
      %2184 = vmatmul.mubr.bf16.gmra.mrb[0].mxu0 %v1924
      %v2185 = vpop.f32.mrb[0].mxu0
      %v2186 = vadd.f32 0.0, %v2185
      %v2187 = vpop.f32.mrb[0].mxu0
      %v2188 = vpop.f32.mrb[0].mxu0
      %v2189 = vadd.f32 0.0, %v2188
      %v2190 = vpop.f32.mrb[0].mxu0
      %2191 = vmatprep.mubr.bf16.mxu0 %v1928
      %2192 = vmatmul.mubr.bf16.gmra.mrb[0].mxu0 %v1927
      %v2193 = vpop.f32.mrb[0].mxu0
      %v2194 = vadd.f32 0.0, %v2193
      %v2195 = vpop.f32.mrb[0].mxu0
      %v2196 = vpop.f32.mrb[0].mxu0
      %v2197 = vadd.f32 0.0, %v2196
      %v2198 = vpop.f32.mrb[0].mxu0
      %2199 = vmatprep.mubr.bf16.mxu0 %v1931
      %2200 = vmatmul.mubr.bf16.gmra.mrb[0].mxu0 %v1930
      %v2201 = vpop.f32.mrb[0].mxu0
      %v2202 = vadd.f32 0.0, %v2201
      %v2203 = vpop.f32.mrb[0].mxu0
      %v2204 = vpop.f32.mrb[0].mxu0
      %v2205 = vadd.f32 0.0, %v2204
      %v2206 = vpop.f32.mrb[0].mxu0
      %2207 = vmatprep.mubr.bf16.mxu0 %v1934
      %2208 = vmatmul.mubr.bf16.gmra.mrb[0].mxu0 %v1933
      %v2209 = vpop.f32.mrb[0].mxu0
      %v2210 = vadd.f32 0.0, %v2209
      %v2211 = vpop.f32.mrb[0].mxu0
      %v2212 = vpop.f32.mrb[0].mxu0
      %v2213 = vadd.f32 0.0, %v2212
      %v2214 = vpop.f32.mrb[0].mxu0
      %2215 = vmatprep.mubr.bf16.mxu0 %v1937
      %2216 = vmatmul.mubr.bf16.gmra.mrb[0].mxu0 %v1936
      %v2217 = vpop.f32.mrb[0].mxu0
      %v2218 = vadd.f32 0.0, %v2217
      %v2219 = vpop.f32.mrb[0].mxu0
      %v2220 = vpop.f32.mrb[0].mxu0
      %v2221 = vadd.f32 0.0, %v2220
      %v2222 = vpop.f32.mrb[0].mxu0
      %2223 = vmatprep.mubr.bf16.mxu0 %v1940
      %2224 = vmatmul.mubr.bf16.gmra.mrb[0].mxu0 %v1939
      %v2225 = vpop.f32.mrb[0].mxu0
      %v2226 = vadd.f32 0.0, %v2225
      %v2227 = vpop.f32.mrb[0].mxu0
      %v2228 = vpop.f32.mrb[0].mxu0
      %v2229 = vadd.f32 0.0, %v2228
      %v2230 = vpop.f32.mrb[0].mxu0
      %2231 = vdwg.mxu0
      %2232 = vmatprep.subr.bf16.mxu0 0
      %2233 = vmatpush1.bf16.msra.mxu0 %v2103
      %2234 = vmatprep.subr.bf16.mxu0 0
      %2235 = vmatpush1.bf16.msra.mxu0 %v2104
      %2236 = vmatprep.subr.bf16.mxu0 0
      %2237 = vmatpush1.bf16.msra.mxu0 %v2105
      %2238 = vmatprep.subr.bf16.mxu0 0
      %2239 = vmatpush1.bf16.msra.mxu0 %v2106
      %2240 = vmatprep.subr.bf16.mxu0 0
      %2241 = vmatpush1.bf16.msra.mxu0 %v2107
      %2242 = vmatprep.subr.bf16.mxu0 0
      %2243 = vmatpush1.bf16.msra.mxu0 %v2108
      %2244 = vmatprep.subr.bf16.mxu0 0
      %2245 = vmatpush1.bf16.msra.mxu0 %v2109
      %2246 = vmatprep.subr.bf16.mxu0 0
      %2247 = vmatpush1.bf16.msra.mxu0 %v2110
      %2248 = vmatprep.subr.bf16.mxu0 0
      %2249 = vmatpush1.bf16.msra.mxu0 0
      %2250 = vmatprep.subr.bf16.mxu0 0
      %2251 = vmatpush1.bf16.msra.mxu0 0
      %2252 = vmatprep.subr.bf16.mxu0 0
      %2253 = vmatpush1.bf16.msra.mxu0 0
      %2254 = vmatprep.subr.bf16.mxu0 0
      %2255 = vmatpush1.bf16.msra.mxu0 0
      %2256 = vmatprep.subr.bf16.mxu0 0
      %2257 = vmatpush1.bf16.msra.mxu0 0
      %2258 = vmatprep.subr.bf16.mxu0 0
      %2259 = vmatpush1.bf16.msra.mxu0 0
      %2260 = vmatprep.subr.bf16.mxu0 0
      %2261 = vmatpush1.bf16.msra.mxu0 0
      %2262 = vmatprep.subr.bf16.mxu0 0
      %2263 = vmatpush1.bf16.msra.mxu0 0
      %2264 = vmatprep.mubr.bf16.mxu0 0
      %2265 = vmatmul.mubr.bf16.gmra.mrb[0].mxu0 %v1920
      %v2266 = vpop.f32.mrb[0].mxu0
      %v2267 = vadd.f32 %v2170, %v2266
      %v2268 = vpop.f32.mrb[0].mxu0
      %v2269 = vpop.f32.mrb[0].mxu0
      %v2270 = vadd.f32 %v2173, %v2269
      %v2271 = vpop.f32.mrb[0].mxu0
      %2272 = vmatprep.mubr.bf16.mxu0 0
      %2273 = vmatmul.mubr.bf16.gmra.mrb[0].mxu0 %v1923
      %v2274 = vpop.f32.mrb[0].mxu0
      %v2275 = vadd.f32 %v2178, %v2274
      %v2276 = vpop.f32.mrb[0].mxu0
      %v2277 = vpop.f32.mrb[0].mxu0
      %v2278 = vadd.f32 %v2181, %v2277
      %v2279 = vpop.f32.mrb[0].mxu0
      %2280 = vmatprep.mubr.bf16.mxu0 0
      %2281 = vmatmul.mubr.bf16.gmra.mrb[0].mxu0 %v1926
      %v2282 = vpop.f32.mrb[0].mxu0
      %v2283 = vadd.f32 %v2186, %v2282
      %v2284 = vpop.f32.mrb[0].mxu0
      %v2285 = vpop.f32.mrb[0].mxu0
      %v2286 = vadd.f32 %v2189, %v2285
      %v2287 = vpop.f32.mrb[0].mxu0
      %2288 = vmatprep.mubr.bf16.mxu0 0
      %2289 = vmatmul.mubr.bf16.gmra.mrb[0].mxu0 %v1929
      %v2290 = vpop.f32.mrb[0].mxu0
      %v2291 = vadd.f32 %v2194, %v2290
      %v2292 = vpop.f32.mrb[0].mxu0
      %v2293 = vpop.f32.mrb[0].mxu0
      %v2294 = vadd.f32 %v2197, %v2293
      %v2295 = vpop.f32.mrb[0].mxu0
      %2296 = vmatprep.mubr.bf16.mxu0 0
      %2297 = vmatmul.mubr.bf16.gmra.mrb[0].mxu0 %v1932
      %v2298 = vpop.f32.mrb[0].mxu0
      %v2299 = vadd.f32 %v2202, %v2298
      %v2300 = vpop.f32.mrb[0].mxu0
      %v2301 = vpop.f32.mrb[0].mxu0
      %v2302 = vadd.f32 %v2205, %v2301
      %v2303 = vpop.f32.mrb[0].mxu0
      %2304 = vmatprep.mubr.bf16.mxu0 0
      %2305 = vmatmul.mubr.bf16.gmra.mrb[0].mxu0 %v1935
      %v2306 = vpop.f32.mrb[0].mxu0
      %v2307 = vadd.f32 %v2210, %v2306
      %v2308 = vpop.f32.mrb[0].mxu0
      %v2309 = vpop.f32.mrb[0].mxu0
      %v2310 = vadd.f32 %v2213, %v2309
      %v2311 = vpop.f32.mrb[0].mxu0
      %2312 = vmatprep.mubr.bf16.mxu0 0
      %2313 = vmatmul.mubr.bf16.gmra.mrb[0].mxu0 %v1938
      %v2314 = vpop.f32.mrb[0].mxu0
      %v2315 = vadd.f32 %v2218, %v2314
      %v2316 = vpop.f32.mrb[0].mxu0
      %v2317 = vpop.f32.mrb[0].mxu0
      %v2318 = vadd.f32 %v2221, %v2317
      %v2319 = vpop.f32.mrb[0].mxu0
      %2320 = vmatprep.mubr.bf16.mxu0 0
      %2321 = vmatmul.mubr.bf16.gmra.mrb[0].mxu0 %v1941
      %v2322 = vpop.f32.mrb[0].mxu0
      %v2323 = vadd.f32 %v2226, %v2322
      %v2324 = vpop.f32.mrb[0].mxu0
      %v2325 = vpop.f32.mrb[0].mxu0
      %v2326 = vadd.f32 %v2229, %v2325
      %v2327 = vpop.f32.mrb[0].mxu0
      %2328 = vdwg.mxu0
      %v2329 = vld [vmem:[#allocation3] sm:$0xff]
      %v2330 = vld [vmem:[#allocation3 + $0x8] sm:$0xff]
      %v2331 = vld [vmem:[#allocation3 + $0x10] sm:$0xff]
      %v2332 = vld [vmem:[#allocation3 + $0x18] sm:$0xff]
      %v2333 = vld [vmem:[#allocation3 + $0x20] sm:$0xff]
      %v2334 = vld [vmem:[#allocation3 + $0x28] sm:$0xff]
      %v2335 = vld [vmem:[#allocation3 + $0x30] sm:$0xff]
      %v2336 = vld [vmem:[#allocation3 + $0x38] sm:$0xff]
      %v2337 = vld [vmem:[#allocation3 + $0x40] sm:$0xff]
      %v2338 = vld [vmem:[#allocation3 + $0x48] sm:$0xff]
      %v2339 = vld [vmem:[#allocation3 + $0x50] sm:$0xff]
      %v2340 = vld [vmem:[#allocation3 + $0x58] sm:$0xff]
      %v2341 = vld [vmem:[#allocation3 + $0x60] sm:$0xff]
      %v2342 = vld [vmem:[#allocation3 + $0x68] sm:$0xff]
      %v2343 = vld [vmem:[#allocation3 + $0x70] sm:$0xff]
      %v2344 = vld [vmem:[#allocation3 + $0x78] sm:$0xff]
      %v2345 = vadd.f32 %v2329, %v2267
      %v2346 = vadd.f32 %v2330, %v2270
      %v2347 = vadd.f32 %v2331, %v2275
      %v2348 = vadd.f32 %v2332, %v2278
      %v2349 = vadd.f32 %v2333, %v2283
      %v2350 = vadd.f32 %v2334, %v2286
      %v2351 = vadd.f32 %v2335, %v2291
      %v2352 = vadd.f32 %v2336, %v2294
      %v2353 = vadd.f32 %v2337, %v2299
      %v2354 = vadd.f32 %v2338, %v2302
      %v2355 = vadd.f32 %v2339, %v2307
      %v2356 = vadd.f32 %v2340, %v2310
      %v2357 = vadd.f32 %v2341, %v2315
      %v2358 = vadd.f32 %v2342, %v2318
      %v2359 = vadd.f32 %v2343, %v2323
      %v2360 = vadd.f32 %v2344, %v2326
      %2361 = vst [vmem:[#allocation3] sm:$0xff] %v2345
      %2362 = vst [vmem:[#allocation3 + $0x8] sm:$0xff] %v2346
      %2363 = vst [vmem:[#allocation3 + $0x10] sm:$0xff] %v2347
      %2364 = vst [vmem:[#allocation3 + $0x18] sm:$0xff] %v2348
      %2365 = vst [vmem:[#allocation3 + $0x20] sm:$0xff] %v2349
      %2366 = vst [vmem:[#allocation3 + $0x28] sm:$0xff] %v2350
      %2367 = vst [vmem:[#allocation3 + $0x30] sm:$0xff] %v2351
      %2368 = vst [vmem:[#allocation3 + $0x38] sm:$0xff] %v2352
      %2369 = vst [vmem:[#allocation3 + $0x40] sm:$0xff] %v2353
      %2370 = vst [vmem:[#allocation3 + $0x48] sm:$0xff] %v2354
      %2371 = vst [vmem:[#allocation3 + $0x50] sm:$0xff] %v2355
      %2372 = vst [vmem:[#allocation3 + $0x58] sm:$0xff] %v2356
      %2373 = vst [vmem:[#allocation3 + $0x60] sm:$0xff] %v2357
      %2374 = vst [vmem:[#allocation3 + $0x68] sm:$0xff] %v2358
      %2375 = vst [vmem:[#allocation3 + $0x70] sm:$0xff] %v2359
      %2376 = vst [vmem:[#allocation3 + $0x78] sm:$0xff] %v2360
      %v2377 = vld [vmem:[#allocation3] sm:$0xff]
      %v2378 = vld [vmem:[#allocation3 + $0x8] sm:$0xff]
      %v2379 = vld [vmem:[#allocation3 + $0x10] sm:$0xff]
      %v2380 = vld [vmem:[#allocation3 + $0x18] sm:$0xff]
      %v2381 = vld [vmem:[#allocation3 + $0x20] sm:$0xff]
      %v2382 = vld [vmem:[#allocation3 + $0x28] sm:$0xff]
      %v2383 = vld [vmem:[#allocation3 + $0x30] sm:$0xff]
      %v2384 = vld [vmem:[#allocation3 + $0x38] sm:$0xff]
      %v2385 = vld [vmem:[#allocation3 + $0x40] sm:$0xff]
      %v2386 = vld [vmem:[#allocation3 + $0x48] sm:$0xff]
      %v2387 = vld [vmem:[#allocation3 + $0x50] sm:$0xff]
      %v2388 = vld [vmem:[#allocation3 + $0x58] sm:$0xff]
      %v2389 = vld [vmem:[#allocation3 + $0x60] sm:$0xff]
      %v2390 = vld [vmem:[#allocation3 + $0x68] sm:$0xff]
      %v2391 = vld [vmem:[#allocation3 + $0x70] sm:$0xff]
      %v2392 = vld [vmem:[#allocation3 + $0x78] sm:$0xff]
      %v2393 = vadd.f32 %v2377, %v2378
      %v2394 = vadd.f32 %v2393, %v2379
      %v2395 = vadd.f32 %v2394, %v2380
      %v2396 = vadd.f32 %v2395, %v2381
      %v2397 = vadd.f32 %v2396, %v2382
      %v2398 = vadd.f32 %v2397, %v2383
      %v2399 = vadd.f32 %v2398, %v2384
      %v2400 = vadd.f32 %v2399, %v2385
      %v2401 = vadd.f32 %v2400, %v2386
      %v2402 = vadd.f32 %v2401, %v2387
      %v2403 = vadd.f32 %v2402, %v2388
      %v2404 = vadd.f32 %v2403, %v2389
      %v2405 = vadd.f32 %v2404, %v2390
      %v2406 = vadd.f32 %v2405, %v2391
      %v2407 = vadd.f32 %v2406, %v2392
      %v2408 = vrot.slane %v2407, 4
      %v2409 = vadd.f32 %v2407, %v2408
      %v2410 = vrot.slane %v2409, 2
      %v2411 = vadd.f32 %v2409, %v2410
      %v2412 = vrot.slane %v2411, 1
      %v2413 = vadd.f32 %v2411, %v2412
      %v2414 = vmul.f32 %v2377, %v2377
      %v2415 = vmul.f32 %v2378, %v2378
      %v2416 = vmul.f32 %v2379, %v2379
      %v2417 = vmul.f32 %v2380, %v2380
      %v2418 = vmul.f32 %v2381, %v2381
      %v2419 = vmul.f32 %v2382, %v2382
      %v2420 = vmul.f32 %v2383, %v2383
      %v2421 = vmul.f32 %v2384, %v2384
      %v2422 = vmul.f32 %v2385, %v2385
      %v2423 = vmul.f32 %v2386, %v2386
      %v2424 = vmul.f32 %v2387, %v2387
      %v2425 = vmul.f32 %v2388, %v2388
      %v2426 = vmul.f32 %v2389, %v2389
      %v2427 = vmul.f32 %v2390, %v2390
      %v2428 = vmul.f32 %v2391, %v2391
      %v2429 = vmul.f32 %v2392, %v2392
      %v2430 = vadd.f32 %v2414, %v2415
      %v2431 = vadd.f32 %v2430, %v2416
      %v2432 = vadd.f32 %v2431, %v2417
      %v2433 = vadd.f32 %v2432, %v2418
      %v2434 = vadd.f32 %v2433, %v2419
      %v2435 = vadd.f32 %v2434, %v2420
      %v2436 = vadd.f32 %v2435, %v2421
      %v2437 = vadd.f32 %v2436, %v2422
      %v2438 = vadd.f32 %v2437, %v2423
      %v2439 = vadd.f32 %v2438, %v2424
      %v2440 = vadd.f32 %v2439, %v2425
      %v2441 = vadd.f32 %v2440, %v2426
      %v2442 = vadd.f32 %v2441, %v2427
      %v2443 = vadd.f32 %v2442, %v2428
      %v2444 = vadd.f32 %v2443, %v2429
      %v2445 = vrot.slane %v2444, 4
      %v2446 = vadd.f32 %v2444, %v2445
      %v2447 = vrot.slane %v2446, 2
      %v2448 = vadd.f32 %v2446, %v2447
      %v2449 = vrot.slane %v2448, 1
      %v2450 = vadd.f32 %v2448, %v2449
      %vm2451 = vcmask 1040384
      %v2452 = vsel %vm2451, %v2413, %v2450
      %2453 = vst [vmem:[%s463] sm:$0x3] %v2452
      %2454 = vst [vmem:[%s454] sm:$0xff] %v2377
      %2455 = vst [vmem:[%s454 + $0x8] sm:$0xff] %v2378
      %2456 = vst [vmem:[%s454 + $0x10] sm:$0xff] %v2379
      %2457 = vst [vmem:[%s454 + $0x18] sm:$0xff] %v2380
      %2458 = vst [vmem:[%s454 + $0x20] sm:$0xff] %v2381
      %2459 = vst [vmem:[%s454 + $0x28] sm:$0xff] %v2382
      %2460 = vst [vmem:[%s454 + $0x30] sm:$0xff] %v2383
      %2461 = vst [vmem:[%s454 + $0x38] sm:$0xff] %v2384
      %2462 = vst [vmem:[%s454 + $0x40] sm:$0xff] %v2385
      %2463 = vst [vmem:[%s454 + $0x48] sm:$0xff] %v2386
      %2464 = vst [vmem:[%s454 + $0x50] sm:$0xff] %v2387
      %2465 = vst [vmem:[%s454 + $0x58] sm:$0xff] %v2388
      %2466 = vst [vmem:[%s454 + $0x60] sm:$0xff] %v2389
      %2467 = vst [vmem:[%s454 + $0x68] sm:$0xff] %v2390
      %2468 = vst [vmem:[%s454 + $0x70] sm:$0xff] %v2391
      %2469 = vst [vmem:[%s454 + $0x78] sm:$0xff] %v2392
      %s2470 = smul.u32 8, %s24
      %p2471 = scmp.lt.s32.totalorder %s23, 1
      %s2472 = scalar_select %p2471, %s23, 1
      %p2473 = scmp.lt.s32.totalorder %s2470, 15
      %s2474 = scalar_select %p2473, %s2470, 15
      %s2475 = smul.addr %s2474, 2
      %s2476 = smul.addr %s2472, 32
      %s2477 = sadd.s32 %s2475, %s2476
      %s2478 = smul.addr %s2477, 8
      %s2479 = scalar_lea.vmem %s6, %s2478
      %p2480 = scmp.lt.s32.totalorder %s23, 1
      %s2481 = scalar_select %p2480, %s23, 1
      %p2482 = scmp.lt.s32.totalorder %s24, 1
      %s2483 = scalar_select %p2482, %s24, 1
      %s2484 = smul.addr %s2481, 2
      %s2485 = sadd.s32 %s2483, %s2484
      %s2486 = smul.addr %s2485, 2
      %s2487 = scalar_lea.vmem %s7, %s2486
      // Predicated region
      $region61: #{doubleconv_forward.4} parent=43 // pred_check
        %p2488 = pneg %p210
      $region62: #{doubleconv_forward.4} parent=43 // pred_check_branch
        %2490 = sbr.rel (%p2488) target = $region64
      $region63: #{doubleconv_forward.4} parent=43 // pred_region
        %s2491 = smul.u32 8, %s24
      $region64: #{doubleconv_forward.4} parent=43 // pred_fallthru
        _
      // Predicated region
      $region65: #{doubleconv_forward.4} parent=43 // pred_check
        %p2492 = pneg %p238
      $region66: #{doubleconv_forward.4} parent=43 // pred_check_branch
        %2494 = sbr.rel (%p2492) target = $region68
      $region67: #{doubleconv_forward.4} parent=43 // pred_region
        _
      $region68: #{doubleconv_forward.4} parent=43 // pred_fallthru
        _
    $region44: #{doubleconv_forward.4} parent=5 // pred_fallthru
      _
    %p2495 = scmp.le.s32.totalorder 2, %s14
    // Predicated region
    $region69: #{doubleconv_forward.4} parent=5 // pred_check
      %p2496 = pneg %p2495
    $region70: #{doubleconv_forward.4} parent=5 // pred_check_branch
      %2498 = sbr.rel (%p2496) target = $region72
    $region71: #{doubleconv_forward.4} parent=5 // pred_region
      %s2499 = ssub.s32 %s14, 2
      // Predicated region
      $region73: #{doubleconv_forward.4} parent=71 // pred_check
        %p2500 = pneg %p216
      $region74: #{doubleconv_forward.4} parent=71 // pred_check_branch
        %2502 = sbr.rel (%p2500) target = $region76
      $region75: #{doubleconv_forward.4} parent=71 // pred_region
        %s2503 = smul.u32 8, %s26
        %p2504 = scmp.lt.s32.totalorder %s25, 1
        %s2505 = scalar_select %p2504, %s25, 1
        %p2506 = scmp.lt.s32.totalorder %s2503, 15
        %s2507 = scalar_select %p2506, %s2503, 15
        %s2508 = smul.addr %s2507, 2
        %s2509 = smul.addr %s2505, 32
        %s2510 = sadd.s32 %s2508, %s2509
        %s2511 = smul.addr %s2510, 8
        %s2512 = scalar_lea.vmem %s6, %s2511
      $region76: #{doubleconv_forward.4} parent=71 // pred_fallthru
        _
      // Predicated region
      $region77: #{doubleconv_forward.4} parent=71 // pred_check
        %p2513 = pneg %p244
      $region78: #{doubleconv_forward.4} parent=71 // pred_check_branch
        %2515 = sbr.rel (%p2513) target = $region80
      $region79: #{doubleconv_forward.4} parent=71 // pred_region
        %p2516 = scmp.lt.s32.totalorder %s25, 1
        %s2517 = scalar_select %p2516, %s25, 1
        %p2518 = scmp.lt.s32.totalorder %s26, 1
        %s2519 = scalar_select %p2518, %s26, 1
        %s2520 = smul.addr %s2517, 2
        %s2521 = sadd.s32 %s2519, %s2520
        %s2522 = smul.addr %s2521, 2
        %s2523 = scalar_lea.vmem %s7, %s2522
      $region80: #{doubleconv_forward.4} parent=71 // pred_fallthru
        _
    $region72: #{doubleconv_forward.4} parent=5 // pred_fallthru
      _
  $region6: #{doubleconv_forward.4} parent=0 // loop_footer
    %s18 = sadd.s32 1, %s14
  $region7: #{doubleconv_forward.4} parent=0 // loop_footer_branch
    %13 = sbr.rel target = $region3
  $region8: #{doubleconv_forward.4} parent=0 // loop_exit
    _

</llo_original>
